<compile_context>
chip_gen: v6e
topology: v6e:2x2x1
jax: 0.10.0
libtpu: 0.0.40
codegen_flags: <defaults>
</compile_context>

<pallas_src>
import jax
import jax.numpy as jnp
import numpy as np
from jax import lax
from jax.experimental import pallas as pl
from jax.experimental.pallas import tpu as pltpu

# ----------------------- small shapes consistent with the module -----------------------
N_X = 8            # batch of count vectors (cells)
G = 16             # input_size (genes) == number of tss sequences
E1, E2 = 64, 32    # encoder_sizes
SEQ_LEN = 64       # seq_len (reduced from 600 for the demo)
K1, C1 = 19, 32    # basset conv1: height 19, out_channels reduced 300 -> 32 for the demo
MP = 3             # maxpool height / stride
K2, C2 = 4, 50     # final conv: height = final_conv_size = 4, 50 channels (hardcoded)
L1 = SEQ_LEN - K1 + 1                 # 46 conv1 positions
NPOS = (L1 - MP) // MP + 1            # 15 pooled positions (floor pooling, all real)
LF = NPOS - K2 + 1                    # 12 conv2 positions
SEQ_OUT = C2 * LF                     # 600 (flatten size)
N_TSS = G
EPS = 1e-5

IM2COL_D = 128                        # conv1 im2col depth, zero-padded 4*K1=76 -> 128
NROWP = NPOS * N_TSS                  # 240 pooled rows (pos-major: row = f*N_TSS + n)
NROW2 = LF * N_TSS                    # 192 conv2 rows (pos-major)


# ----------------------------------- Pallas kernel --------------------------------------
def fused_kernel(p_ref, w1_ref, sh1_ref, w2_ref, sh2_ref, w3_ref, b3_ref,
                 x_ref, wa_ref, ba_ref, wb_ref, bb_ref, ld_ref, out_ref):
    """conv1(BN folded) -> maxpool(phase max) -> ReLU -> conv2(BN) -> ReLU
    -> flatten+Linear(BN) -> ReLU = w ; count_net ; mean = z @ w^T ; disp = exp(ld)."""
    # conv1: ONE (3*NROWP, 128) @ (128, C1) matmul over all sequences, pooled positions
    # and pool phases.  BN1 scale is folded into w1; the shift is added after the pool
    # max (a per-channel constant commutes with max, ReLU commutes with max).
    h = jnp.dot(p_ref[...], w1_ref[...], preferred_element_type=jnp.float32)   # (720, C1)
    pooled = jnp.maximum(
        jnp.maximum(jnp.maximum(h[0:NROWP, :], h[NROWP:2 * NROWP, :]),
                    h[2 * NROWP:3 * NROWP, :]) + sh1_ref[...], 0.0)            # (240, C1)

    # conv2 (BN2 scale folded): K2 accumulated depth-C1 dots; rows are position-major,
    # so a k-tap shift is a sublane-aligned k*N_TSS row offset (no junk rows touched).
    acc2 = jnp.dot(pooled[0:NROW2, :], w2_ref[0], preferred_element_type=jnp.float32)
    for k in range(1, K2):
        acc2 = acc2 + jnp.dot(pooled[k * N_TSS:k * N_TSS + NROW2, :], w2_ref[k],
                              preferred_element_type=jnp.float32)
    y2 = jnp.maximum(acc2 + sh2_ref[...], 0.0)                                 # (192, C2)

    # flatten + Linear without the tile-crossing (192,50)->(16,600) reshape:
    # accumulate LF (N_TSS, C2) @ (C2, E2) dots over sublane-aligned position slices.
    wp = jnp.dot(y2[0:N_TSS, :], w3_ref[0], preferred_element_type=jnp.float32)
    for f in range(1, LF):
        wp = wp + jnp.dot(y2[f * N_TSS:(f + 1) * N_TSS, :], w3_ref[f],
                          preferred_element_type=jnp.float32)
    w = jnp.maximum(wp + b3_ref[...], 0.0)                                     # (G, E2)

    # count_net (two Linear+BN+ReLU blocks, BN scales folded into weights)
    z = jnp.maximum(jnp.dot(x_ref[...], wa_ref[...], preferred_element_type=jnp.float32)
                    + ba_ref[...], 0.0)                                        # (N_X, E1)
    z = jnp.maximum(jnp.dot(z, wb_ref[...], preferred_element_type=jnp.float32)
                    + bb_ref[...], 0.0)                                        # (N_X, E2)

    # mean = z @ w^T (no explicit transpose); pack [mean ; disp] into one output slab.
    out_ref[0:N_X, :] = lax.dot_general(z, w, (((1,), (1,)), ((), ())),
                                        preferred_element_type=jnp.float32)    # (N_X, G)
    out_ref[N_X:N_X + 1, :] = jnp.exp(ld_ref[...])                             # (1, G)


# ------------------------------------- glue / wrapper -----------------------------------
def fold_bn(bn):
    s = bn['g'] / jnp.sqrt(bn['rv'] + EPS)
    t = bn['b'] - bn['rm'] * s
    return s, t


def forward(params, x, tss_nchw):
    # ---- plain-JAX glue: BN folding + weight/input layout prep (no compute hoisting) ----
    s1, t1 = fold_bn(params['bn1'])
    W1c = jnp.transpose(params['W1'][..., 0], (2, 1, 0)).reshape(K1 * 4, C1) * s1[None, :]
    W1p = jnp.pad(W1c, ((0, IM2COL_D - K1 * 4), (0, 0)))                  # (128, C1)
    sh1 = (params['b1'] * s1 + t1)[None, :]                               # (1, C1)

    s2, t2 = fold_bn(params['bn2'])
    W2c = jnp.transpose(params['W2'][..., 0], (2, 1, 0)) * s2[None, None, :]   # (K2,C1,C2)
    sh2 = (params['b2'] * s2 + t2)[None, :]                               # (1, C2)

    s3, t3 = fold_bn(params['bn3'])
    # Re-order PyTorch channel-major flatten index (c2*LF + f) into (f, c2, e) blocks.
    W3f = (params['W3'].T * s3[None, :]).reshape(C2, LF, E2).transpose(1, 0, 2)  # (LF,C2,E2)
    b3f = (params['b3'] * s3 + t3)[None, :]                               # (1, E2)

    sA, tA = fold_bn(params['bnA'])
    WaF = params['Wa'].T * sA[None, :]                                    # (G, E1)
    baF = (params['ba'] * sA + tA)[None, :]
    sB, tB = fold_bn(params['bnB'])
    WbF = params['Wb'].T * sB[None, :]                                    # (E1, E2)
    bbF = (params['bb'] * sB + tB)[None, :]

    # Input layout plumbing (pure relayout): NCHW -> (N, L, 4), then im2col patch rows
    # grouped by pool phase (conv position = 3*f + p), pooled-position-major rows,
    # contraction dim zero-padded 76 -> 128 for unmasked 128-lane DMAs / MXU dots.
    tss_lc = jnp.transpose(tss_nchw[..., 0], (0, 2, 1))                   # (N_TSS, L, 4)

    def build_phase(p):
        pos = p + MP * np.arange(NPOS)                                    # conv positions
        idx = pos[:, None] + np.arange(K1)[None, :]                       # (NPOS, K1)
        patch = tss_lc[:, idx, :]                                         # (N_TSS,NPOS,K1,4)
        patch = jnp.transpose(patch, (1, 0, 2, 3)).reshape(NROWP, K1 * 4)
        return jnp.pad(patch, ((0, 0), (0, IM2COL_D - K1 * 4)))           # (NROWP, 128)

    patches = jnp.concatenate([build_phase(p) for p in range(MP)], axis=0)   # (720, 128)
    ld2 = params['log_disp'].reshape(1, G)

    c2d = lambda i: (0, 0)
    c3d = lambda i: (0, 0, 0)
    out = pl.pallas_call(
        fused_kernel,
        grid=(1,),
        in_specs=[
            pl.BlockSpec((MP * NROWP, IM2COL_D), c2d),    # im2col patches (3 pool phases)
            pl.BlockSpec((IM2COL_D, C1), c2d),            # conv1 weight (BN1 scale folded)
            pl.BlockSpec((1, C1), c2d),                   # BN1 shift (conv bias folded)
            pl.BlockSpec((K2, C1, C2), c3d),              # conv2 weight (BN2 scale folded)
            pl.BlockSpec((1, C2), c2d),                   # BN2 shift
            pl.BlockSpec((LF, C2, E2), c3d),              # Linear weight per conv2 position
            pl.BlockSpec((1, E2), c2d),                   # Linear/BN3 shift
            pl.BlockSpec((N_X, G), c2d),                  # counts x
            pl.BlockSpec((G, E1), c2d),                   # count_net layer 1
            pl.BlockSpec((1, E1), c2d),
            pl.BlockSpec((E1, E2), c2d),                  # count_net layer 2
            pl.BlockSpec((1, E2), c2d),
            pl.BlockSpec((1, G), c2d),                    # log_dispersion
        ],
        out_specs=pl.BlockSpec((N_X + 1, G), c2d),        # rows 0..N_X-1: mean, row N_X: disp
        out_shape=jax.ShapeDtypeStruct((N_X + 1, G), jnp.float32),
        compiler_params=pltpu.CompilerParams(dimension_semantics=("arbitrary",)),
    )(patches, W1p, sh1, W2c, sh2, W3f, b3f, x, WaF, baF, WbF, bbF, ld2)

    mean = out[:N_X]
    disp = out[N_X]
    return disp, mean


# ------------------------------- deterministic parameters -------------------------------
def init_params(key):
    ks = jax.random.split(key, 16)

    def bn(k, c):
        kk = jax.random.split(k, 4)
        return dict(g=jax.random.uniform(kk[0], (c,), minval=0.5, maxval=1.5),
                    b=0.1 * jax.random.normal(kk[1], (c,)),
                    rm=0.1 * jax.random.normal(kk[2], (c,)),
                    rv=jax.random.uniform(kk[3], (c,), minval=0.5, maxval=1.5))

    p = {}
    p['W1'] = jax.random.normal(ks[0], (C1, 4, K1, 1)) / np.sqrt(4 * K1)   # OIHW
    p['b1'] = 0.1 * jax.random.normal(ks[1], (C1,))
    p['bn1'] = bn(ks[2], C1)
    p['W2'] = jax.random.normal(ks[3], (C2, C1, K2, 1)) / np.sqrt(C1 * K2)
    p['b2'] = 0.1 * jax.random.normal(ks[4], (C2,))
    p['bn2'] = bn(ks[5], C2)
    p['W3'] = jax.random.normal(ks[6], (E2, SEQ_OUT)) / np.sqrt(SEQ_OUT)   # (out, in)
    p['b3'] = 0.1 * jax.random.normal(ks[7], (E2,))
    p['bn3'] = bn(ks[8], E2)
    p['Wa'] = jax.random.normal(ks[9], (E1, G)) / np.sqrt(G)
    p['ba'] = 0.1 * jax.random.normal(ks[10], (E1,))
    p['bnA'] = bn(ks[11], E1)
    p['Wb'] = jax.random.normal(ks[12], (E2, E1)) / np.sqrt(E1)
    p['bb'] = 0.1 * jax.random.normal(ks[13], (E2,))
    p['bnB'] = bn(ks[14], E2)
    # matches the module: torch.clamp(randn(input_size), 1e-4, 1e4) on the LOG dispersion
    p['log_disp'] = jnp.clip(jax.random.normal(ks[15], (G,)), 1e-4, 1e4)
    return p


# --------------------------------- pure-JAX reference -----------------------------------
def reference_forward(params, x, tss_nchw):
    s1, t1 = fold_bn(params['bn1']); sh1 = params['b1'] * s1 + t1
    s2, t2 = fold_bn(params['bn2']); sh2 = params['b2'] * s2 + t2
    s3, t3 = fold_bn(params['bn3'])
    sA, tA = fold_bn(params['bnA'])
    sB, tB = fold_bn(params['bnB'])
    dn = ('NCHW', 'OIHW', 'NCHW')
    h = lax.conv_general_dilated(tss_nchw, params['W1'], (1, 1), 'VALID', dimension_numbers=dn)
    h = jnp.maximum(h * s1[None, :, None, None] + sh1[None, :, None, None], 0.0)
    h = lax.reduce_window(h, -jnp.inf, lax.max, (1, 1, MP, 1), (1, 1, MP, 1), 'VALID')
    h = lax.conv_general_dilated(h, params['W2'], (1, 1), 'VALID', dimension_numbers=dn)
    h = jnp.maximum(h * s2[None, :, None, None] + sh2[None, :, None, None], 0.0)
    flat = h.reshape(h.shape[0], -1)                        # nn.Flatten (channel-major)
    w = jnp.maximum(flat @ (params['W3'].T * s3[None, :])
                    + (params['b3'] * s3 + t3)[None, :], 0.0)
    z = jnp.maximum(x @ (params['Wa'].T * sA[None, :])
                    + (params['ba'] * sA + tA)[None, :], 0.0)
    z = jnp.maximum(z @ (params['Wb'].T * sB[None, :])
                    + (params['bb'] * sB + tB)[None, :], 0.0)
    mean = z @ w.T
    disp = jnp.exp(params['log_disp'])
    return disp, mean


# ----------------------------------------- main -----------------------------------------
if __name__ == "__main__":
    key = jax.random.PRNGKey(0)
    kp, kx, kt = jax.random.split(key, 3)
    params = init_params(kp)

    x = jax.random.normal(kx, (N_X, G), jnp.float32)
    # one-hot DNA sequences in NCHW (N_seq, 4, seq_len, 1), as the PyTorch module expects
    bases = jax.random.randint(kt, (N_TSS, SEQ_LEN), 0, 4)
    tss = jnp.transpose(jax.nn.one_hot(bases, 4, dtype=jnp.float32), (0, 2, 1))[..., None]

    disp, mean = jax.jit(forward)(params, x, tss)
    jax.block_until_ready((disp, mean))

    disp_ref, mean_ref = reference_forward(params, x, tss)
    np.testing.assert_allclose(np.asarray(disp), np.asarray(disp_ref), rtol=2e-2, atol=2e-2)
    np.testing.assert_allclose(np.asarray(mean), np.asarray(mean_ref), rtol=2e-2, atol=2e-2)

    print("KERNEL_OK")
</pallas_src>

<mosaic_0001>
module attributes {stable_mosaic.version = 11 : i64} {
  func.func @fused_kernel(%arg0: i32, %arg1: memref<720x128xf32, #tpu.memory_space<vmem>>, %arg2: memref<128x32xf32, #tpu.memory_space<vmem>>, %arg3: memref<1x32xf32, #tpu.memory_space<vmem>>, %arg4: memref<4x32x50xf32, #tpu.memory_space<vmem>>, %arg5: memref<1x50xf32, #tpu.memory_space<vmem>>, %arg6: memref<12x50x32xf32, #tpu.memory_space<vmem>>, %arg7: memref<1x32xf32, #tpu.memory_space<vmem>>, %arg8: memref<8x16xf32, #tpu.memory_space<vmem>>, %arg9: memref<16x64xf32, #tpu.memory_space<vmem>>, %arg10: memref<1x64xf32, #tpu.memory_space<vmem>>, %arg11: memref<64x32xf32, #tpu.memory_space<vmem>>, %arg12: memref<1x32xf32, #tpu.memory_space<vmem>>, %arg13: memref<1x16xf32, #tpu.memory_space<vmem>>, %arg14: memref<9x16xf32, #tpu.memory_space<vmem>>) attributes {dimension_semantics = [#tpu.dimension_semantics<arbitrary>], iteration_bounds = array<i64: 1>, scalar_prefetch = 0 : i64, scratch_operands = 0 : i64, tpu.core_type = #tpu.core_type<tc>, window_params = [{pipeline_mode = #tpu.pipeline_mode<synchronous>, transform_indices = @transform_0, window_bounds = array<i64: 720, 128>}, {pipeline_mode = #tpu.pipeline_mode<synchronous>, transform_indices = @transform_1, window_bounds = array<i64: 128, 32>}, {pipeline_mode = #tpu.pipeline_mode<synchronous>, transform_indices = @transform_2, window_bounds = array<i64: 1, 32>}, {pipeline_mode = #tpu.pipeline_mode<synchronous>, transform_indices = @transform_3, window_bounds = array<i64: 4, 32, 50>}, {pipeline_mode = #tpu.pipeline_mode<synchronous>, transform_indices = @transform_4, window_bounds = array<i64: 1, 50>}, {pipeline_mode = #tpu.pipeline_mode<synchronous>, transform_indices = @transform_5, window_bounds = array<i64: 12, 50, 32>}, {pipeline_mode = #tpu.pipeline_mode<synchronous>, transform_indices = @transform_6, window_bounds = array<i64: 1, 32>}, {pipeline_mode = #tpu.pipeline_mode<synchronous>, transform_indices = @transform_7, window_bounds = array<i64: 8, 16>}, {pipeline_mode = #tpu.pipeline_mode<synchronous>, transform_indices = @transform_8, window_bounds = array<i64: 16, 64>}, {pipeline_mode = #tpu.pipeline_mode<synchronous>, transform_indices = @transform_9, window_bounds = array<i64: 1, 64>}, {pipeline_mode = #tpu.pipeline_mode<synchronous>, transform_indices = @transform_10, window_bounds = array<i64: 64, 32>}, {pipeline_mode = #tpu.pipeline_mode<synchronous>, transform_indices = @transform_11, window_bounds = array<i64: 1, 32>}, {pipeline_mode = #tpu.pipeline_mode<synchronous>, transform_indices = @transform_12, window_bounds = array<i64: 1, 16>}, {pipeline_mode = #tpu.pipeline_mode<synchronous>, transform_indices = @transform_13, window_bounds = array<i64: 9, 16>}]} {
    %c0 = arith.constant 0 : index
    %c0_0 = arith.constant 0 : index
    %0 = vector.load %arg1[%c0, %c0_0] : memref<720x128xf32, #tpu.memory_space<vmem>>, vector<720x128xf32>
    %c0_1 = arith.constant 0 : index
    %c0_2 = arith.constant 0 : index
    %1 = vector.load %arg2[%c0_1, %c0_2] : memref<128x32xf32, #tpu.memory_space<vmem>>, vector<128x32xf32>
    %cst = arith.constant dense<0.000000e+00> : vector<720x32xf32>
    %2 = tpu.matmul %0, %1, %cst {dimension_numbers = #tpu.dot_dimension_numbers<[1], [0], [0], [1], [0, 0, 1, 1], [], []>} : vector<720x128xf32>, vector<128x32xf32>, vector<720x32xf32> -> vector<720x32xf32>
    %3 = vector.extract_strided_slice %2 {offsets = [0, 0], sizes = [240, 32], strides = [1, 1]} : vector<720x32xf32> to vector<240x32xf32>
    %4 = vector.extract_strided_slice %2 {offsets = [240, 0], sizes = [240, 32], strides = [1, 1]} : vector<720x32xf32> to vector<240x32xf32>
    %5 = arith.maximumf %3, %4 : vector<240x32xf32>
    %6 = vector.extract_strided_slice %2 {offsets = [480, 0], sizes = [240, 32], strides = [1, 1]} : vector<720x32xf32> to vector<240x32xf32>
    %7 = arith.maximumf %5, %6 : vector<240x32xf32>
    %c0_3 = arith.constant 0 : index
    %c0_4 = arith.constant 0 : index
    %8 = vector.load %arg3[%c0_3, %c0_4] : memref<1x32xf32, #tpu.memory_space<vmem>>, vector<1x32xf32>
    %9 = vector.broadcast %8 : vector<1x32xf32> to vector<240x32xf32>
    %10 = arith.addf %7, %9 : vector<240x32xf32>
    %cst_5 = arith.constant 0.000000e+00 : f32
    %11 = vector.broadcast %cst_5 : f32 to vector<240x32xf32>
    %12 = arith.maximumf %10, %11 : vector<240x32xf32>
    %13 = vector.extract_strided_slice %12 {offsets = [0, 0], sizes = [192, 32], strides = [1, 1]} : vector<240x32xf32> to vector<192x32xf32>
    %c0_6 = arith.constant 0 : index
    %c0_7 = arith.constant 0 : index
    %c0_8 = arith.constant 0 : index
    %14 = vector.load %arg4[%c0_6, %c0_7, %c0_8] : memref<4x32x50xf32, #tpu.memory_space<vmem>>, vector<1x32x50xf32>
    %15 = vector.shape_cast %14 : vector<1x32x50xf32> to vector<32x50xf32>
    %cst_9 = arith.constant dense<0.000000e+00> : vector<192x50xf32>
    %16 = tpu.matmul %13, %15, %cst_9 {dimension_numbers = #tpu.dot_dimension_numbers<[1], [0], [0], [1], [0, 0, 1, 1], [], []>} : vector<192x32xf32>, vector<32x50xf32>, vector<192x50xf32> -> vector<192x50xf32>
    %17 = vector.extract_strided_slice %12 {offsets = [16, 0], sizes = [192, 32], strides = [1, 1]} : vector<240x32xf32> to vector<192x32xf32>
    %c1 = arith.constant 1 : index
    %c0_10 = arith.constant 0 : index
    %c0_11 = arith.constant 0 : index
    %18 = vector.load %arg4[%c1, %c0_10, %c0_11] : memref<4x32x50xf32, #tpu.memory_space<vmem>>, vector<1x32x50xf32>
    %19 = vector.shape_cast %18 : vector<1x32x50xf32> to vector<32x50xf32>
    %cst_12 = arith.constant dense<0.000000e+00> : vector<192x50xf32>
    %20 = tpu.matmul %17, %19, %cst_12 {dimension_numbers = #tpu.dot_dimension_numbers<[1], [0], [0], [1], [0, 0, 1, 1], [], []>} : vector<192x32xf32>, vector<32x50xf32>, vector<192x50xf32> -> vector<192x50xf32>
    %21 = arith.addf %16, %20 : vector<192x50xf32>
    %22 = vector.extract_strided_slice %12 {offsets = [32, 0], sizes = [192, 32], strides = [1, 1]} : vector<240x32xf32> to vector<192x32xf32>
    %c2 = arith.constant 2 : index
    %c0_13 = arith.constant 0 : index
    %c0_14 = arith.constant 0 : index
    %23 = vector.load %arg4[%c2, %c0_13, %c0_14] : memref<4x32x50xf32, #tpu.memory_space<vmem>>, vector<1x32x50xf32>
    %24 = vector.shape_cast %23 : vector<1x32x50xf32> to vector<32x50xf32>
    %cst_15 = arith.constant dense<0.000000e+00> : vector<192x50xf32>
    %25 = tpu.matmul %22, %24, %cst_15 {dimension_numbers = #tpu.dot_dimension_numbers<[1], [0], [0], [1], [0, 0, 1, 1], [], []>} : vector<192x32xf32>, vector<32x50xf32>, vector<192x50xf32> -> vector<192x50xf32>
    %26 = arith.addf %21, %25 : vector<192x50xf32>
    %27 = vector.extract_strided_slice %12 {offsets = [48, 0], sizes = [192, 32], strides = [1, 1]} : vector<240x32xf32> to vector<192x32xf32>
    %c3 = arith.constant 3 : index
    %c0_16 = arith.constant 0 : index
    %c0_17 = arith.constant 0 : index
    %28 = vector.load %arg4[%c3, %c0_16, %c0_17] : memref<4x32x50xf32, #tpu.memory_space<vmem>>, vector<1x32x50xf32>
    %29 = vector.shape_cast %28 : vector<1x32x50xf32> to vector<32x50xf32>
    %cst_18 = arith.constant dense<0.000000e+00> : vector<192x50xf32>
    %30 = tpu.matmul %27, %29, %cst_18 {dimension_numbers = #tpu.dot_dimension_numbers<[1], [0], [0], [1], [0, 0, 1, 1], [], []>} : vector<192x32xf32>, vector<32x50xf32>, vector<192x50xf32> -> vector<192x50xf32>
    %31 = arith.addf %26, %30 : vector<192x50xf32>
    %c0_19 = arith.constant 0 : index
    %c0_20 = arith.constant 0 : index
    %32 = vector.load %arg5[%c0_19, %c0_20] : memref<1x50xf32, #tpu.memory_space<vmem>>, vector<1x50xf32>
    %33 = vector.broadcast %32 : vector<1x50xf32> to vector<192x50xf32>
    %34 = arith.addf %31, %33 : vector<192x50xf32>
    %cst_21 = arith.constant 0.000000e+00 : f32
    %35 = vector.broadcast %cst_21 : f32 to vector<192x50xf32>
    %36 = arith.maximumf %34, %35 : vector<192x50xf32>
    %37 = vector.extract_strided_slice %36 {offsets = [0, 0], sizes = [16, 50], strides = [1, 1]} : vector<192x50xf32> to vector<16x50xf32>
    %c0_22 = arith.constant 0 : index
    %c0_23 = arith.constant 0 : index
    %c0_24 = arith.constant 0 : index
    %38 = vector.load %arg6[%c0_22, %c0_23, %c0_24] : memref<12x50x32xf32, #tpu.memory_space<vmem>>, vector<1x50x32xf32>
    %39 = vector.shape_cast %38 : vector<1x50x32xf32> to vector<50x32xf32>
    %cst_25 = arith.constant dense<0.000000e+00> : vector<16x32xf32>
    %40 = tpu.matmul %37, %39, %cst_25 {dimension_numbers = #tpu.dot_dimension_numbers<[1], [0], [0], [1], [0, 0, 1, 1], [], []>} : vector<16x50xf32>, vector<50x32xf32>, vector<16x32xf32> -> vector<16x32xf32>
    %41 = vector.extract_strided_slice %36 {offsets = [16, 0], sizes = [16, 50], strides = [1, 1]} : vector<192x50xf32> to vector<16x50xf32>
    %c1_26 = arith.constant 1 : index
    %c0_27 = arith.constant 0 : index
    %c0_28 = arith.constant 0 : index
    %42 = vector.load %arg6[%c1_26, %c0_27, %c0_28] : memref<12x50x32xf32, #tpu.memory_space<vmem>>, vector<1x50x32xf32>
    %43 = vector.shape_cast %42 : vector<1x50x32xf32> to vector<50x32xf32>
    %cst_29 = arith.constant dense<0.000000e+00> : vector<16x32xf32>
    %44 = tpu.matmul %41, %43, %cst_29 {dimension_numbers = #tpu.dot_dimension_numbers<[1], [0], [0], [1], [0, 0, 1, 1], [], []>} : vector<16x50xf32>, vector<50x32xf32>, vector<16x32xf32> -> vector<16x32xf32>
    %45 = arith.addf %40, %44 : vector<16x32xf32>
    %46 = vector.extract_strided_slice %36 {offsets = [32, 0], sizes = [16, 50], strides = [1, 1]} : vector<192x50xf32> to vector<16x50xf32>
    %c2_30 = arith.constant 2 : index
    %c0_31 = arith.constant 0 : index
    %c0_32 = arith.constant 0 : index
    %47 = vector.load %arg6[%c2_30, %c0_31, %c0_32] : memref<12x50x32xf32, #tpu.memory_space<vmem>>, vector<1x50x32xf32>
    %48 = vector.shape_cast %47 : vector<1x50x32xf32> to vector<50x32xf32>
    %cst_33 = arith.constant dense<0.000000e+00> : vector<16x32xf32>
    %49 = tpu.matmul %46, %48, %cst_33 {dimension_numbers = #tpu.dot_dimension_numbers<[1], [0], [0], [1], [0, 0, 1, 1], [], []>} : vector<16x50xf32>, vector<50x32xf32>, vector<16x32xf32> -> vector<16x32xf32>
    %50 = arith.addf %45, %49 : vector<16x32xf32>
    %51 = vector.extract_strided_slice %36 {offsets = [48, 0], sizes = [16, 50], strides = [1, 1]} : vector<192x50xf32> to vector<16x50xf32>
    %c3_34 = arith.constant 3 : index
    %c0_35 = arith.constant 0 : index
    %c0_36 = arith.constant 0 : index
    %52 = vector.load %arg6[%c3_34, %c0_35, %c0_36] : memref<12x50x32xf32, #tpu.memory_space<vmem>>, vector<1x50x32xf32>
    %53 = vector.shape_cast %52 : vector<1x50x32xf32> to vector<50x32xf32>
    %cst_37 = arith.constant dense<0.000000e+00> : vector<16x32xf32>
    %54 = tpu.matmul %51, %53, %cst_37 {dimension_numbers = #tpu.dot_dimension_numbers<[1], [0], [0], [1], [0, 0, 1, 1], [], []>} : vector<16x50xf32>, vector<50x32xf32>, vector<16x32xf32> -> vector<16x32xf32>
    %55 = arith.addf %50, %54 : vector<16x32xf32>
    %56 = vector.extract_strided_slice %36 {offsets = [64, 0], sizes = [16, 50], strides = [1, 1]} : vector<192x50xf32> to vector<16x50xf32>
    %c4 = arith.constant 4 : index
    %c0_38 = arith.constant 0 : index
    %c0_39 = arith.constant 0 : index
    %57 = vector.load %arg6[%c4, %c0_38, %c0_39] : memref<12x50x32xf32, #tpu.memory_space<vmem>>, vector<1x50x32xf32>
    %58 = vector.shape_cast %57 : vector<1x50x32xf32> to vector<50x32xf32>
    %cst_40 = arith.constant dense<0.000000e+00> : vector<16x32xf32>
    %59 = tpu.matmul %56, %58, %cst_40 {dimension_numbers = #tpu.dot_dimension_numbers<[1], [0], [0], [1], [0, 0, 1, 1], [], []>} : vector<16x50xf32>, vector<50x32xf32>, vector<16x32xf32> -> vector<16x32xf32>
    %60 = arith.addf %55, %59 : vector<16x32xf32>
    %61 = vector.extract_strided_slice %36 {offsets = [80, 0], sizes = [16, 50], strides = [1, 1]} : vector<192x50xf32> to vector<16x50xf32>
    %c5 = arith.constant 5 : index
    %c0_41 = arith.constant 0 : index
    %c0_42 = arith.constant 0 : index
    %62 = vector.load %arg6[%c5, %c0_41, %c0_42] : memref<12x50x32xf32, #tpu.memory_space<vmem>>, vector<1x50x32xf32>
    %63 = vector.shape_cast %62 : vector<1x50x32xf32> to vector<50x32xf32>
    %cst_43 = arith.constant dense<0.000000e+00> : vector<16x32xf32>
    %64 = tpu.matmul %61, %63, %cst_43 {dimension_numbers = #tpu.dot_dimension_numbers<[1], [0], [0], [1], [0, 0, 1, 1], [], []>} : vector<16x50xf32>, vector<50x32xf32>, vector<16x32xf32> -> vector<16x32xf32>
    %65 = arith.addf %60, %64 : vector<16x32xf32>
    %66 = vector.extract_strided_slice %36 {offsets = [96, 0], sizes = [16, 50], strides = [1, 1]} : vector<192x50xf32> to vector<16x50xf32>
    %c6 = arith.constant 6 : index
    %c0_44 = arith.constant 0 : index
    %c0_45 = arith.constant 0 : index
    %67 = vector.load %arg6[%c6, %c0_44, %c0_45] : memref<12x50x32xf32, #tpu.memory_space<vmem>>, vector<1x50x32xf32>
    %68 = vector.shape_cast %67 : vector<1x50x32xf32> to vector<50x32xf32>
    %cst_46 = arith.constant dense<0.000000e+00> : vector<16x32xf32>
    %69 = tpu.matmul %66, %68, %cst_46 {dimension_numbers = #tpu.dot_dimension_numbers<[1], [0], [0], [1], [0, 0, 1, 1], [], []>} : vector<16x50xf32>, vector<50x32xf32>, vector<16x32xf32> -> vector<16x32xf32>
    %70 = arith.addf %65, %69 : vector<16x32xf32>
    %71 = vector.extract_strided_slice %36 {offsets = [112, 0], sizes = [16, 50], strides = [1, 1]} : vector<192x50xf32> to vector<16x50xf32>
    %c7 = arith.constant 7 : index
    %c0_47 = arith.constant 0 : index
    %c0_48 = arith.constant 0 : index
    %72 = vector.load %arg6[%c7, %c0_47, %c0_48] : memref<12x50x32xf32, #tpu.memory_space<vmem>>, vector<1x50x32xf32>
    %73 = vector.shape_cast %72 : vector<1x50x32xf32> to vector<50x32xf32>
    %cst_49 = arith.constant dense<0.000000e+00> : vector<16x32xf32>
    %74 = tpu.matmul %71, %73, %cst_49 {dimension_numbers = #tpu.dot_dimension_numbers<[1], [0], [0], [1], [0, 0, 1, 1], [], []>} : vector<16x50xf32>, vector<50x32xf32>, vector<16x32xf32> -> vector<16x32xf32>
    %75 = arith.addf %70, %74 : vector<16x32xf32>
    %76 = vector.extract_strided_slice %36 {offsets = [128, 0], sizes = [16, 50], strides = [1, 1]} : vector<192x50xf32> to vector<16x50xf32>
    %c8 = arith.constant 8 : index
    %c0_50 = arith.constant 0 : index
    %c0_51 = arith.constant 0 : index
    %77 = vector.load %arg6[%c8, %c0_50, %c0_51] : memref<12x50x32xf32, #tpu.memory_space<vmem>>, vector<1x50x32xf32>
    %78 = vector.shape_cast %77 : vector<1x50x32xf32> to vector<50x32xf32>
    %cst_52 = arith.constant dense<0.000000e+00> : vector<16x32xf32>
    %79 = tpu.matmul %76, %78, %cst_52 {dimension_numbers = #tpu.dot_dimension_numbers<[1], [0], [0], [1], [0, 0, 1, 1], [], []>} : vector<16x50xf32>, vector<50x32xf32>, vector<16x32xf32> -> vector<16x32xf32>
    %80 = arith.addf %75, %79 : vector<16x32xf32>
    %81 = vector.extract_strided_slice %36 {offsets = [144, 0], sizes = [16, 50], strides = [1, 1]} : vector<192x50xf32> to vector<16x50xf32>
    %c9 = arith.constant 9 : index
    %c0_53 = arith.constant 0 : index
    %c0_54 = arith.constant 0 : index
    %82 = vector.load %arg6[%c9, %c0_53, %c0_54] : memref<12x50x32xf32, #tpu.memory_space<vmem>>, vector<1x50x32xf32>
    %83 = vector.shape_cast %82 : vector<1x50x32xf32> to vector<50x32xf32>
    %cst_55 = arith.constant dense<0.000000e+00> : vector<16x32xf32>
    %84 = tpu.matmul %81, %83, %cst_55 {dimension_numbers = #tpu.dot_dimension_numbers<[1], [0], [0], [1], [0, 0, 1, 1], [], []>} : vector<16x50xf32>, vector<50x32xf32>, vector<16x32xf32> -> vector<16x32xf32>
    %85 = arith.addf %80, %84 : vector<16x32xf32>
    %86 = vector.extract_strided_slice %36 {offsets = [160, 0], sizes = [16, 50], strides = [1, 1]} : vector<192x50xf32> to vector<16x50xf32>
    %c10 = arith.constant 10 : index
    %c0_56 = arith.constant 0 : index
    %c0_57 = arith.constant 0 : index
    %87 = vector.load %arg6[%c10, %c0_56, %c0_57] : memref<12x50x32xf32, #tpu.memory_space<vmem>>, vector<1x50x32xf32>
    %88 = vector.shape_cast %87 : vector<1x50x32xf32> to vector<50x32xf32>
    %cst_58 = arith.constant dense<0.000000e+00> : vector<16x32xf32>
    %89 = tpu.matmul %86, %88, %cst_58 {dimension_numbers = #tpu.dot_dimension_numbers<[1], [0], [0], [1], [0, 0, 1, 1], [], []>} : vector<16x50xf32>, vector<50x32xf32>, vector<16x32xf32> -> vector<16x32xf32>
    %90 = arith.addf %85, %89 : vector<16x32xf32>
    %91 = vector.extract_strided_slice %36 {offsets = [176, 0], sizes = [16, 50], strides = [1, 1]} : vector<192x50xf32> to vector<16x50xf32>
    %c11 = arith.constant 11 : index
    %c0_59 = arith.constant 0 : index
    %c0_60 = arith.constant 0 : index
    %92 = vector.load %arg6[%c11, %c0_59, %c0_60] : memref<12x50x32xf32, #tpu.memory_space<vmem>>, vector<1x50x32xf32>
    %93 = vector.shape_cast %92 : vector<1x50x32xf32> to vector<50x32xf32>
    %cst_61 = arith.constant dense<0.000000e+00> : vector<16x32xf32>
    %94 = tpu.matmul %91, %93, %cst_61 {dimension_numbers = #tpu.dot_dimension_numbers<[1], [0], [0], [1], [0, 0, 1, 1], [], []>} : vector<16x50xf32>, vector<50x32xf32>, vector<16x32xf32> -> vector<16x32xf32>
    %95 = arith.addf %90, %94 : vector<16x32xf32>
    %c0_62 = arith.constant 0 : index
    %c0_63 = arith.constant 0 : index
    %96 = vector.load %arg7[%c0_62, %c0_63] : memref<1x32xf32, #tpu.memory_space<vmem>>, vector<1x32xf32>
    %97 = vector.broadcast %96 : vector<1x32xf32> to vector<16x32xf32>
    %98 = arith.addf %95, %97 : vector<16x32xf32>
    %cst_64 = arith.constant 0.000000e+00 : f32
    %99 = vector.broadcast %cst_64 : f32 to vector<16x32xf32>
    %100 = arith.maximumf %98, %99 : vector<16x32xf32>
    %c0_65 = arith.constant 0 : index
    %c0_66 = arith.constant 0 : index
    %101 = vector.load %arg8[%c0_65, %c0_66] : memref<8x16xf32, #tpu.memory_space<vmem>>, vector<8x16xf32>
    %c0_67 = arith.constant 0 : index
    %c0_68 = arith.constant 0 : index
    %102 = vector.load %arg9[%c0_67, %c0_68] : memref<16x64xf32, #tpu.memory_space<vmem>>, vector<16x64xf32>
    %cst_69 = arith.constant dense<0.000000e+00> : vector<8x64xf32>
    %103 = tpu.matmul %101, %102, %cst_69 {dimension_numbers = #tpu.dot_dimension_numbers<[1], [0], [0], [1], [0, 0, 1, 1], [], []>} : vector<8x16xf32>, vector<16x64xf32>, vector<8x64xf32> -> vector<8x64xf32>
    %c0_70 = arith.constant 0 : index
    %c0_71 = arith.constant 0 : index
    %104 = vector.load %arg10[%c0_70, %c0_71] : memref<1x64xf32, #tpu.memory_space<vmem>>, vector<1x64xf32>
    %105 = vector.broadcast %104 : vector<1x64xf32> to vector<8x64xf32>
    %106 = arith.addf %103, %105 : vector<8x64xf32>
    %cst_72 = arith.constant 0.000000e+00 : f32
    %107 = vector.broadcast %cst_72 : f32 to vector<8x64xf32>
    %108 = arith.maximumf %106, %107 : vector<8x64xf32>
    %c0_73 = arith.constant 0 : index
    %c0_74 = arith.constant 0 : index
    %109 = vector.load %arg11[%c0_73, %c0_74] : memref<64x32xf32, #tpu.memory_space<vmem>>, vector<64x32xf32>
    %cst_75 = arith.constant dense<0.000000e+00> : vector<8x32xf32>
    %110 = tpu.matmul %108, %109, %cst_75 {dimension_numbers = #tpu.dot_dimension_numbers<[1], [0], [0], [1], [0, 0, 1, 1], [], []>} : vector<8x64xf32>, vector<64x32xf32>, vector<8x32xf32> -> vector<8x32xf32>
    %c0_76 = arith.constant 0 : index
    %c0_77 = arith.constant 0 : index
    %111 = vector.load %arg12[%c0_76, %c0_77] : memref<1x32xf32, #tpu.memory_space<vmem>>, vector<1x32xf32>
    %112 = vector.broadcast %111 : vector<1x32xf32> to vector<8x32xf32>
    %113 = arith.addf %110, %112 : vector<8x32xf32>
    %cst_78 = arith.constant 0.000000e+00 : f32
    %114 = vector.broadcast %cst_78 : f32 to vector<8x32xf32>
    %115 = arith.maximumf %113, %114 : vector<8x32xf32>
    %cst_79 = arith.constant dense<0.000000e+00> : vector<8x16xf32>
    %116 = tpu.matmul %115, %100, %cst_79 {dimension_numbers = #tpu.dot_dimension_numbers<[1], [1], [0], [0], [0, 0, 1, 0], [], []>} : vector<8x32xf32>, vector<16x32xf32>, vector<8x16xf32> -> vector<8x16xf32>
    %c0_80 = arith.constant 0 : index
    %c0_81 = arith.constant 0 : index
    %117 = vector.load %arg14[%c0_80, %c0_81] : memref<9x16xf32, #tpu.memory_space<vmem>>, vector<8x16xf32>
    tpu.vector_store %arg14[%c0_80, %c0_81], %116 {strides = array<i32>} : memref<9x16xf32, #tpu.memory_space<vmem>>, vector<8x16xf32>,
    %c0_82 = arith.constant 0 : index
    %c0_83 = arith.constant 0 : index
    %118 = vector.load %arg13[%c0_82, %c0_83] : memref<1x16xf32, #tpu.memory_space<vmem>>, vector<1x16xf32>
    %119 = math.exp %118 : vector<1x16xf32>
    %c8_84 = arith.constant 8 : index
    %c0_85 = arith.constant 0 : index
    %120 = vector.load %arg14[%c8_84, %c0_85] : memref<9x16xf32, #tpu.memory_space<vmem>>, vector<1x16xf32>
    tpu.vector_store %arg14[%c8_84, %c0_85], %119 {strides = array<i32>} : memref<9x16xf32, #tpu.memory_space<vmem>>, vector<1x16xf32>,
    return
  }
  func.func @transform_0(%arg0: i32) -> (i32, i32) {
    %c0_i32 = arith.constant 0 : i32
    %c0_i32_0 = arith.constant 0 : i32
    %c0_i32_1 = arith.constant 0 : i32
    return %c0_i32, %c0_i32_0 : i32, i32
  }
  func.func @transform_1(%arg0: i32) -> (i32, i32) {
    %c0_i32 = arith.constant 0 : i32
    %c0_i32_0 = arith.constant 0 : i32
    %c0_i32_1 = arith.constant 0 : i32
    return %c0_i32, %c0_i32_0 : i32, i32
  }
  func.func @transform_2(%arg0: i32) -> (i32, i32) {
    %c0_i32 = arith.constant 0 : i32
    %c0_i32_0 = arith.constant 0 : i32
    %c0_i32_1 = arith.constant 0 : i32
    return %c0_i32, %c0_i32_0 : i32, i32
  }
  func.func @transform_3(%arg0: i32) -> (i32, i32, i32) {
    %c0_i32 = arith.constant 0 : i32
    %c0_i32_0 = arith.constant 0 : i32
    %c0_i32_1 = arith.constant 0 : i32
    %c0_i32_2 = arith.constant 0 : i32
    return %c0_i32, %c0_i32_0, %c0_i32_1 : i32, i32, i32
  }
  func.func @transform_4(%arg0: i32) -> (i32, i32) {
    %c0_i32 = arith.constant 0 : i32
    %c0_i32_0 = arith.constant 0 : i32
    %c0_i32_1 = arith.constant 0 : i32
    return %c0_i32, %c0_i32_0 : i32, i32
  }
  func.func @transform_5(%arg0: i32) -> (i32, i32, i32) {
    %c0_i32 = arith.constant 0 : i32
    %c0_i32_0 = arith.constant 0 : i32
    %c0_i32_1 = arith.constant 0 : i32
    %c0_i32_2 = arith.constant 0 : i32
    return %c0_i32, %c0_i32_0, %c0_i32_1 : i32, i32, i32
  }
  func.func @transform_6(%arg0: i32) -> (i32, i32) {
    %c0_i32 = arith.constant 0 : i32
    %c0_i32_0 = arith.constant 0 : i32
    %c0_i32_1 = arith.constant 0 : i32
    return %c0_i32, %c0_i32_0 : i32, i32
  }
  func.func @transform_7(%arg0: i32) -> (i32, i32) {
    %c0_i32 = arith.constant 0 : i32
    %c0_i32_0 = arith.constant 0 : i32
    %c0_i32_1 = arith.constant 0 : i32
    return %c0_i32, %c0_i32_0 : i32, i32
  }
  func.func @transform_8(%arg0: i32) -> (i32, i32) {
    %c0_i32 = arith.constant 0 : i32
    %c0_i32_0 = arith.constant 0 : i32
    %c0_i32_1 = arith.constant 0 : i32
    return %c0_i32, %c0_i32_0 : i32, i32
  }
  func.func @transform_9(%arg0: i32) -> (i32, i32) {
    %c0_i32 = arith.constant 0 : i32
    %c0_i32_0 = arith.constant 0 : i32
    %c0_i32_1 = arith.constant 0 : i32
    return %c0_i32, %c0_i32_0 : i32, i32
  }
  func.func @transform_10(%arg0: i32) -> (i32, i32) {
    %c0_i32 = arith.constant 0 : i32
    %c0_i32_0 = arith.constant 0 : i32
    %c0_i32_1 = arith.constant 0 : i32
    return %c0_i32, %c0_i32_0 : i32, i32
  }
  func.func @transform_11(%arg0: i32) -> (i32, i32) {
    %c0_i32 = arith.constant 0 : i32
    %c0_i32_0 = arith.constant 0 : i32
    %c0_i32_1 = arith.constant 0 : i32
    return %c0_i32, %c0_i32_0 : i32, i32
  }
  func.func @transform_12(%arg0: i32) -> (i32, i32) {
    %c0_i32 = arith.constant 0 : i32
    %c0_i32_0 = arith.constant 0 : i32
    %c0_i32_1 = arith.constant 0 : i32
    return %c0_i32, %c0_i32_0 : i32, i32
  }
  func.func @transform_13(%arg0: i32) -> (i32, i32) {
    %c0_i32 = arith.constant 0 : i32
    %c0_i32_0 = arith.constant 0 : i32
    %c0_i32_1 = arith.constant 0 : i32
    return %c0_i32, %c0_i32_0 : i32, i32
  }
}

</mosaic_0001>

<llo_original>
// kernel: forward.1
$region0: #{forward.1}
  #allocation0 [shape = 'u32[]', space=smem, size = 0x4, offset = 0x4, fixed_abs, tag = 'smem constant byte address 0x4 - core index']
  #allocation1 [shape = 'u32[144,128]{1,0:T(1,128)}', space=vmem, size = 0x12000, scoped, tag = 'internal scratch']
  %s0 = inlined_call_operand.vmem [shape: f32[720,128], index: 0, kind: input, shape index: {}]
  %s1 = inlined_call_operand.vmem [shape: f32[128,32], index: 1, kind: input, shape index: {}]
  %s2 = inlined_call_operand.vmem [shape: f32[1,32], index: 2, kind: input, shape index: {}]
  %s3 = inlined_call_operand.vmem [shape: f32[4,32,50], index: 3, kind: input, shape index: {}]
  %s4 = inlined_call_operand.vmem [shape: f32[1,50], index: 4, kind: input, shape index: {}]
  %s5 = inlined_call_operand.vmem [shape: f32[12,50,32], index: 5, kind: input, shape index: {}]
  %s6 = inlined_call_operand.vmem [shape: f32[1,32], index: 6, kind: input, shape index: {}]
  %s7 = inlined_call_operand.vmem [shape: f32[8,16], index: 7, kind: input, shape index: {}]
  %s8 = inlined_call_operand.vmem [shape: f32[16,64], index: 8, kind: input, shape index: {}]
  %s9 = inlined_call_operand.vmem [shape: f32[1,64], index: 9, kind: input, shape index: {}]
  %s10 = inlined_call_operand.vmem [shape: f32[64,32], index: 10, kind: input, shape index: {}]
  %s11 = inlined_call_operand.vmem [shape: f32[1,32], index: 11, kind: input, shape index: {}]
  %s12 = inlined_call_operand.vmem [shape: f32[1,16], index: 12, kind: input, shape index: {}]
  %s13 = inlined_call_operand.vmem [shape: f32[9,16], index: 13, kind: output, shape index: {}]
  %s14 = sld [smem:[#allocation0]]
  $region62: #{forward.1} parent=0
    _
  %s16 = ssub.s32 1, %s14
  %s17 = scalar_select 0, %s16, %s14
  // Predicated region
  $region2: #{forward.1} parent=0 // pred_check
    _
  $region3: #{forward.1} parent=0 // pred_check_branch
    %19 = sbr.rel (0) target = $region5
  $region4: #{forward.1} parent=0 // pred_region
    _
  $region5: #{forward.1} parent=0 // pred_fallthru
    _
  // Predicated region
  $region6: #{forward.1} parent=0 // pred_check
    _
  $region7: #{forward.1} parent=0 // pred_check_branch
    %21 = sbr.rel (0) target = $region9
  $region8: #{forward.1} parent=0 // pred_region
    _
  $region9: #{forward.1} parent=0 // pred_fallthru
    _
  // Predicated region
  $region10: #{forward.1} parent=0 // pred_check
    _
  $region11: #{forward.1} parent=0 // pred_check_branch
    %23 = sbr.rel (0) target = $region13
  $region12: #{forward.1} parent=0 // pred_region
    _
  $region13: #{forward.1} parent=0 // pred_fallthru
    _
  // Predicated region
  $region14: #{forward.1} parent=0 // pred_check
    _
  $region15: #{forward.1} parent=0 // pred_check_branch
    %25 = sbr.rel (0) target = $region17
  $region16: #{forward.1} parent=0 // pred_region
    _
  $region17: #{forward.1} parent=0 // pred_fallthru
    _
  // Predicated region
  $region18: #{forward.1} parent=0 // pred_check
    _
  $region19: #{forward.1} parent=0 // pred_check_branch
    %27 = sbr.rel (0) target = $region21
  $region20: #{forward.1} parent=0 // pred_region
    _
  $region21: #{forward.1} parent=0 // pred_fallthru
    _
  // Predicated region
  $region22: #{forward.1} parent=0 // pred_check
    _
  $region23: #{forward.1} parent=0 // pred_check_branch
    %29 = sbr.rel (0) target = $region25
  $region24: #{forward.1} parent=0 // pred_region
    _
  $region25: #{forward.1} parent=0 // pred_fallthru
    _
  // Predicated region
  $region26: #{forward.1} parent=0 // pred_check
    _
  $region27: #{forward.1} parent=0 // pred_check_branch
    %31 = sbr.rel (0) target = $region29
  $region28: #{forward.1} parent=0 // pred_region
    _
  $region29: #{forward.1} parent=0 // pred_fallthru
    _
  // Predicated region
  $region30: #{forward.1} parent=0 // pred_check
    _
  $region31: #{forward.1} parent=0 // pred_check_branch
    %33 = sbr.rel (0) target = $region33
  $region32: #{forward.1} parent=0 // pred_region
    _
  $region33: #{forward.1} parent=0 // pred_fallthru
    _
  // Predicated region
  $region34: #{forward.1} parent=0 // pred_check
    _
  $region35: #{forward.1} parent=0 // pred_check_branch
    %35 = sbr.rel (0) target = $region37
  $region36: #{forward.1} parent=0 // pred_region
    _
  $region37: #{forward.1} parent=0 // pred_fallthru
    _
  // Predicated region
  $region38: #{forward.1} parent=0 // pred_check
    _
  $region39: #{forward.1} parent=0 // pred_check_branch
    %37 = sbr.rel (0) target = $region41
  $region40: #{forward.1} parent=0 // pred_region
    _
  $region41: #{forward.1} parent=0 // pred_fallthru
    _
  // Predicated region
  $region42: #{forward.1} parent=0 // pred_check
    _
  $region43: #{forward.1} parent=0 // pred_check_branch
    %39 = sbr.rel (0) target = $region45
  $region44: #{forward.1} parent=0 // pred_region
    _
  $region45: #{forward.1} parent=0 // pred_fallthru
    _
  // Predicated region
  $region46: #{forward.1} parent=0 // pred_check
    _
  $region47: #{forward.1} parent=0 // pred_check_branch
    %41 = sbr.rel (0) target = $region49
  $region48: #{forward.1} parent=0 // pred_region
    _
  $region49: #{forward.1} parent=0 // pred_fallthru
    _
  // Predicated region
  $region50: #{forward.1} parent=0 // pred_check
    _
  $region51: #{forward.1} parent=0 // pred_check_branch
    %43 = sbr.rel (0) target = $region53
  $region52: #{forward.1} parent=0 // pred_region
    _
  $region53: #{forward.1} parent=0 // pred_fallthru
    _
  %v44 = vld [vmem:[%s0] sm:$0xff]
  %v45 = vld [vmem:[%s0 + $0x8] sm:$0xff]
  %v46 = vld [vmem:[%s0 + $0x10] sm:$0xff]
  %v47 = vld [vmem:[%s0 + $0x18] sm:$0xff]
  %v48 = vld [vmem:[%s0 + $0x20] sm:$0xff]
  %v49 = vld [vmem:[%s0 + $0x28] sm:$0xff]
  %v50 = vld [vmem:[%s0 + $0x30] sm:$0xff]
  %v51 = vld [vmem:[%s0 + $0x38] sm:$0xff]
  %v52 = vld [vmem:[%s0 + $0x40] sm:$0xff]
  %v53 = vld [vmem:[%s0 + $0x48] sm:$0xff]
  %v54 = vld [vmem:[%s0 + $0x50] sm:$0xff]
  %v55 = vld [vmem:[%s0 + $0x58] sm:$0xff]
  %v56 = vld [vmem:[%s0 + $0x60] sm:$0xff]
  %v57 = vld [vmem:[%s0 + $0x68] sm:$0xff]
  %v58 = vld [vmem:[%s0 + $0x70] sm:$0xff]
  %v59 = vld [vmem:[%s0 + $0x78] sm:$0xff]
  %v60 = vld [vmem:[%s0 + $0x80] sm:$0xff]
  %v61 = vld [vmem:[%s0 + $0x88] sm:$0xff]
  %v62 = vld [vmem:[%s0 + $0x90] sm:$0xff]
  %v63 = vld [vmem:[%s0 + $0x98] sm:$0xff]
  %v64 = vld [vmem:[%s0 + $0xa0] sm:$0xff]
  %v65 = vld [vmem:[%s0 + $0xa8] sm:$0xff]
  %v66 = vld [vmem:[%s0 + $0xb0] sm:$0xff]
  %v67 = vld [vmem:[%s0 + $0xb8] sm:$0xff]
  %v68 = vld [vmem:[%s0 + $0xc0] sm:$0xff]
  %v69 = vld [vmem:[%s0 + $0xc8] sm:$0xff]
  %v70 = vld [vmem:[%s0 + $0xd0] sm:$0xff]
  %v71 = vld [vmem:[%s0 + $0xd8] sm:$0xff]
  %v72 = vld [vmem:[%s0 + $0xe0] sm:$0xff]
  %v73 = vld [vmem:[%s0 + $0xe8] sm:$0xff]
  %v74 = vld [vmem:[%s0 + $0xf0] sm:$0xff]
  %v75 = vld [vmem:[%s0 + $0xf8] sm:$0xff]
  %v76 = vld [vmem:[%s0 + $0x100] sm:$0xff]
  %v77 = vld [vmem:[%s0 + $0x108] sm:$0xff]
  %v78 = vld [vmem:[%s0 + $0x110] sm:$0xff]
  %v79 = vld [vmem:[%s0 + $0x118] sm:$0xff]
  %v80 = vld [vmem:[%s0 + $0x120] sm:$0xff]
  %v81 = vld [vmem:[%s0 + $0x128] sm:$0xff]
  %v82 = vld [vmem:[%s0 + $0x130] sm:$0xff]
  %v83 = vld [vmem:[%s0 + $0x138] sm:$0xff]
  %v84 = vld [vmem:[%s0 + $0x140] sm:$0xff]
  %v85 = vld [vmem:[%s0 + $0x148] sm:$0xff]
  %v86 = vld [vmem:[%s0 + $0x150] sm:$0xff]
  %v87 = vld [vmem:[%s0 + $0x158] sm:$0xff]
  %v88 = vld [vmem:[%s0 + $0x160] sm:$0xff]
  %v89 = vld [vmem:[%s0 + $0x168] sm:$0xff]
  %v90 = vld [vmem:[%s0 + $0x170] sm:$0xff]
  %v91 = vld [vmem:[%s0 + $0x178] sm:$0xff]
  %v92 = vld [vmem:[%s0 + $0x180] sm:$0xff]
  %v93 = vld [vmem:[%s0 + $0x188] sm:$0xff]
  %v94 = vld [vmem:[%s0 + $0x190] sm:$0xff]
  %v95 = vld [vmem:[%s0 + $0x198] sm:$0xff]
  %v96 = vld [vmem:[%s0 + $0x1a0] sm:$0xff]
  %v97 = vld [vmem:[%s0 + $0x1a8] sm:$0xff]
  %v98 = vld [vmem:[%s0 + $0x1b0] sm:$0xff]
  %v99 = vld [vmem:[%s0 + $0x1b8] sm:$0xff]
  %v100 = vld [vmem:[%s0 + $0x1c0] sm:$0xff]
  %v101 = vld [vmem:[%s0 + $0x1c8] sm:$0xff]
  %v102 = vld [vmem:[%s0 + $0x1d0] sm:$0xff]
  %v103 = vld [vmem:[%s0 + $0x1d8] sm:$0xff]
  %v104 = vld [vmem:[%s0 + $0x1e0] sm:$0xff]
  %v105 = vld [vmem:[%s0 + $0x1e8] sm:$0xff]
  %v106 = vld [vmem:[%s0 + $0x1f0] sm:$0xff]
  %v107 = vld [vmem:[%s0 + $0x1f8] sm:$0xff]
  %v108 = vld [vmem:[%s0 + $0x200] sm:$0xff]
  %v109 = vld [vmem:[%s0 + $0x208] sm:$0xff]
  %v110 = vld [vmem:[%s0 + $0x210] sm:$0xff]
  %v111 = vld [vmem:[%s0 + $0x218] sm:$0xff]
  %v112 = vld [vmem:[%s0 + $0x220] sm:$0xff]
  %v113 = vld [vmem:[%s0 + $0x228] sm:$0xff]
  %v114 = vld [vmem:[%s0 + $0x230] sm:$0xff]
  %v115 = vld [vmem:[%s0 + $0x238] sm:$0xff]
  %v116 = vld [vmem:[%s0 + $0x240] sm:$0xff]
  %v117 = vld [vmem:[%s0 + $0x248] sm:$0xff]
  %v118 = vld [vmem:[%s0 + $0x250] sm:$0xff]
  %v119 = vld [vmem:[%s0 + $0x258] sm:$0xff]
  %v120 = vld [vmem:[%s0 + $0x260] sm:$0xff]
  %v121 = vld [vmem:[%s0 + $0x268] sm:$0xff]
  %v122 = vld [vmem:[%s0 + $0x270] sm:$0xff]
  %v123 = vld [vmem:[%s0 + $0x278] sm:$0xff]
  %v124 = vld [vmem:[%s0 + $0x280] sm:$0xff]
  %v125 = vld [vmem:[%s0 + $0x288] sm:$0xff]
  %v126 = vld [vmem:[%s0 + $0x290] sm:$0xff]
  %v127 = vld [vmem:[%s0 + $0x298] sm:$0xff]
  %v128 = vld [vmem:[%s0 + $0x2a0] sm:$0xff]
  %v129 = vld [vmem:[%s0 + $0x2a8] sm:$0xff]
  %v130 = vld [vmem:[%s0 + $0x2b0] sm:$0xff]
  %v131 = vld [vmem:[%s0 + $0x2b8] sm:$0xff]
  %v132 = vld [vmem:[%s0 + $0x2c0] sm:$0xff]
  %v133 = vld [vmem:[%s0 + $0x2c8] sm:$0xff]
  %v134 = vld [vmem:[%s1] sm:$0xff]
  %v135 = vld [vmem:[%s1 + $0x8] sm:$0xff]
  %v136 = vld [vmem:[%s1 + $0x10] sm:$0xff]
  %v137 = vld [vmem:[%s1 + $0x18] sm:$0xff]
  %v138 = vld [vmem:[%s1 + $0x20] sm:$0xff]
  %v139 = vld [vmem:[%s1 + $0x28] sm:$0xff]
  %v140 = vld [vmem:[%s1 + $0x30] sm:$0xff]
  %v141 = vld [vmem:[%s1 + $0x38] sm:$0xff]
  %v142 = vld [vmem:[%s1 + $0x40] sm:$0xff]
  %v143 = vld [vmem:[%s1 + $0x48] sm:$0xff]
  %v144 = vld [vmem:[%s1 + $0x50] sm:$0xff]
  %v145 = vld [vmem:[%s1 + $0x58] sm:$0xff]
  %v146 = vld [vmem:[%s1 + $0x60] sm:$0xff]
  %v147 = vld [vmem:[%s1 + $0x68] sm:$0xff]
  %v148 = vld [vmem:[%s1 + $0x70] sm:$0xff]
  %v149 = vld [vmem:[%s1 + $0x78] sm:$0xff]
  %150 = vmatprep.subr.mxu0 0.0
  %151 = vmatpush1.msra.mxu0 %v149
  %152 = vmatprep.subr.mxu0 0.0
  %153 = vmatpush1.msra.mxu0 %v148
  %154 = vmatprep.subr.mxu0 0.0
  %155 = vmatpush1.msra.mxu0 %v147
  %156 = vmatprep.subr.mxu0 0.0
  %157 = vmatpush1.msra.mxu0 %v146
  %158 = vmatprep.subr.mxu0 0.0
  %159 = vmatpush1.msra.mxu0 %v145
  %160 = vmatprep.subr.mxu0 0.0
  %161 = vmatpush1.msra.mxu0 %v144
  %162 = vmatprep.subr.mxu0 0.0
  %163 = vmatpush1.msra.mxu0 %v143
  %164 = vmatprep.subr.mxu0 0.0
  %165 = vmatpush1.msra.mxu0 %v142
  %166 = vmatprep.subr.mxu0 0.0
  %167 = vmatpush1.msra.mxu0 %v141
  %168 = vmatprep.subr.mxu0 0.0
  %169 = vmatpush1.msra.mxu0 %v140
  %170 = vmatprep.subr.mxu0 0.0
  %171 = vmatpush1.msra.mxu0 %v139
  %172 = vmatprep.subr.mxu0 0.0
  %173 = vmatpush1.msra.mxu0 %v138
  %174 = vmatprep.subr.mxu0 0.0
  %175 = vmatpush1.msra.mxu0 %v137
  %176 = vmatprep.subr.mxu0 0.0
  %177 = vmatpush1.msra.mxu0 %v136
  %178 = vmatprep.subr.mxu0 0.0
  %179 = vmatpush1.msra.mxu0 %v135
  %180 = vmatprep.subr.mxu0 0.0
  %181 = vmatpush1.msra.mxu0 %v134
  %182 = vmatprep.subr.mxu0 0.0
  %183 = vmatpush2.msra.mxu0 0.0
  %184 = vmatprep.subr.mxu0 0.0
  %185 = vmatpush2.msra.mxu0 0.0
  %186 = vmatprep.subr.mxu0 0.0
  %187 = vmatpush2.msra.mxu0 0.0
  %188 = vmatprep.subr.mxu0 0.0
  %189 = vmatpush2.msra.mxu0 0.0
  %190 = vmatprep.subr.mxu0 0.0
  %191 = vmatpush2.msra.mxu0 0.0
  %192 = vmatprep.subr.mxu0 0.0
  %193 = vmatpush2.msra.mxu0 0.0
  %194 = vmatprep.subr.mxu0 0.0
  %195 = vmatpush2.msra.mxu0 0.0
  %196 = vmatprep.subr.mxu0 0.0
  %197 = vmatpush2.msra.mxu0 0.0
  %198 = vmatprep.subr.mxu0 0.0
  %199 = vmatpush2.msra.mxu0 0.0
  %200 = vmatprep.subr.mxu0 0.0
  %201 = vmatpush2.msra.mxu0 0.0
  %202 = vmatprep.subr.mxu0 0.0
  %203 = vmatpush2.msra.mxu0 0.0
  %204 = vmatprep.subr.mxu0 0.0
  %205 = vmatpush2.msra.mxu0 0.0
  %206 = vmatprep.subr.mxu0 0.0
  %207 = vmatpush2.msra.mxu0 0.0
  %208 = vmatprep.subr.mxu0 0.0
  %209 = vmatpush2.msra.mxu0 0.0
  %210 = vmatprep.subr.mxu0 0.0
  %211 = vmatpush2.msra.mxu0 0.0
  %212 = vmatprep.subr.mxu0 0.0
  %213 = vmatpush2.msra.mxu0 0.0
  %214 = vmatprep.mubr.f32.mxu0 0.0
  %215 = vmatmul.mubr.f32.gmra.mxu0 %v44
  %v216 = vpop.f32.mrf.mxu0
  %v217 = vadd.f32 0.0, %v216
  %v218 = vpop.f32.mrf.mxu0
  %219 = vmatprep.mubr.f32.mxu0 0.0
  %220 = vmatmul.mubr.f32.gmra.mxu0 %v45
  %v221 = vpop.f32.mrf.mxu0
  %v222 = vadd.f32 0.0, %v221
  %v223 = vpop.f32.mrf.mxu0
  %224 = vmatprep.mubr.f32.mxu0 0.0
  %225 = vmatmul.mubr.f32.gmra.mxu0 %v46
  %v226 = vpop.f32.mrf.mxu0
  %v227 = vadd.f32 0.0, %v226
  %v228 = vpop.f32.mrf.mxu0
  %229 = vmatprep.mubr.f32.mxu0 0.0
  %230 = vmatmul.mubr.f32.gmra.mxu0 %v47
  %v231 = vpop.f32.mrf.mxu0
  %v232 = vadd.f32 0.0, %v231
  %v233 = vpop.f32.mrf.mxu0
  %234 = vmatprep.mubr.f32.mxu0 0.0
  %235 = vmatmul.mubr.f32.gmra.mxu0 %v48
  %v236 = vpop.f32.mrf.mxu0
  %v237 = vadd.f32 0.0, %v236
  %v238 = vpop.f32.mrf.mxu0
  %239 = vmatprep.mubr.f32.mxu0 0.0
  %240 = vmatmul.mubr.f32.gmra.mxu0 %v49
  %v241 = vpop.f32.mrf.mxu0
  %v242 = vadd.f32 0.0, %v241
  %v243 = vpop.f32.mrf.mxu0
  %244 = vmatprep.mubr.f32.mxu0 0.0
  %245 = vmatmul.mubr.f32.gmra.mxu0 %v50
  %v246 = vpop.f32.mrf.mxu0
  %v247 = vadd.f32 0.0, %v246
  %v248 = vpop.f32.mrf.mxu0
  %249 = vmatprep.mubr.f32.mxu0 0.0
  %250 = vmatmul.mubr.f32.gmra.mxu0 %v51
  %v251 = vpop.f32.mrf.mxu0
  %v252 = vadd.f32 0.0, %v251
  %v253 = vpop.f32.mrf.mxu0
  %254 = vmatprep.mubr.f32.mxu0 0.0
  %255 = vmatmul.mubr.f32.gmra.mxu0 %v52
  %v256 = vpop.f32.mrf.mxu0
  %v257 = vadd.f32 0.0, %v256
  %v258 = vpop.f32.mrf.mxu0
  %259 = vmatprep.mubr.f32.mxu0 0.0
  %260 = vmatmul.mubr.f32.gmra.mxu0 %v53
  %v261 = vpop.f32.mrf.mxu0
  %v262 = vadd.f32 0.0, %v261
  %v263 = vpop.f32.mrf.mxu0
  %264 = vmatprep.mubr.f32.mxu0 0.0
  %265 = vmatmul.mubr.f32.gmra.mxu0 %v54
  %v266 = vpop.f32.mrf.mxu0
  %v267 = vadd.f32 0.0, %v266
  %v268 = vpop.f32.mrf.mxu0
  %269 = vmatprep.mubr.f32.mxu0 0.0
  %270 = vmatmul.mubr.f32.gmra.mxu0 %v55
  %v271 = vpop.f32.mrf.mxu0
  %v272 = vadd.f32 0.0, %v271
  %v273 = vpop.f32.mrf.mxu0
  %274 = vmatprep.mubr.f32.mxu0 0.0
  %275 = vmatmul.mubr.f32.gmra.mxu0 %v56
  %v276 = vpop.f32.mrf.mxu0
  %v277 = vadd.f32 0.0, %v276
  %v278 = vpop.f32.mrf.mxu0
  %279 = vmatprep.mubr.f32.mxu0 0.0
  %280 = vmatmul.mubr.f32.gmra.mxu0 %v57
  %v281 = vpop.f32.mrf.mxu0
  %v282 = vadd.f32 0.0, %v281
  %v283 = vpop.f32.mrf.mxu0
  %284 = vmatprep.mubr.f32.mxu0 0.0
  %285 = vmatmul.mubr.f32.gmra.mxu0 %v58
  %v286 = vpop.f32.mrf.mxu0
  %v287 = vadd.f32 0.0, %v286
  %v288 = vpop.f32.mrf.mxu0
  %289 = vmatprep.mubr.f32.mxu0 0.0
  %290 = vmatmul.mubr.f32.gmra.mxu0 %v59
  %v291 = vpop.f32.mrf.mxu0
  %v292 = vadd.f32 0.0, %v291
  %v293 = vpop.f32.mrf.mxu0
  %294 = vmatprep.mubr.f32.mxu0 0.0
  %295 = vmatmul.mubr.f32.gmra.mxu0 %v60
  %v296 = vpop.f32.mrf.mxu0
  %v297 = vadd.f32 0.0, %v296
  %v298 = vpop.f32.mrf.mxu0
  %299 = vmatprep.mubr.f32.mxu0 0.0
  %300 = vmatmul.mubr.f32.gmra.mxu0 %v61
  %v301 = vpop.f32.mrf.mxu0
  %v302 = vadd.f32 0.0, %v301
  %v303 = vpop.f32.mrf.mxu0
  %304 = vmatprep.mubr.f32.mxu0 0.0
  %305 = vmatmul.mubr.f32.gmra.mxu0 %v62
  %v306 = vpop.f32.mrf.mxu0
  %v307 = vadd.f32 0.0, %v306
  %v308 = vpop.f32.mrf.mxu0
  %309 = vmatprep.mubr.f32.mxu0 0.0
  %310 = vmatmul.mubr.f32.gmra.mxu0 %v63
  %v311 = vpop.f32.mrf.mxu0
  %v312 = vadd.f32 0.0, %v311
  %v313 = vpop.f32.mrf.mxu0
  %314 = vmatprep.mubr.f32.mxu0 0.0
  %315 = vmatmul.mubr.f32.gmra.mxu0 %v64
  %v316 = vpop.f32.mrf.mxu0
  %v317 = vadd.f32 0.0, %v316
  %v318 = vpop.f32.mrf.mxu0
  %319 = vmatprep.mubr.f32.mxu0 0.0
  %320 = vmatmul.mubr.f32.gmra.mxu0 %v65
  %v321 = vpop.f32.mrf.mxu0
  %v322 = vadd.f32 0.0, %v321
  %v323 = vpop.f32.mrf.mxu0
  %324 = vmatprep.mubr.f32.mxu0 0.0
  %325 = vmatmul.mubr.f32.gmra.mxu0 %v66
  %v326 = vpop.f32.mrf.mxu0
  %v327 = vadd.f32 0.0, %v326
  %v328 = vpop.f32.mrf.mxu0
  %329 = vmatprep.mubr.f32.mxu0 0.0
  %330 = vmatmul.mubr.f32.gmra.mxu0 %v67
  %v331 = vpop.f32.mrf.mxu0
  %v332 = vadd.f32 0.0, %v331
  %v333 = vpop.f32.mrf.mxu0
  %334 = vmatprep.mubr.f32.mxu0 0.0
  %335 = vmatmul.mubr.f32.gmra.mxu0 %v68
  %v336 = vpop.f32.mrf.mxu0
  %v337 = vadd.f32 0.0, %v336
  %v338 = vpop.f32.mrf.mxu0
  %339 = vmatprep.mubr.f32.mxu0 0.0
  %340 = vmatmul.mubr.f32.gmra.mxu0 %v69
  %v341 = vpop.f32.mrf.mxu0
  %v342 = vadd.f32 0.0, %v341
  %v343 = vpop.f32.mrf.mxu0
  %344 = vmatprep.mubr.f32.mxu0 0.0
  %345 = vmatmul.mubr.f32.gmra.mxu0 %v70
  %v346 = vpop.f32.mrf.mxu0
  %v347 = vadd.f32 0.0, %v346
  %v348 = vpop.f32.mrf.mxu0
  %349 = vmatprep.mubr.f32.mxu0 0.0
  %350 = vmatmul.mubr.f32.gmra.mxu0 %v71
  %v351 = vpop.f32.mrf.mxu0
  %v352 = vadd.f32 0.0, %v351
  %v353 = vpop.f32.mrf.mxu0
  %354 = vmatprep.mubr.f32.mxu0 0.0
  %355 = vmatmul.mubr.f32.gmra.mxu0 %v72
  %v356 = vpop.f32.mrf.mxu0
  %v357 = vadd.f32 0.0, %v356
  %v358 = vpop.f32.mrf.mxu0
  %359 = vmatprep.mubr.f32.mxu0 0.0
  %360 = vmatmul.mubr.f32.gmra.mxu0 %v73
  %v361 = vpop.f32.mrf.mxu0
  %v362 = vadd.f32 0.0, %v361
  %v363 = vpop.f32.mrf.mxu0
  %364 = vmatprep.mubr.f32.mxu0 0.0
  %365 = vmatmul.mubr.f32.gmra.mxu0 %v74
  %v366 = vpop.f32.mrf.mxu0
  %v367 = vadd.f32 0.0, %v366
  %v368 = vpop.f32.mrf.mxu0
  %369 = vmatprep.mubr.f32.mxu0 0.0
  %370 = vmatmul.mubr.f32.gmra.mxu0 %v75
  %v371 = vpop.f32.mrf.mxu0
  %v372 = vadd.f32 0.0, %v371
  %v373 = vpop.f32.mrf.mxu0
  %374 = vmatprep.mubr.f32.mxu0 0.0
  %375 = vmatmul.mubr.f32.gmra.mxu0 %v76
  %v376 = vpop.f32.mrf.mxu0
  %v377 = vadd.f32 0.0, %v376
  %v378 = vpop.f32.mrf.mxu0
  %379 = vmatprep.mubr.f32.mxu0 0.0
  %380 = vmatmul.mubr.f32.gmra.mxu0 %v77
  %v381 = vpop.f32.mrf.mxu0
  %v382 = vadd.f32 0.0, %v381
  %v383 = vpop.f32.mrf.mxu0
  %384 = vmatprep.mubr.f32.mxu0 0.0
  %385 = vmatmul.mubr.f32.gmra.mxu0 %v78
  %v386 = vpop.f32.mrf.mxu0
  %v387 = vadd.f32 0.0, %v386
  %v388 = vpop.f32.mrf.mxu0
  %389 = vmatprep.mubr.f32.mxu0 0.0
  %390 = vmatmul.mubr.f32.gmra.mxu0 %v79
  %v391 = vpop.f32.mrf.mxu0
  %v392 = vadd.f32 0.0, %v391
  %v393 = vpop.f32.mrf.mxu0
  %394 = vmatprep.mubr.f32.mxu0 0.0
  %395 = vmatmul.mubr.f32.gmra.mxu0 %v80
  %v396 = vpop.f32.mrf.mxu0
  %v397 = vadd.f32 0.0, %v396
  %v398 = vpop.f32.mrf.mxu0
  %399 = vmatprep.mubr.f32.mxu0 0.0
  %400 = vmatmul.mubr.f32.gmra.mxu0 %v81
  %v401 = vpop.f32.mrf.mxu0
  %v402 = vadd.f32 0.0, %v401
  %v403 = vpop.f32.mrf.mxu0
  %404 = vmatprep.mubr.f32.mxu0 0.0
  %405 = vmatmul.mubr.f32.gmra.mxu0 %v82
  %v406 = vpop.f32.mrf.mxu0
  %v407 = vadd.f32 0.0, %v406
  %v408 = vpop.f32.mrf.mxu0
  %409 = vmatprep.mubr.f32.mxu0 0.0
  %410 = vmatmul.mubr.f32.gmra.mxu0 %v83
  %v411 = vpop.f32.mrf.mxu0
  %v412 = vadd.f32 0.0, %v411
  %v413 = vpop.f32.mrf.mxu0
  %414 = vmatprep.mubr.f32.mxu0 0.0
  %415 = vmatmul.mubr.f32.gmra.mxu0 %v84
  %v416 = vpop.f32.mrf.mxu0
  %v417 = vadd.f32 0.0, %v416
  %v418 = vpop.f32.mrf.mxu0
  %419 = vmatprep.mubr.f32.mxu0 0.0
  %420 = vmatmul.mubr.f32.gmra.mxu0 %v85
  %v421 = vpop.f32.mrf.mxu0
  %v422 = vadd.f32 0.0, %v421
  %v423 = vpop.f32.mrf.mxu0
  %424 = vmatprep.mubr.f32.mxu0 0.0
  %425 = vmatmul.mubr.f32.gmra.mxu0 %v86
  %v426 = vpop.f32.mrf.mxu0
  %v427 = vadd.f32 0.0, %v426
  %v428 = vpop.f32.mrf.mxu0
  %429 = vmatprep.mubr.f32.mxu0 0.0
  %430 = vmatmul.mubr.f32.gmra.mxu0 %v87
  %v431 = vpop.f32.mrf.mxu0
  %v432 = vadd.f32 0.0, %v431
  %v433 = vpop.f32.mrf.mxu0
  %434 = vmatprep.mubr.f32.mxu0 0.0
  %435 = vmatmul.mubr.f32.gmra.mxu0 %v88
  %v436 = vpop.f32.mrf.mxu0
  %v437 = vadd.f32 0.0, %v436
  %v438 = vpop.f32.mrf.mxu0
  %439 = vmatprep.mubr.f32.mxu0 0.0
  %440 = vmatmul.mubr.f32.gmra.mxu0 %v89
  %v441 = vpop.f32.mrf.mxu0
  %v442 = vadd.f32 0.0, %v441
  %v443 = vpop.f32.mrf.mxu0
  %444 = vmatprep.mubr.f32.mxu0 0.0
  %445 = vmatmul.mubr.f32.gmra.mxu0 %v90
  %v446 = vpop.f32.mrf.mxu0
  %v447 = vadd.f32 0.0, %v446
  %v448 = vpop.f32.mrf.mxu0
  %449 = vmatprep.mubr.f32.mxu0 0.0
  %450 = vmatmul.mubr.f32.gmra.mxu0 %v91
  %v451 = vpop.f32.mrf.mxu0
  %v452 = vadd.f32 0.0, %v451
  %v453 = vpop.f32.mrf.mxu0
  %454 = vmatprep.mubr.f32.mxu0 0.0
  %455 = vmatmul.mubr.f32.gmra.mxu0 %v92
  %v456 = vpop.f32.mrf.mxu0
  %v457 = vadd.f32 0.0, %v456
  %v458 = vpop.f32.mrf.mxu0
  %459 = vmatprep.mubr.f32.mxu0 0.0
  %460 = vmatmul.mubr.f32.gmra.mxu0 %v93
  %v461 = vpop.f32.mrf.mxu0
  %v462 = vadd.f32 0.0, %v461
  %v463 = vpop.f32.mrf.mxu0
  %464 = vmatprep.mubr.f32.mxu0 0.0
  %465 = vmatmul.mubr.f32.gmra.mxu0 %v94
  %v466 = vpop.f32.mrf.mxu0
  %v467 = vadd.f32 0.0, %v466
  %v468 = vpop.f32.mrf.mxu0
  %469 = vmatprep.mubr.f32.mxu0 0.0
  %470 = vmatmul.mubr.f32.gmra.mxu0 %v95
  %v471 = vpop.f32.mrf.mxu0
  %v472 = vadd.f32 0.0, %v471
  %v473 = vpop.f32.mrf.mxu0
  %474 = vmatprep.mubr.f32.mxu0 0.0
  %475 = vmatmul.mubr.f32.gmra.mxu0 %v96
  %v476 = vpop.f32.mrf.mxu0
  %v477 = vadd.f32 0.0, %v476
  %v478 = vpop.f32.mrf.mxu0
  %479 = vmatprep.mubr.f32.mxu0 0.0
  %480 = vmatmul.mubr.f32.gmra.mxu0 %v97
  %v481 = vpop.f32.mrf.mxu0
  %v482 = vadd.f32 0.0, %v481
  %v483 = vpop.f32.mrf.mxu0
  %484 = vmatprep.mubr.f32.mxu0 0.0
  %485 = vmatmul.mubr.f32.gmra.mxu0 %v98
  %v486 = vpop.f32.mrf.mxu0
  %v487 = vadd.f32 0.0, %v486
  %v488 = vpop.f32.mrf.mxu0
  %489 = vmatprep.mubr.f32.mxu0 0.0
  %490 = vmatmul.mubr.f32.gmra.mxu0 %v99
  %v491 = vpop.f32.mrf.mxu0
  %v492 = vadd.f32 0.0, %v491
  %v493 = vpop.f32.mrf.mxu0
  %494 = vmatprep.mubr.f32.mxu0 0.0
  %495 = vmatmul.mubr.f32.gmra.mxu0 %v100
  %v496 = vpop.f32.mrf.mxu0
  %v497 = vadd.f32 0.0, %v496
  %v498 = vpop.f32.mrf.mxu0
  %499 = vmatprep.mubr.f32.mxu0 0.0
  %500 = vmatmul.mubr.f32.gmra.mxu0 %v101
  %v501 = vpop.f32.mrf.mxu0
  %v502 = vadd.f32 0.0, %v501
  %v503 = vpop.f32.mrf.mxu0
  %504 = vmatprep.mubr.f32.mxu0 0.0
  %505 = vmatmul.mubr.f32.gmra.mxu0 %v102
  %v506 = vpop.f32.mrf.mxu0
  %v507 = vadd.f32 0.0, %v506
  %v508 = vpop.f32.mrf.mxu0
  %509 = vmatprep.mubr.f32.mxu0 0.0
  %510 = vmatmul.mubr.f32.gmra.mxu0 %v103
  %v511 = vpop.f32.mrf.mxu0
  %v512 = vadd.f32 0.0, %v511
  %v513 = vpop.f32.mrf.mxu0
  %514 = vmatprep.mubr.f32.mxu0 0.0
  %515 = vmatmul.mubr.f32.gmra.mxu0 %v104
  %v516 = vpop.f32.mrf.mxu0
  %v517 = vadd.f32 0.0, %v516
  %v518 = vpop.f32.mrf.mxu0
  %519 = vmatprep.mubr.f32.mxu0 0.0
  %520 = vmatmul.mubr.f32.gmra.mxu0 %v105
  %v521 = vpop.f32.mrf.mxu0
  %v522 = vadd.f32 0.0, %v521
  %v523 = vpop.f32.mrf.mxu0
  %524 = vmatprep.mubr.f32.mxu0 0.0
  %525 = vmatmul.mubr.f32.gmra.mxu0 %v106
  %v526 = vpop.f32.mrf.mxu0
  %v527 = vadd.f32 0.0, %v526
  %v528 = vpop.f32.mrf.mxu0
  %529 = vmatprep.mubr.f32.mxu0 0.0
  %530 = vmatmul.mubr.f32.gmra.mxu0 %v107
  %v531 = vpop.f32.mrf.mxu0
  %v532 = vadd.f32 0.0, %v531
  %v533 = vpop.f32.mrf.mxu0
  %534 = vmatprep.mubr.f32.mxu0 0.0
  %535 = vmatmul.mubr.f32.gmra.mxu0 %v108
  %v536 = vpop.f32.mrf.mxu0
  %v537 = vadd.f32 0.0, %v536
  %v538 = vpop.f32.mrf.mxu0
  %539 = vmatprep.mubr.f32.mxu0 0.0
  %540 = vmatmul.mubr.f32.gmra.mxu0 %v109
  %v541 = vpop.f32.mrf.mxu0
  %v542 = vadd.f32 0.0, %v541
  %v543 = vpop.f32.mrf.mxu0
  %544 = vmatprep.mubr.f32.mxu0 0.0
  %545 = vmatmul.mubr.f32.gmra.mxu0 %v110
  %v546 = vpop.f32.mrf.mxu0
  %v547 = vadd.f32 0.0, %v546
  %v548 = vpop.f32.mrf.mxu0
  %549 = vmatprep.mubr.f32.mxu0 0.0
  %550 = vmatmul.mubr.f32.gmra.mxu0 %v111
  %v551 = vpop.f32.mrf.mxu0
  %v552 = vadd.f32 0.0, %v551
  %v553 = vpop.f32.mrf.mxu0
  %554 = vmatprep.mubr.f32.mxu0 0.0
  %555 = vmatmul.mubr.f32.gmra.mxu0 %v112
  %v556 = vpop.f32.mrf.mxu0
  %v557 = vadd.f32 0.0, %v556
  %v558 = vpop.f32.mrf.mxu0
  %559 = vmatprep.mubr.f32.mxu0 0.0
  %560 = vmatmul.mubr.f32.gmra.mxu0 %v113
  %v561 = vpop.f32.mrf.mxu0
  %v562 = vadd.f32 0.0, %v561
  %v563 = vpop.f32.mrf.mxu0
  %564 = vmatprep.mubr.f32.mxu0 0.0
  %565 = vmatmul.mubr.f32.gmra.mxu0 %v114
  %v566 = vpop.f32.mrf.mxu0
  %v567 = vadd.f32 0.0, %v566
  %v568 = vpop.f32.mrf.mxu0
  %569 = vmatprep.mubr.f32.mxu0 0.0
  %570 = vmatmul.mubr.f32.gmra.mxu0 %v115
  %v571 = vpop.f32.mrf.mxu0
  %v572 = vadd.f32 0.0, %v571
  %v573 = vpop.f32.mrf.mxu0
  %574 = vmatprep.mubr.f32.mxu0 0.0
  %575 = vmatmul.mubr.f32.gmra.mxu0 %v116
  %v576 = vpop.f32.mrf.mxu0
  %v577 = vadd.f32 0.0, %v576
  %v578 = vpop.f32.mrf.mxu0
  %579 = vmatprep.mubr.f32.mxu0 0.0
  %580 = vmatmul.mubr.f32.gmra.mxu0 %v117
  %v581 = vpop.f32.mrf.mxu0
  %v582 = vadd.f32 0.0, %v581
  %v583 = vpop.f32.mrf.mxu0
  %584 = vmatprep.mubr.f32.mxu0 0.0
  %585 = vmatmul.mubr.f32.gmra.mxu0 %v118
  %v586 = vpop.f32.mrf.mxu0
  %v587 = vadd.f32 0.0, %v586
  %v588 = vpop.f32.mrf.mxu0
  %589 = vmatprep.mubr.f32.mxu0 0.0
  %590 = vmatmul.mubr.f32.gmra.mxu0 %v119
  %v591 = vpop.f32.mrf.mxu0
  %v592 = vadd.f32 0.0, %v591
  %v593 = vpop.f32.mrf.mxu0
  %594 = vmatprep.mubr.f32.mxu0 0.0
  %595 = vmatmul.mubr.f32.gmra.mxu0 %v120
  %v596 = vpop.f32.mrf.mxu0
  %v597 = vadd.f32 0.0, %v596
  %v598 = vpop.f32.mrf.mxu0
  %599 = vmatprep.mubr.f32.mxu0 0.0
  %600 = vmatmul.mubr.f32.gmra.mxu0 %v121
  %v601 = vpop.f32.mrf.mxu0
  %v602 = vadd.f32 0.0, %v601
  %v603 = vpop.f32.mrf.mxu0
  %604 = vmatprep.mubr.f32.mxu0 0.0
  %605 = vmatmul.mubr.f32.gmra.mxu0 %v122
  %v606 = vpop.f32.mrf.mxu0
  %v607 = vadd.f32 0.0, %v606
  %v608 = vpop.f32.mrf.mxu0
  %609 = vmatprep.mubr.f32.mxu0 0.0
  %610 = vmatmul.mubr.f32.gmra.mxu0 %v123
  %v611 = vpop.f32.mrf.mxu0
  %v612 = vadd.f32 0.0, %v611
  %v613 = vpop.f32.mrf.mxu0
  %614 = vmatprep.mubr.f32.mxu0 0.0
  %615 = vmatmul.mubr.f32.gmra.mxu0 %v124
  %v616 = vpop.f32.mrf.mxu0
  %v617 = vadd.f32 0.0, %v616
  %v618 = vpop.f32.mrf.mxu0
  %619 = vmatprep.mubr.f32.mxu0 0.0
  %620 = vmatmul.mubr.f32.gmra.mxu0 %v125
  %v621 = vpop.f32.mrf.mxu0
  %v622 = vadd.f32 0.0, %v621
  %v623 = vpop.f32.mrf.mxu0
  %624 = vmatprep.mubr.f32.mxu0 0.0
  %625 = vmatmul.mubr.f32.gmra.mxu0 %v126
  %v626 = vpop.f32.mrf.mxu0
  %v627 = vadd.f32 0.0, %v626
  %v628 = vpop.f32.mrf.mxu0
  %629 = vmatprep.mubr.f32.mxu0 0.0
  %630 = vmatmul.mubr.f32.gmra.mxu0 %v127
  %v631 = vpop.f32.mrf.mxu0
  %v632 = vadd.f32 0.0, %v631
  %v633 = vpop.f32.mrf.mxu0
  %634 = vmatprep.mubr.f32.mxu0 0.0
  %635 = vmatmul.mubr.f32.gmra.mxu0 %v128
  %v636 = vpop.f32.mrf.mxu0
  %v637 = vadd.f32 0.0, %v636
  %v638 = vpop.f32.mrf.mxu0
  %639 = vmatprep.mubr.f32.mxu0 0.0
  %640 = vmatmul.mubr.f32.gmra.mxu0 %v129
  %v641 = vpop.f32.mrf.mxu0
  %v642 = vadd.f32 0.0, %v641
  %v643 = vpop.f32.mrf.mxu0
  %644 = vmatprep.mubr.f32.mxu0 0.0
  %645 = vmatmul.mubr.f32.gmra.mxu0 %v130
  %v646 = vpop.f32.mrf.mxu0
  %v647 = vadd.f32 0.0, %v646
  %v648 = vpop.f32.mrf.mxu0
  %649 = vmatprep.mubr.f32.mxu0 0.0
  %650 = vmatmul.mubr.f32.gmra.mxu0 %v131
  %v651 = vpop.f32.mrf.mxu0
  %v652 = vadd.f32 0.0, %v651
  %v653 = vpop.f32.mrf.mxu0
  %654 = vmatprep.mubr.f32.mxu0 0.0
  %655 = vmatmul.mubr.f32.gmra.mxu0 %v132
  %v656 = vpop.f32.mrf.mxu0
  %v657 = vadd.f32 0.0, %v656
  %v658 = vpop.f32.mrf.mxu0
  %659 = vmatprep.mubr.f32.mxu0 0.0
  %660 = vmatmul.mubr.f32.gmra.mxu0 %v133
  %v661 = vpop.f32.mrf.mxu0
  %v662 = vadd.f32 0.0, %v661
  %v663 = vpop.f32.mrf.mxu0
  %664 = vdwg.mxu0
  %v665 = vmax.f32 %v217, %v367
  %v666 = vmax.f32 %v222, %v372
  %v667 = vmax.f32 %v227, %v377
  %v668 = vmax.f32 %v232, %v382
  %v669 = vmax.f32 %v237, %v387
  %v670 = vmax.f32 %v242, %v392
  %v671 = vmax.f32 %v247, %v397
  %v672 = vmax.f32 %v252, %v402
  %v673 = vmax.f32 %v257, %v407
  %v674 = vmax.f32 %v262, %v412
  %v675 = vmax.f32 %v267, %v417
  %v676 = vmax.f32 %v272, %v422
  %v677 = vmax.f32 %v277, %v427
  %v678 = vmax.f32 %v282, %v432
  %v679 = vmax.f32 %v287, %v437
  %v680 = vmax.f32 %v292, %v442
  %v681 = vmax.f32 %v297, %v447
  %v682 = vmax.f32 %v302, %v452
  %v683 = vmax.f32 %v307, %v457
  %v684 = vmax.f32 %v312, %v462
  %v685 = vmax.f32 %v317, %v467
  %v686 = vmax.f32 %v322, %v472
  %v687 = vmax.f32 %v327, %v477
  %v688 = vmax.f32 %v332, %v482
  %v689 = vmax.f32 %v337, %v487
  %v690 = vmax.f32 %v342, %v492
  %v691 = vmax.f32 %v347, %v497
  %v692 = vmax.f32 %v352, %v502
  %v693 = vmax.f32 %v357, %v507
  %v694 = vmax.f32 %v362, %v512
  %v695 = vmax.f32 %v665, %v517
  %v696 = vmax.f32 %v666, %v522
  %v697 = vmax.f32 %v667, %v527
  %v698 = vmax.f32 %v668, %v532
  %v699 = vmax.f32 %v669, %v537
  %v700 = vmax.f32 %v670, %v542
  %v701 = vmax.f32 %v671, %v547
  %v702 = vmax.f32 %v672, %v552
  %v703 = vmax.f32 %v673, %v557
  %v704 = vmax.f32 %v674, %v562
  %v705 = vmax.f32 %v675, %v567
  %v706 = vmax.f32 %v676, %v572
  %v707 = vmax.f32 %v677, %v577
  %v708 = vmax.f32 %v678, %v582
  %v709 = vmax.f32 %v679, %v587
  %v710 = vmax.f32 %v680, %v592
  %v711 = vmax.f32 %v681, %v597
  %v712 = vmax.f32 %v682, %v602
  %v713 = vmax.f32 %v683, %v607
  %v714 = vmax.f32 %v684, %v612
  %v715 = vmax.f32 %v685, %v617
  %v716 = vmax.f32 %v686, %v622
  %v717 = vmax.f32 %v687, %v627
  %v718 = vmax.f32 %v688, %v632
  %v719 = vmax.f32 %v689, %v637
  %v720 = vmax.f32 %v690, %v642
  %v721 = vmax.f32 %v691, %v647
  %v722 = vmax.f32 %v692, %v652
  %v723 = vmax.f32 %v693, %v657
  %v724 = vmax.f32 %v694, %v662
  %v725 = vld [vmem:[%s2] sm:$0x1]
  %v727 = vlaneseq
  %v728 = vshrl.u32 %v727, 7
  %v729 = vsub.s32 0, %v728
  %v730 = vrot.slane %v725, %v729
  %v732 = vadd.f32 %v695, %v730
  %v733 = vadd.f32 %v696, %v730
  %v734 = vadd.f32 %v697, %v730
  %v735 = vadd.f32 %v698, %v730
  %v736 = vadd.f32 %v699, %v730
  %v737 = vadd.f32 %v700, %v730
  %v738 = vadd.f32 %v701, %v730
  %v739 = vadd.f32 %v702, %v730
  %v740 = vadd.f32 %v703, %v730
  %v741 = vadd.f32 %v704, %v730
  %v742 = vadd.f32 %v705, %v730
  %v743 = vadd.f32 %v706, %v730
  %v744 = vadd.f32 %v707, %v730
  %v745 = vadd.f32 %v708, %v730
  %v746 = vadd.f32 %v709, %v730
  %v747 = vadd.f32 %v710, %v730
  %v748 = vadd.f32 %v711, %v730
  %v749 = vadd.f32 %v712, %v730
  %v750 = vadd.f32 %v713, %v730
  %v751 = vadd.f32 %v714, %v730
  %v752 = vadd.f32 %v715, %v730
  %v753 = vadd.f32 %v716, %v730
  %v754 = vadd.f32 %v717, %v730
  %v755 = vadd.f32 %v718, %v730
  %v756 = vadd.f32 %v719, %v730
  %v757 = vadd.f32 %v720, %v730
  %v758 = vadd.f32 %v721, %v730
  %v759 = vadd.f32 %v722, %v730
  %v760 = vadd.f32 %v723, %v730
  %v761 = vadd.f32 %v724, %v730
  %v762 = vmax.f32 %v732, 0.0
  %v763 = vmax.f32 %v733, 0.0
  %v764 = vmax.f32 %v734, 0.0
  %v765 = vmax.f32 %v735, 0.0
  %v766 = vmax.f32 %v736, 0.0
  %v767 = vmax.f32 %v737, 0.0
  %v768 = vmax.f32 %v738, 0.0
  %v769 = vmax.f32 %v739, 0.0
  %v770 = vmax.f32 %v740, 0.0
  %v771 = vmax.f32 %v741, 0.0
  %v772 = vmax.f32 %v742, 0.0
  %v773 = vmax.f32 %v743, 0.0
  %v774 = vmax.f32 %v744, 0.0
  %v775 = vmax.f32 %v745, 0.0
  %v776 = vmax.f32 %v746, 0.0
  %v777 = vmax.f32 %v747, 0.0
  %v778 = vmax.f32 %v748, 0.0
  %v779 = vmax.f32 %v749, 0.0
  %v780 = vmax.f32 %v750, 0.0
  %v781 = vmax.f32 %v751, 0.0
  %v782 = vmax.f32 %v752, 0.0
  %v783 = vmax.f32 %v753, 0.0
  %v784 = vmax.f32 %v754, 0.0
  %v785 = vmax.f32 %v755, 0.0
  %v786 = vmax.f32 %v756, 0.0
  %v787 = vmax.f32 %v757, 0.0
  %v788 = vmax.f32 %v758, 0.0
  %v789 = vmax.f32 %v759, 0.0
  %v790 = vmax.f32 %v760, 0.0
  %v791 = vmax.f32 %v761, 0.0
  %v792 = vld [vmem:[%s3] sm:$0xff]
  %v793 = vld [vmem:[%s3 + $0x8] sm:$0xff]
  %v794 = vld [vmem:[%s3 + $0x10] sm:$0xff]
  %v795 = vld [vmem:[%s3 + $0x18] sm:$0xff]
  %s796 = scalar_lea.vmem %s3, 32
  %v797 = vld [vmem:[%s796] sm:$0xff]
  %v798 = vld [vmem:[%s796 + $0x8] sm:$0xff]
  %v799 = vld [vmem:[%s796 + $0x10] sm:$0xff]
  %v800 = vld [vmem:[%s796 + $0x18] sm:$0xff]
  %vm801 = vcmask 261120
  %v803 = vsel %vm801, %v764, 0
  %v806 = vsel %vm801, %v765, 0
  %v809 = vsel %vm801, %v766, 0
  %v812 = vsel %vm801, %v767, 0
  %v815 = vsel %vm801, %v768, 0
  %v818 = vsel %vm801, %v769, 0
  %v821 = vsel %vm801, %v770, 0
  %v824 = vsel %vm801, %v771, 0
  %v827 = vsel %vm801, %v772, 0
  %v830 = vsel %vm801, %v773, 0
  %v833 = vsel %vm801, %v774, 0
  %v836 = vsel %vm801, %v775, 0
  %v839 = vsel %vm801, %v776, 0
  %v842 = vsel %vm801, %v777, 0
  %v845 = vsel %vm801, %v778, 0
  %v848 = vsel %vm801, %v779, 0
  %v851 = vsel %vm801, %v780, 0
  %v854 = vsel %vm801, %v781, 0
  %v857 = vsel %vm801, %v782, 0
  %v860 = vsel %vm801, %v783, 0
  %v863 = vsel %vm801, %v784, 0
  %v866 = vsel %vm801, %v785, 0
  %v869 = vsel %vm801, %v786, 0
  %v872 = vsel %vm801, %v787, 0
  %874 = vmatprep.subr.mxu0 0.0
  %875 = vmatpush1.msra.mxu0 0.0
  %876 = vmatprep.subr.mxu0 0.0
  %877 = vmatpush1.msra.mxu0 0.0
  %878 = vmatprep.subr.mxu0 0.0
  %879 = vmatpush1.msra.mxu0 0.0
  %880 = vmatprep.subr.mxu0 0.0
  %881 = vmatpush1.msra.mxu0 0.0
  %882 = vmatprep.subr.mxu0 0.0
  %883 = vmatpush1.msra.mxu0 0.0
  %884 = vmatprep.subr.mxu0 0.0
  %885 = vmatpush1.msra.mxu0 0.0
  %886 = vmatprep.subr.mxu0 0.0
  %887 = vmatpush1.msra.mxu0 0.0
  %888 = vmatprep.subr.mxu0 0.0
  %889 = vmatpush1.msra.mxu0 0.0
  %890 = vmatprep.subr.mxu0 0.0
  %891 = vmatpush1.msra.mxu0 0.0
  %892 = vmatprep.subr.mxu0 0.0
  %893 = vmatpush1.msra.mxu0 0.0
  %894 = vmatprep.subr.mxu0 0.0
  %895 = vmatpush1.msra.mxu0 0.0
  %896 = vmatprep.subr.mxu0 0.0
  %897 = vmatpush1.msra.mxu0 0.0
  %898 = vmatprep.subr.mxu0 0.0
  %899 = vmatpush1.msra.mxu0 %v800
  %900 = vmatprep.subr.mxu0 0.0
  %901 = vmatpush1.msra.mxu0 %v799
  %902 = vmatprep.subr.mxu0 0.0
  %903 = vmatpush1.msra.mxu0 %v798
  %904 = vmatprep.subr.mxu0 0.0
  %905 = vmatpush1.msra.mxu0 %v797
  %906 = vmatprep.subr.mxu0 0.0
  %907 = vmatpush2.msra.mxu0 0.0
  %908 = vmatprep.subr.mxu0 0.0
  %909 = vmatpush2.msra.mxu0 0.0
  %910 = vmatprep.subr.mxu0 0.0
  %911 = vmatpush2.msra.mxu0 0.0
  %912 = vmatprep.subr.mxu0 0.0
  %913 = vmatpush2.msra.mxu0 0.0
  %914 = vmatprep.subr.mxu0 0.0
  %915 = vmatpush2.msra.mxu0 0.0
  %916 = vmatprep.subr.mxu0 0.0
  %917 = vmatpush2.msra.mxu0 0.0
  %918 = vmatprep.subr.mxu0 0.0
  %919 = vmatpush2.msra.mxu0 0.0
  %920 = vmatprep.subr.mxu0 0.0
  %921 = vmatpush2.msra.mxu0 0.0
  %922 = vmatprep.subr.mxu0 0.0
  %923 = vmatpush2.msra.mxu0 0.0
  %924 = vmatprep.subr.mxu0 0.0
  %925 = vmatpush2.msra.mxu0 0.0
  %926 = vmatprep.subr.mxu0 0.0
  %927 = vmatpush2.msra.mxu0 0.0
  %928 = vmatprep.subr.mxu0 0.0
  %929 = vmatpush2.msra.mxu0 0.0
  %930 = vmatprep.subr.mxu0 0.0
  %931 = vmatpush2.msra.mxu0 0.0
  %932 = vmatprep.subr.mxu0 0.0
  %933 = vmatpush2.msra.mxu0 0.0
  %934 = vmatprep.subr.mxu0 0.0
  %935 = vmatpush2.msra.mxu0 0.0
  %936 = vmatprep.subr.mxu0 0.0
  %937 = vmatpush2.msra.mxu0 0.0
  %938 = vmatprep.mubr.f32.mxu0 0.0
  %939 = vmatmul.mubr.f32.gmra.mxu0 %v803
  %v940 = vpop.f32.mrf.mxu0
  %v941 = vadd.f32 0.0, %v940
  %v942 = vpop.f32.mrf.mxu0
  %943 = vmatprep.mubr.f32.mxu0 0.0
  %944 = vmatmul.mubr.f32.gmra.mxu0 %v806
  %v945 = vpop.f32.mrf.mxu0
  %v946 = vadd.f32 0.0, %v945
  %v947 = vpop.f32.mrf.mxu0
  %948 = vmatprep.mubr.f32.mxu0 0.0
  %949 = vmatmul.mubr.f32.gmra.mxu0 %v809
  %v950 = vpop.f32.mrf.mxu0
  %v951 = vadd.f32 0.0, %v950
  %v952 = vpop.f32.mrf.mxu0
  %953 = vmatprep.mubr.f32.mxu0 0.0
  %954 = vmatmul.mubr.f32.gmra.mxu0 %v812
  %v955 = vpop.f32.mrf.mxu0
  %v956 = vadd.f32 0.0, %v955
  %v957 = vpop.f32.mrf.mxu0
  %958 = vmatprep.mubr.f32.mxu0 0.0
  %959 = vmatmul.mubr.f32.gmra.mxu0 %v815
  %v960 = vpop.f32.mrf.mxu0
  %v961 = vadd.f32 0.0, %v960
  %v962 = vpop.f32.mrf.mxu0
  %963 = vmatprep.mubr.f32.mxu0 0.0
  %964 = vmatmul.mubr.f32.gmra.mxu0 %v818
  %v965 = vpop.f32.mrf.mxu0
  %v966 = vadd.f32 0.0, %v965
  %v967 = vpop.f32.mrf.mxu0
  %968 = vmatprep.mubr.f32.mxu0 0.0
  %969 = vmatmul.mubr.f32.gmra.mxu0 %v821
  %v970 = vpop.f32.mrf.mxu0
  %v971 = vadd.f32 0.0, %v970
  %v972 = vpop.f32.mrf.mxu0
  %973 = vmatprep.mubr.f32.mxu0 0.0
  %974 = vmatmul.mubr.f32.gmra.mxu0 %v824
  %v975 = vpop.f32.mrf.mxu0
  %v976 = vadd.f32 0.0, %v975
  %v977 = vpop.f32.mrf.mxu0
  %978 = vmatprep.mubr.f32.mxu0 0.0
  %979 = vmatmul.mubr.f32.gmra.mxu0 %v827
  %v980 = vpop.f32.mrf.mxu0
  %v981 = vadd.f32 0.0, %v980
  %v982 = vpop.f32.mrf.mxu0
  %983 = vmatprep.mubr.f32.mxu0 0.0
  %984 = vmatmul.mubr.f32.gmra.mxu0 %v830
  %v985 = vpop.f32.mrf.mxu0
  %v986 = vadd.f32 0.0, %v985
  %v987 = vpop.f32.mrf.mxu0
  %988 = vmatprep.mubr.f32.mxu0 0.0
  %989 = vmatmul.mubr.f32.gmra.mxu0 %v833
  %v990 = vpop.f32.mrf.mxu0
  %v991 = vadd.f32 0.0, %v990
  %v992 = vpop.f32.mrf.mxu0
  %993 = vmatprep.mubr.f32.mxu0 0.0
  %994 = vmatmul.mubr.f32.gmra.mxu0 %v836
  %v995 = vpop.f32.mrf.mxu0
  %v996 = vadd.f32 0.0, %v995
  %v997 = vpop.f32.mrf.mxu0
  %998 = vmatprep.mubr.f32.mxu0 0.0
  %999 = vmatmul.mubr.f32.gmra.mxu0 %v839
  %v1000 = vpop.f32.mrf.mxu0
  %v1001 = vadd.f32 0.0, %v1000
  %v1002 = vpop.f32.mrf.mxu0
  %1003 = vmatprep.mubr.f32.mxu0 0.0
  %1004 = vmatmul.mubr.f32.gmra.mxu0 %v842
  %v1005 = vpop.f32.mrf.mxu0
  %v1006 = vadd.f32 0.0, %v1005
  %v1007 = vpop.f32.mrf.mxu0
  %1008 = vmatprep.mubr.f32.mxu0 0.0
  %1009 = vmatmul.mubr.f32.gmra.mxu0 %v845
  %v1010 = vpop.f32.mrf.mxu0
  %v1011 = vadd.f32 0.0, %v1010
  %v1012 = vpop.f32.mrf.mxu0
  %1013 = vmatprep.mubr.f32.mxu0 0.0
  %1014 = vmatmul.mubr.f32.gmra.mxu0 %v848
  %v1015 = vpop.f32.mrf.mxu0
  %v1016 = vadd.f32 0.0, %v1015
  %v1017 = vpop.f32.mrf.mxu0
  %1018 = vmatprep.mubr.f32.mxu0 0.0
  %1019 = vmatmul.mubr.f32.gmra.mxu0 %v851
  %v1020 = vpop.f32.mrf.mxu0
  %v1021 = vadd.f32 0.0, %v1020
  %v1022 = vpop.f32.mrf.mxu0
  %1023 = vmatprep.mubr.f32.mxu0 0.0
  %1024 = vmatmul.mubr.f32.gmra.mxu0 %v854
  %v1025 = vpop.f32.mrf.mxu0
  %v1026 = vadd.f32 0.0, %v1025
  %v1027 = vpop.f32.mrf.mxu0
  %1028 = vmatprep.mubr.f32.mxu0 0.0
  %1029 = vmatmul.mubr.f32.gmra.mxu0 %v857
  %v1030 = vpop.f32.mrf.mxu0
  %v1031 = vadd.f32 0.0, %v1030
  %v1032 = vpop.f32.mrf.mxu0
  %1033 = vmatprep.mubr.f32.mxu0 0.0
  %1034 = vmatmul.mubr.f32.gmra.mxu0 %v860
  %v1035 = vpop.f32.mrf.mxu0
  %v1036 = vadd.f32 0.0, %v1035
  %v1037 = vpop.f32.mrf.mxu0
  %1038 = vmatprep.mubr.f32.mxu0 0.0
  %1039 = vmatmul.mubr.f32.gmra.mxu0 %v863
  %v1040 = vpop.f32.mrf.mxu0
  %v1041 = vadd.f32 0.0, %v1040
  %v1042 = vpop.f32.mrf.mxu0
  %1043 = vmatprep.mubr.f32.mxu0 0.0
  %1044 = vmatmul.mubr.f32.gmra.mxu0 %v866
  %v1045 = vpop.f32.mrf.mxu0
  %v1046 = vadd.f32 0.0, %v1045
  %v1047 = vpop.f32.mrf.mxu0
  %1048 = vmatprep.mubr.f32.mxu0 0.0
  %1049 = vmatmul.mubr.f32.gmra.mxu0 %v869
  %v1050 = vpop.f32.mrf.mxu0
  %v1051 = vadd.f32 0.0, %v1050
  %v1052 = vpop.f32.mrf.mxu0
  %1053 = vmatprep.mubr.f32.mxu0 0.0
  %1054 = vmatmul.mubr.f32.gmra.mxu0 %v872
  %v1055 = vpop.f32.mrf.mxu0
  %v1056 = vadd.f32 0.0, %v1055
  %v1057 = vpop.f32.mrf.mxu0
  %1058 = vdwg.mxu0
  %v1060 = vsel %vm801, %v762, 0
  %v1063 = vsel %vm801, %v763, 0
  %1065 = vmatprep.subr.mxu0 0.0
  %1066 = vmatpush1.msra.mxu0 0.0
  %1067 = vmatprep.subr.mxu0 0.0
  %1068 = vmatpush1.msra.mxu0 0.0
  %1069 = vmatprep.subr.mxu0 0.0
  %1070 = vmatpush1.msra.mxu0 0.0
  %1071 = vmatprep.subr.mxu0 0.0
  %1072 = vmatpush1.msra.mxu0 0.0
  %1073 = vmatprep.subr.mxu0 0.0
  %1074 = vmatpush1.msra.mxu0 0.0
  %1075 = vmatprep.subr.mxu0 0.0
  %1076 = vmatpush1.msra.mxu0 0.0
  %1077 = vmatprep.subr.mxu0 0.0
  %1078 = vmatpush1.msra.mxu0 0.0
  %1079 = vmatprep.subr.mxu0 0.0
  %1080 = vmatpush1.msra.mxu0 0.0
  %1081 = vmatprep.subr.mxu0 0.0
  %1082 = vmatpush1.msra.mxu0 0.0
  %1083 = vmatprep.subr.mxu0 0.0
  %1084 = vmatpush1.msra.mxu0 0.0
  %1085 = vmatprep.subr.mxu0 0.0
  %1086 = vmatpush1.msra.mxu0 0.0
  %1087 = vmatprep.subr.mxu0 0.0
  %1088 = vmatpush1.msra.mxu0 0.0
  %1089 = vmatprep.subr.mxu0 0.0
  %1090 = vmatpush1.msra.mxu0 %v795
  %1091 = vmatprep.subr.mxu0 0.0
  %1092 = vmatpush1.msra.mxu0 %v794
  %1093 = vmatprep.subr.mxu0 0.0
  %1094 = vmatpush1.msra.mxu0 %v793
  %1095 = vmatprep.subr.mxu0 0.0
  %1096 = vmatpush1.msra.mxu0 %v792
  %1097 = vmatprep.subr.mxu0 0.0
  %1098 = vmatpush2.msra.mxu0 0.0
  %1099 = vmatprep.subr.mxu0 0.0
  %1100 = vmatpush2.msra.mxu0 0.0
  %1101 = vmatprep.subr.mxu0 0.0
  %1102 = vmatpush2.msra.mxu0 0.0
  %1103 = vmatprep.subr.mxu0 0.0
  %1104 = vmatpush2.msra.mxu0 0.0
  %1105 = vmatprep.subr.mxu0 0.0
  %1106 = vmatpush2.msra.mxu0 0.0
  %1107 = vmatprep.subr.mxu0 0.0
  %1108 = vmatpush2.msra.mxu0 0.0
  %1109 = vmatprep.subr.mxu0 0.0
  %1110 = vmatpush2.msra.mxu0 0.0
  %1111 = vmatprep.subr.mxu0 0.0
  %1112 = vmatpush2.msra.mxu0 0.0
  %1113 = vmatprep.subr.mxu0 0.0
  %1114 = vmatpush2.msra.mxu0 0.0
  %1115 = vmatprep.subr.mxu0 0.0
  %1116 = vmatpush2.msra.mxu0 0.0
  %1117 = vmatprep.subr.mxu0 0.0
  %1118 = vmatpush2.msra.mxu0 0.0
  %1119 = vmatprep.subr.mxu0 0.0
  %1120 = vmatpush2.msra.mxu0 0.0
  %1121 = vmatprep.subr.mxu0 0.0
  %1122 = vmatpush2.msra.mxu0 0.0
  %1123 = vmatprep.subr.mxu0 0.0
  %1124 = vmatpush2.msra.mxu0 0.0
  %1125 = vmatprep.subr.mxu0 0.0
  %1126 = vmatpush2.msra.mxu0 0.0
  %1127 = vmatprep.subr.mxu0 0.0
  %1128 = vmatpush2.msra.mxu0 0.0
  %1129 = vmatprep.mubr.f32.mxu0 0.0
  %1130 = vmatmul.mubr.f32.gmra.mxu0 %v1060
  %v1131 = vpop.f32.mrf.mxu0
  %v1132 = vadd.f32 %v941, %v1131
  %v1133 = vpop.f32.mrf.mxu0
  %1134 = vmatprep.mubr.f32.mxu0 0.0
  %1135 = vmatmul.mubr.f32.gmra.mxu0 %v1063
  %v1136 = vpop.f32.mrf.mxu0
  %v1137 = vadd.f32 %v946, %v1136
  %v1138 = vpop.f32.mrf.mxu0
  %1139 = vmatprep.mubr.f32.mxu0 0.0
  %1140 = vmatmul.mubr.f32.gmra.mxu0 %v803
  %v1141 = vpop.f32.mrf.mxu0
  %v1142 = vadd.f32 %v951, %v1141
  %v1143 = vpop.f32.mrf.mxu0
  %1144 = vmatprep.mubr.f32.mxu0 0.0
  %1145 = vmatmul.mubr.f32.gmra.mxu0 %v806
  %v1146 = vpop.f32.mrf.mxu0
  %v1147 = vadd.f32 %v956, %v1146
  %v1148 = vpop.f32.mrf.mxu0
  %1149 = vmatprep.mubr.f32.mxu0 0.0
  %1150 = vmatmul.mubr.f32.gmra.mxu0 %v809
  %v1151 = vpop.f32.mrf.mxu0
  %v1152 = vadd.f32 %v961, %v1151
  %v1153 = vpop.f32.mrf.mxu0
  %1154 = vmatprep.mubr.f32.mxu0 0.0
  %1155 = vmatmul.mubr.f32.gmra.mxu0 %v812
  %v1156 = vpop.f32.mrf.mxu0
  %v1157 = vadd.f32 %v966, %v1156
  %v1158 = vpop.f32.mrf.mxu0
  %1159 = vmatprep.mubr.f32.mxu0 0.0
  %1160 = vmatmul.mubr.f32.gmra.mxu0 %v815
  %v1161 = vpop.f32.mrf.mxu0
  %v1162 = vadd.f32 %v971, %v1161
  %v1163 = vpop.f32.mrf.mxu0
  %1164 = vmatprep.mubr.f32.mxu0 0.0
  %1165 = vmatmul.mubr.f32.gmra.mxu0 %v818
  %v1166 = vpop.f32.mrf.mxu0
  %v1167 = vadd.f32 %v976, %v1166
  %v1168 = vpop.f32.mrf.mxu0
  %1169 = vmatprep.mubr.f32.mxu0 0.0
  %1170 = vmatmul.mubr.f32.gmra.mxu0 %v821
  %v1171 = vpop.f32.mrf.mxu0
  %v1172 = vadd.f32 %v981, %v1171
  %v1173 = vpop.f32.mrf.mxu0
  %1174 = vmatprep.mubr.f32.mxu0 0.0
  %1175 = vmatmul.mubr.f32.gmra.mxu0 %v824
  %v1176 = vpop.f32.mrf.mxu0
  %v1177 = vadd.f32 %v986, %v1176
  %v1178 = vpop.f32.mrf.mxu0
  %1179 = vmatprep.mubr.f32.mxu0 0.0
  %1180 = vmatmul.mubr.f32.gmra.mxu0 %v827
  %v1181 = vpop.f32.mrf.mxu0
  %v1182 = vadd.f32 %v991, %v1181
  %v1183 = vpop.f32.mrf.mxu0
  %1184 = vmatprep.mubr.f32.mxu0 0.0
  %1185 = vmatmul.mubr.f32.gmra.mxu0 %v830
  %v1186 = vpop.f32.mrf.mxu0
  %v1187 = vadd.f32 %v996, %v1186
  %v1188 = vpop.f32.mrf.mxu0
  %1189 = vmatprep.mubr.f32.mxu0 0.0
  %1190 = vmatmul.mubr.f32.gmra.mxu0 %v833
  %v1191 = vpop.f32.mrf.mxu0
  %v1192 = vadd.f32 %v1001, %v1191
  %v1193 = vpop.f32.mrf.mxu0
  %1194 = vmatprep.mubr.f32.mxu0 0.0
  %1195 = vmatmul.mubr.f32.gmra.mxu0 %v836
  %v1196 = vpop.f32.mrf.mxu0
  %v1197 = vadd.f32 %v1006, %v1196
  %v1198 = vpop.f32.mrf.mxu0
  %1199 = vmatprep.mubr.f32.mxu0 0.0
  %1200 = vmatmul.mubr.f32.gmra.mxu0 %v839
  %v1201 = vpop.f32.mrf.mxu0
  %v1202 = vadd.f32 %v1011, %v1201
  %v1203 = vpop.f32.mrf.mxu0
  %1204 = vmatprep.mubr.f32.mxu0 0.0
  %1205 = vmatmul.mubr.f32.gmra.mxu0 %v842
  %v1206 = vpop.f32.mrf.mxu0
  %v1207 = vadd.f32 %v1016, %v1206
  %v1208 = vpop.f32.mrf.mxu0
  %1209 = vmatprep.mubr.f32.mxu0 0.0
  %1210 = vmatmul.mubr.f32.gmra.mxu0 %v845
  %v1211 = vpop.f32.mrf.mxu0
  %v1212 = vadd.f32 %v1021, %v1211
  %v1213 = vpop.f32.mrf.mxu0
  %1214 = vmatprep.mubr.f32.mxu0 0.0
  %1215 = vmatmul.mubr.f32.gmra.mxu0 %v848
  %v1216 = vpop.f32.mrf.mxu0
  %v1217 = vadd.f32 %v1026, %v1216
  %v1218 = vpop.f32.mrf.mxu0
  %1219 = vmatprep.mubr.f32.mxu0 0.0
  %1220 = vmatmul.mubr.f32.gmra.mxu0 %v851
  %v1221 = vpop.f32.mrf.mxu0
  %v1222 = vadd.f32 %v1031, %v1221
  %v1223 = vpop.f32.mrf.mxu0
  %1224 = vmatprep.mubr.f32.mxu0 0.0
  %1225 = vmatmul.mubr.f32.gmra.mxu0 %v854
  %v1226 = vpop.f32.mrf.mxu0
  %v1227 = vadd.f32 %v1036, %v1226
  %v1228 = vpop.f32.mrf.mxu0
  %1229 = vmatprep.mubr.f32.mxu0 0.0
  %1230 = vmatmul.mubr.f32.gmra.mxu0 %v857
  %v1231 = vpop.f32.mrf.mxu0
  %v1232 = vadd.f32 %v1041, %v1231
  %v1233 = vpop.f32.mrf.mxu0
  %1234 = vmatprep.mubr.f32.mxu0 0.0
  %1235 = vmatmul.mubr.f32.gmra.mxu0 %v860
  %v1236 = vpop.f32.mrf.mxu0
  %v1237 = vadd.f32 %v1046, %v1236
  %v1238 = vpop.f32.mrf.mxu0
  %1239 = vmatprep.mubr.f32.mxu0 0.0
  %1240 = vmatmul.mubr.f32.gmra.mxu0 %v863
  %v1241 = vpop.f32.mrf.mxu0
  %v1242 = vadd.f32 %v1051, %v1241
  %v1243 = vpop.f32.mrf.mxu0
  %1244 = vmatprep.mubr.f32.mxu0 0.0
  %1245 = vmatmul.mubr.f32.gmra.mxu0 %v866
  %v1246 = vpop.f32.mrf.mxu0
  %v1247 = vadd.f32 %v1056, %v1246
  %v1248 = vpop.f32.mrf.mxu0
  %1249 = vdwg.mxu0
  %s1250 = scalar_lea.vmem %s3, 64
  %v1251 = vld [vmem:[%s1250] sm:$0xff]
  %v1252 = vld [vmem:[%s1250 + $0x8] sm:$0xff]
  %v1253 = vld [vmem:[%s1250 + $0x10] sm:$0xff]
  %v1254 = vld [vmem:[%s1250 + $0x18] sm:$0xff]
  %v1256 = vsel %vm801, %v788, 0
  %v1259 = vsel %vm801, %v789, 0
  %1261 = vmatprep.subr.mxu0 0.0
  %1262 = vmatpush1.msra.mxu0 0.0
  %1263 = vmatprep.subr.mxu0 0.0
  %1264 = vmatpush1.msra.mxu0 0.0
  %1265 = vmatprep.subr.mxu0 0.0
  %1266 = vmatpush1.msra.mxu0 0.0
  %1267 = vmatprep.subr.mxu0 0.0
  %1268 = vmatpush1.msra.mxu0 0.0
  %1269 = vmatprep.subr.mxu0 0.0
  %1270 = vmatpush1.msra.mxu0 0.0
  %1271 = vmatprep.subr.mxu0 0.0
  %1272 = vmatpush1.msra.mxu0 0.0
  %1273 = vmatprep.subr.mxu0 0.0
  %1274 = vmatpush1.msra.mxu0 0.0
  %1275 = vmatprep.subr.mxu0 0.0
  %1276 = vmatpush1.msra.mxu0 0.0
  %1277 = vmatprep.subr.mxu0 0.0
  %1278 = vmatpush1.msra.mxu0 0.0
  %1279 = vmatprep.subr.mxu0 0.0
  %1280 = vmatpush1.msra.mxu0 0.0
  %1281 = vmatprep.subr.mxu0 0.0
  %1282 = vmatpush1.msra.mxu0 0.0
  %1283 = vmatprep.subr.mxu0 0.0
  %1284 = vmatpush1.msra.mxu0 0.0
  %1285 = vmatprep.subr.mxu0 0.0
  %1286 = vmatpush1.msra.mxu0 %v1254
  %1287 = vmatprep.subr.mxu0 0.0
  %1288 = vmatpush1.msra.mxu0 %v1253
  %1289 = vmatprep.subr.mxu0 0.0
  %1290 = vmatpush1.msra.mxu0 %v1252
  %1291 = vmatprep.subr.mxu0 0.0
  %1292 = vmatpush1.msra.mxu0 %v1251
  %1293 = vmatprep.subr.mxu0 0.0
  %1294 = vmatpush2.msra.mxu0 0.0
  %1295 = vmatprep.subr.mxu0 0.0
  %1296 = vmatpush2.msra.mxu0 0.0
  %1297 = vmatprep.subr.mxu0 0.0
  %1298 = vmatpush2.msra.mxu0 0.0
  %1299 = vmatprep.subr.mxu0 0.0
  %1300 = vmatpush2.msra.mxu0 0.0
  %1301 = vmatprep.subr.mxu0 0.0
  %1302 = vmatpush2.msra.mxu0 0.0
  %1303 = vmatprep.subr.mxu0 0.0
  %1304 = vmatpush2.msra.mxu0 0.0
  %1305 = vmatprep.subr.mxu0 0.0
  %1306 = vmatpush2.msra.mxu0 0.0
  %1307 = vmatprep.subr.mxu0 0.0
  %1308 = vmatpush2.msra.mxu0 0.0
  %1309 = vmatprep.subr.mxu0 0.0
  %1310 = vmatpush2.msra.mxu0 0.0
  %1311 = vmatprep.subr.mxu0 0.0
  %1312 = vmatpush2.msra.mxu0 0.0
  %1313 = vmatprep.subr.mxu0 0.0
  %1314 = vmatpush2.msra.mxu0 0.0
  %1315 = vmatprep.subr.mxu0 0.0
  %1316 = vmatpush2.msra.mxu0 0.0
  %1317 = vmatprep.subr.mxu0 0.0
  %1318 = vmatpush2.msra.mxu0 0.0
  %1319 = vmatprep.subr.mxu0 0.0
  %1320 = vmatpush2.msra.mxu0 0.0
  %1321 = vmatprep.subr.mxu0 0.0
  %1322 = vmatpush2.msra.mxu0 0.0
  %1323 = vmatprep.subr.mxu0 0.0
  %1324 = vmatpush2.msra.mxu0 0.0
  %1325 = vmatprep.mubr.f32.mxu0 0.0
  %1326 = vmatmul.mubr.f32.gmra.mxu0 %v809
  %v1327 = vpop.f32.mrf.mxu0
  %v1328 = vadd.f32 0.0, %v1327
  %v1329 = vpop.f32.mrf.mxu0
  %1330 = vmatprep.mubr.f32.mxu0 0.0
  %1331 = vmatmul.mubr.f32.gmra.mxu0 %v812
  %v1332 = vpop.f32.mrf.mxu0
  %v1333 = vadd.f32 0.0, %v1332
  %v1334 = vpop.f32.mrf.mxu0
  %1335 = vmatprep.mubr.f32.mxu0 0.0
  %1336 = vmatmul.mubr.f32.gmra.mxu0 %v815
  %v1337 = vpop.f32.mrf.mxu0
  %v1338 = vadd.f32 0.0, %v1337
  %v1339 = vpop.f32.mrf.mxu0
  %1340 = vmatprep.mubr.f32.mxu0 0.0
  %1341 = vmatmul.mubr.f32.gmra.mxu0 %v818
  %v1342 = vpop.f32.mrf.mxu0
  %v1343 = vadd.f32 0.0, %v1342
  %v1344 = vpop.f32.mrf.mxu0
  %1345 = vmatprep.mubr.f32.mxu0 0.0
  %1346 = vmatmul.mubr.f32.gmra.mxu0 %v821
  %v1347 = vpop.f32.mrf.mxu0
  %v1348 = vadd.f32 0.0, %v1347
  %v1349 = vpop.f32.mrf.mxu0
  %1350 = vmatprep.mubr.f32.mxu0 0.0
  %1351 = vmatmul.mubr.f32.gmra.mxu0 %v824
  %v1352 = vpop.f32.mrf.mxu0
  %v1353 = vadd.f32 0.0, %v1352
  %v1354 = vpop.f32.mrf.mxu0
  %1355 = vmatprep.mubr.f32.mxu0 0.0
  %1356 = vmatmul.mubr.f32.gmra.mxu0 %v827
  %v1357 = vpop.f32.mrf.mxu0
  %v1358 = vadd.f32 0.0, %v1357
  %v1359 = vpop.f32.mrf.mxu0
  %1360 = vmatprep.mubr.f32.mxu0 0.0
  %1361 = vmatmul.mubr.f32.gmra.mxu0 %v830
  %v1362 = vpop.f32.mrf.mxu0
  %v1363 = vadd.f32 0.0, %v1362
  %v1364 = vpop.f32.mrf.mxu0
  %1365 = vmatprep.mubr.f32.mxu0 0.0
  %1366 = vmatmul.mubr.f32.gmra.mxu0 %v833
  %v1367 = vpop.f32.mrf.mxu0
  %v1368 = vadd.f32 0.0, %v1367
  %v1369 = vpop.f32.mrf.mxu0
  %1370 = vmatprep.mubr.f32.mxu0 0.0
  %1371 = vmatmul.mubr.f32.gmra.mxu0 %v836
  %v1372 = vpop.f32.mrf.mxu0
  %v1373 = vadd.f32 0.0, %v1372
  %v1374 = vpop.f32.mrf.mxu0
  %1375 = vmatprep.mubr.f32.mxu0 0.0
  %1376 = vmatmul.mubr.f32.gmra.mxu0 %v839
  %v1377 = vpop.f32.mrf.mxu0
  %v1378 = vadd.f32 0.0, %v1377
  %v1379 = vpop.f32.mrf.mxu0
  %1380 = vmatprep.mubr.f32.mxu0 0.0
  %1381 = vmatmul.mubr.f32.gmra.mxu0 %v842
  %v1382 = vpop.f32.mrf.mxu0
  %v1383 = vadd.f32 0.0, %v1382
  %v1384 = vpop.f32.mrf.mxu0
  %1385 = vmatprep.mubr.f32.mxu0 0.0
  %1386 = vmatmul.mubr.f32.gmra.mxu0 %v845
  %v1387 = vpop.f32.mrf.mxu0
  %v1388 = vadd.f32 0.0, %v1387
  %v1389 = vpop.f32.mrf.mxu0
  %1390 = vmatprep.mubr.f32.mxu0 0.0
  %1391 = vmatmul.mubr.f32.gmra.mxu0 %v848
  %v1392 = vpop.f32.mrf.mxu0
  %v1393 = vadd.f32 0.0, %v1392
  %v1394 = vpop.f32.mrf.mxu0
  %1395 = vmatprep.mubr.f32.mxu0 0.0
  %1396 = vmatmul.mubr.f32.gmra.mxu0 %v851
  %v1397 = vpop.f32.mrf.mxu0
  %v1398 = vadd.f32 0.0, %v1397
  %v1399 = vpop.f32.mrf.mxu0
  %1400 = vmatprep.mubr.f32.mxu0 0.0
  %1401 = vmatmul.mubr.f32.gmra.mxu0 %v854
  %v1402 = vpop.f32.mrf.mxu0
  %v1403 = vadd.f32 0.0, %v1402
  %v1404 = vpop.f32.mrf.mxu0
  %1405 = vmatprep.mubr.f32.mxu0 0.0
  %1406 = vmatmul.mubr.f32.gmra.mxu0 %v857
  %v1407 = vpop.f32.mrf.mxu0
  %v1408 = vadd.f32 0.0, %v1407
  %v1409 = vpop.f32.mrf.mxu0
  %1410 = vmatprep.mubr.f32.mxu0 0.0
  %1411 = vmatmul.mubr.f32.gmra.mxu0 %v860
  %v1412 = vpop.f32.mrf.mxu0
  %v1413 = vadd.f32 0.0, %v1412
  %v1414 = vpop.f32.mrf.mxu0
  %1415 = vmatprep.mubr.f32.mxu0 0.0
  %1416 = vmatmul.mubr.f32.gmra.mxu0 %v863
  %v1417 = vpop.f32.mrf.mxu0
  %v1418 = vadd.f32 0.0, %v1417
  %v1419 = vpop.f32.mrf.mxu0
  %1420 = vmatprep.mubr.f32.mxu0 0.0
  %1421 = vmatmul.mubr.f32.gmra.mxu0 %v866
  %v1422 = vpop.f32.mrf.mxu0
  %v1423 = vadd.f32 0.0, %v1422
  %v1424 = vpop.f32.mrf.mxu0
  %1425 = vmatprep.mubr.f32.mxu0 0.0
  %1426 = vmatmul.mubr.f32.gmra.mxu0 %v869
  %v1427 = vpop.f32.mrf.mxu0
  %v1428 = vadd.f32 0.0, %v1427
  %v1429 = vpop.f32.mrf.mxu0
  %1430 = vmatprep.mubr.f32.mxu0 0.0
  %1431 = vmatmul.mubr.f32.gmra.mxu0 %v872
  %v1432 = vpop.f32.mrf.mxu0
  %v1433 = vadd.f32 0.0, %v1432
  %v1434 = vpop.f32.mrf.mxu0
  %1435 = vmatprep.mubr.f32.mxu0 0.0
  %1436 = vmatmul.mubr.f32.gmra.mxu0 %v1256
  %v1437 = vpop.f32.mrf.mxu0
  %v1438 = vadd.f32 0.0, %v1437
  %v1439 = vpop.f32.mrf.mxu0
  %1440 = vmatprep.mubr.f32.mxu0 0.0
  %1441 = vmatmul.mubr.f32.gmra.mxu0 %v1259
  %v1442 = vpop.f32.mrf.mxu0
  %v1443 = vadd.f32 0.0, %v1442
  %v1444 = vpop.f32.mrf.mxu0
  %1445 = vdwg.mxu0
  %v1446 = vadd.f32 %v1132, %v1328
  %v1447 = vadd.f32 %v1137, %v1333
  %v1448 = vadd.f32 %v1142, %v1338
  %v1449 = vadd.f32 %v1147, %v1343
  %v1450 = vadd.f32 %v1152, %v1348
  %v1451 = vadd.f32 %v1157, %v1353
  %v1452 = vadd.f32 %v1162, %v1358
  %v1453 = vadd.f32 %v1167, %v1363
  %v1454 = vadd.f32 %v1172, %v1368
  %v1455 = vadd.f32 %v1177, %v1373
  %v1456 = vadd.f32 %v1182, %v1378
  %v1457 = vadd.f32 %v1187, %v1383
  %v1458 = vadd.f32 %v1192, %v1388
  %v1459 = vadd.f32 %v1197, %v1393
  %v1460 = vadd.f32 %v1202, %v1398
  %v1461 = vadd.f32 %v1207, %v1403
  %v1462 = vadd.f32 %v1212, %v1408
  %v1463 = vadd.f32 %v1217, %v1413
  %v1464 = vadd.f32 %v1222, %v1418
  %v1465 = vadd.f32 %v1227, %v1423
  %v1466 = vadd.f32 %v1232, %v1428
  %v1467 = vadd.f32 %v1237, %v1433
  %v1468 = vadd.f32 %v1242, %v1438
  %v1469 = vadd.f32 %v1247, %v1443
  %s1470 = scalar_lea.vmem %s3, 96
  %v1471 = vld [vmem:[%s1470] sm:$0xff]
  %v1472 = vld [vmem:[%s1470 + $0x8] sm:$0xff]
  %v1473 = vld [vmem:[%s1470 + $0x10] sm:$0xff]
  %v1474 = vld [vmem:[%s1470 + $0x18] sm:$0xff]
  %v1476 = vsel %vm801, %v790, 0
  %v1479 = vsel %vm801, %v791, 0
  %1481 = vmatprep.subr.mxu0 0.0
  %1482 = vmatpush1.msra.mxu0 0.0
  %1483 = vmatprep.subr.mxu0 0.0
  %1484 = vmatpush1.msra.mxu0 0.0
  %1485 = vmatprep.subr.mxu0 0.0
  %1486 = vmatpush1.msra.mxu0 0.0
  %1487 = vmatprep.subr.mxu0 0.0
  %1488 = vmatpush1.msra.mxu0 0.0
  %1489 = vmatprep.subr.mxu0 0.0
  %1490 = vmatpush1.msra.mxu0 0.0
  %1491 = vmatprep.subr.mxu0 0.0
  %1492 = vmatpush1.msra.mxu0 0.0
  %1493 = vmatprep.subr.mxu0 0.0
  %1494 = vmatpush1.msra.mxu0 0.0
  %1495 = vmatprep.subr.mxu0 0.0
  %1496 = vmatpush1.msra.mxu0 0.0
  %1497 = vmatprep.subr.mxu0 0.0
  %1498 = vmatpush1.msra.mxu0 0.0
  %1499 = vmatprep.subr.mxu0 0.0
  %1500 = vmatpush1.msra.mxu0 0.0
  %1501 = vmatprep.subr.mxu0 0.0
  %1502 = vmatpush1.msra.mxu0 0.0
  %1503 = vmatprep.subr.mxu0 0.0
  %1504 = vmatpush1.msra.mxu0 0.0
  %1505 = vmatprep.subr.mxu0 0.0
  %1506 = vmatpush1.msra.mxu0 %v1474
  %1507 = vmatprep.subr.mxu0 0.0
  %1508 = vmatpush1.msra.mxu0 %v1473
  %1509 = vmatprep.subr.mxu0 0.0
  %1510 = vmatpush1.msra.mxu0 %v1472
  %1511 = vmatprep.subr.mxu0 0.0
  %1512 = vmatpush1.msra.mxu0 %v1471
  %1513 = vmatprep.subr.mxu0 0.0
  %1514 = vmatpush2.msra.mxu0 0.0
  %1515 = vmatprep.subr.mxu0 0.0
  %1516 = vmatpush2.msra.mxu0 0.0
  %1517 = vmatprep.subr.mxu0 0.0
  %1518 = vmatpush2.msra.mxu0 0.0
  %1519 = vmatprep.subr.mxu0 0.0
  %1520 = vmatpush2.msra.mxu0 0.0
  %1521 = vmatprep.subr.mxu0 0.0
  %1522 = vmatpush2.msra.mxu0 0.0
  %1523 = vmatprep.subr.mxu0 0.0
  %1524 = vmatpush2.msra.mxu0 0.0
  %1525 = vmatprep.subr.mxu0 0.0
  %1526 = vmatpush2.msra.mxu0 0.0
  %1527 = vmatprep.subr.mxu0 0.0
  %1528 = vmatpush2.msra.mxu0 0.0
  %1529 = vmatprep.subr.mxu0 0.0
  %1530 = vmatpush2.msra.mxu0 0.0
  %1531 = vmatprep.subr.mxu0 0.0
  %1532 = vmatpush2.msra.mxu0 0.0
  %1533 = vmatprep.subr.mxu0 0.0
  %1534 = vmatpush2.msra.mxu0 0.0
  %1535 = vmatprep.subr.mxu0 0.0
  %1536 = vmatpush2.msra.mxu0 0.0
  %1537 = vmatprep.subr.mxu0 0.0
  %1538 = vmatpush2.msra.mxu0 0.0
  %1539 = vmatprep.subr.mxu0 0.0
  %1540 = vmatpush2.msra.mxu0 0.0
  %1541 = vmatprep.subr.mxu0 0.0
  %1542 = vmatpush2.msra.mxu0 0.0
  %1543 = vmatprep.subr.mxu0 0.0
  %1544 = vmatpush2.msra.mxu0 0.0
  %1545 = vmatprep.mubr.f32.mxu0 0.0
  %1546 = vmatmul.mubr.f32.gmra.mxu0 %v815
  %v1547 = vpop.f32.mrf.mxu0
  %v1548 = vadd.f32 0.0, %v1547
  %v1549 = vpop.f32.mrf.mxu0
  %1550 = vmatprep.mubr.f32.mxu0 0.0
  %1551 = vmatmul.mubr.f32.gmra.mxu0 %v818
  %v1552 = vpop.f32.mrf.mxu0
  %v1553 = vadd.f32 0.0, %v1552
  %v1554 = vpop.f32.mrf.mxu0
  %1555 = vmatprep.mubr.f32.mxu0 0.0
  %1556 = vmatmul.mubr.f32.gmra.mxu0 %v821
  %v1557 = vpop.f32.mrf.mxu0
  %v1558 = vadd.f32 0.0, %v1557
  %v1559 = vpop.f32.mrf.mxu0
  %1560 = vmatprep.mubr.f32.mxu0 0.0
  %1561 = vmatmul.mubr.f32.gmra.mxu0 %v824
  %v1562 = vpop.f32.mrf.mxu0
  %v1563 = vadd.f32 0.0, %v1562
  %v1564 = vpop.f32.mrf.mxu0
  %1565 = vmatprep.mubr.f32.mxu0 0.0
  %1566 = vmatmul.mubr.f32.gmra.mxu0 %v827
  %v1567 = vpop.f32.mrf.mxu0
  %v1568 = vadd.f32 0.0, %v1567
  %v1569 = vpop.f32.mrf.mxu0
  %1570 = vmatprep.mubr.f32.mxu0 0.0
  %1571 = vmatmul.mubr.f32.gmra.mxu0 %v830
  %v1572 = vpop.f32.mrf.mxu0
  %v1573 = vadd.f32 0.0, %v1572
  %v1574 = vpop.f32.mrf.mxu0
  %1575 = vmatprep.mubr.f32.mxu0 0.0
  %1576 = vmatmul.mubr.f32.gmra.mxu0 %v833
  %v1577 = vpop.f32.mrf.mxu0
  %v1578 = vadd.f32 0.0, %v1577
  %v1579 = vpop.f32.mrf.mxu0
  %1580 = vmatprep.mubr.f32.mxu0 0.0
  %1581 = vmatmul.mubr.f32.gmra.mxu0 %v836
  %v1582 = vpop.f32.mrf.mxu0
  %v1583 = vadd.f32 0.0, %v1582
  %v1584 = vpop.f32.mrf.mxu0
  %1585 = vmatprep.mubr.f32.mxu0 0.0
  %1586 = vmatmul.mubr.f32.gmra.mxu0 %v839
  %v1587 = vpop.f32.mrf.mxu0
  %v1588 = vadd.f32 0.0, %v1587
  %v1589 = vpop.f32.mrf.mxu0
  %1590 = vmatprep.mubr.f32.mxu0 0.0
  %1591 = vmatmul.mubr.f32.gmra.mxu0 %v842
  %v1592 = vpop.f32.mrf.mxu0
  %v1593 = vadd.f32 0.0, %v1592
  %v1594 = vpop.f32.mrf.mxu0
  %1595 = vmatprep.mubr.f32.mxu0 0.0
  %1596 = vmatmul.mubr.f32.gmra.mxu0 %v845
  %v1597 = vpop.f32.mrf.mxu0
  %v1598 = vadd.f32 0.0, %v1597
  %v1599 = vpop.f32.mrf.mxu0
  %1600 = vmatprep.mubr.f32.mxu0 0.0
  %1601 = vmatmul.mubr.f32.gmra.mxu0 %v848
  %v1602 = vpop.f32.mrf.mxu0
  %v1603 = vadd.f32 0.0, %v1602
  %v1604 = vpop.f32.mrf.mxu0
  %1605 = vmatprep.mubr.f32.mxu0 0.0
  %1606 = vmatmul.mubr.f32.gmra.mxu0 %v851
  %v1607 = vpop.f32.mrf.mxu0
  %v1608 = vadd.f32 0.0, %v1607
  %v1609 = vpop.f32.mrf.mxu0
  %1610 = vmatprep.mubr.f32.mxu0 0.0
  %1611 = vmatmul.mubr.f32.gmra.mxu0 %v854
  %v1612 = vpop.f32.mrf.mxu0
  %v1613 = vadd.f32 0.0, %v1612
  %v1614 = vpop.f32.mrf.mxu0
  %1615 = vmatprep.mubr.f32.mxu0 0.0
  %1616 = vmatmul.mubr.f32.gmra.mxu0 %v857
  %v1617 = vpop.f32.mrf.mxu0
  %v1618 = vadd.f32 0.0, %v1617
  %v1619 = vpop.f32.mrf.mxu0
  %1620 = vmatprep.mubr.f32.mxu0 0.0
  %1621 = vmatmul.mubr.f32.gmra.mxu0 %v860
  %v1622 = vpop.f32.mrf.mxu0
  %v1623 = vadd.f32 0.0, %v1622
  %v1624 = vpop.f32.mrf.mxu0
  %1625 = vmatprep.mubr.f32.mxu0 0.0
  %1626 = vmatmul.mubr.f32.gmra.mxu0 %v863
  %v1627 = vpop.f32.mrf.mxu0
  %v1628 = vadd.f32 0.0, %v1627
  %v1629 = vpop.f32.mrf.mxu0
  %1630 = vmatprep.mubr.f32.mxu0 0.0
  %1631 = vmatmul.mubr.f32.gmra.mxu0 %v866
  %v1632 = vpop.f32.mrf.mxu0
  %v1633 = vadd.f32 0.0, %v1632
  %v1634 = vpop.f32.mrf.mxu0
  %1635 = vmatprep.mubr.f32.mxu0 0.0
  %1636 = vmatmul.mubr.f32.gmra.mxu0 %v869
  %v1637 = vpop.f32.mrf.mxu0
  %v1638 = vadd.f32 0.0, %v1637
  %v1639 = vpop.f32.mrf.mxu0
  %1640 = vmatprep.mubr.f32.mxu0 0.0
  %1641 = vmatmul.mubr.f32.gmra.mxu0 %v872
  %v1642 = vpop.f32.mrf.mxu0
  %v1643 = vadd.f32 0.0, %v1642
  %v1644 = vpop.f32.mrf.mxu0
  %1645 = vmatprep.mubr.f32.mxu0 0.0
  %1646 = vmatmul.mubr.f32.gmra.mxu0 %v1256
  %v1647 = vpop.f32.mrf.mxu0
  %v1648 = vadd.f32 0.0, %v1647
  %v1649 = vpop.f32.mrf.mxu0
  %1650 = vmatprep.mubr.f32.mxu0 0.0
  %1651 = vmatmul.mubr.f32.gmra.mxu0 %v1259
  %v1652 = vpop.f32.mrf.mxu0
  %v1653 = vadd.f32 0.0, %v1652
  %v1654 = vpop.f32.mrf.mxu0
  %1655 = vmatprep.mubr.f32.mxu0 0.0
  %1656 = vmatmul.mubr.f32.gmra.mxu0 %v1476
  %v1657 = vpop.f32.mrf.mxu0
  %v1658 = vadd.f32 0.0, %v1657
  %v1659 = vpop.f32.mrf.mxu0
  %1660 = vmatprep.mubr.f32.mxu0 0.0
  %1661 = vmatmul.mubr.f32.gmra.mxu0 %v1479
  %v1662 = vpop.f32.mrf.mxu0
  %v1663 = vadd.f32 0.0, %v1662
  %v1664 = vpop.f32.mrf.mxu0
  %1665 = vdwg.mxu0
  %v1666 = vadd.f32 %v1446, %v1548
  %v1667 = vadd.f32 %v1447, %v1553
  %v1668 = vadd.f32 %v1448, %v1558
  %v1669 = vadd.f32 %v1449, %v1563
  %v1670 = vadd.f32 %v1450, %v1568
  %v1671 = vadd.f32 %v1451, %v1573
  %v1672 = vadd.f32 %v1452, %v1578
  %v1673 = vadd.f32 %v1453, %v1583
  %v1674 = vadd.f32 %v1454, %v1588
  %v1675 = vadd.f32 %v1455, %v1593
  %v1676 = vadd.f32 %v1456, %v1598
  %v1677 = vadd.f32 %v1457, %v1603
  %v1678 = vadd.f32 %v1458, %v1608
  %v1679 = vadd.f32 %v1459, %v1613
  %v1680 = vadd.f32 %v1460, %v1618
  %v1681 = vadd.f32 %v1461, %v1623
  %v1682 = vadd.f32 %v1462, %v1628
  %v1683 = vadd.f32 %v1463, %v1633
  %v1684 = vadd.f32 %v1464, %v1638
  %v1685 = vadd.f32 %v1465, %v1643
  %v1686 = vadd.f32 %v1466, %v1648
  %v1687 = vadd.f32 %v1467, %v1653
  %v1688 = vadd.f32 %v1468, %v1658
  %v1689 = vadd.f32 %v1469, %v1663
  %v1690 = vld [vmem:[%s4] sm:$0x1]
  %v1692 = vlaneseq
  %v1693 = vshrl.u32 %v1692, 7
  %v1694 = vsub.s32 0, %v1693
  %v1695 = vrot.slane %v1690, %v1694
  %v1697 = vadd.f32 %v1666, %v1695
  %v1698 = vadd.f32 %v1667, %v1695
  %v1699 = vadd.f32 %v1668, %v1695
  %v1700 = vadd.f32 %v1669, %v1695
  %v1701 = vadd.f32 %v1670, %v1695
  %v1702 = vadd.f32 %v1671, %v1695
  %v1703 = vadd.f32 %v1672, %v1695
  %v1704 = vadd.f32 %v1673, %v1695
  %v1705 = vadd.f32 %v1674, %v1695
  %v1706 = vadd.f32 %v1675, %v1695
  %v1707 = vadd.f32 %v1676, %v1695
  %v1708 = vadd.f32 %v1677, %v1695
  %v1709 = vadd.f32 %v1678, %v1695
  %v1710 = vadd.f32 %v1679, %v1695
  %v1711 = vadd.f32 %v1680, %v1695
  %v1712 = vadd.f32 %v1681, %v1695
  %v1713 = vadd.f32 %v1682, %v1695
  %v1714 = vadd.f32 %v1683, %v1695
  %v1715 = vadd.f32 %v1684, %v1695
  %v1716 = vadd.f32 %v1685, %v1695
  %v1717 = vadd.f32 %v1686, %v1695
  %v1718 = vadd.f32 %v1687, %v1695
  %v1719 = vadd.f32 %v1688, %v1695
  %v1720 = vadd.f32 %v1689, %v1695
  %v1721 = vmax.f32 %v1697, 0.0
  %v1722 = vmax.f32 %v1698, 0.0
  %v1723 = vmax.f32 %v1699, 0.0
  %v1724 = vmax.f32 %v1700, 0.0
  %v1725 = vmax.f32 %v1701, 0.0
  %v1726 = vmax.f32 %v1702, 0.0
  %v1727 = vmax.f32 %v1703, 0.0
  %v1728 = vmax.f32 %v1704, 0.0
  %v1729 = vmax.f32 %v1705, 0.0
  %v1730 = vmax.f32 %v1706, 0.0
  %v1731 = vmax.f32 %v1707, 0.0
  %v1732 = vmax.f32 %v1708, 0.0
  %v1733 = vmax.f32 %v1709, 0.0
  %v1734 = vmax.f32 %v1710, 0.0
  %v1735 = vmax.f32 %v1711, 0.0
  %v1736 = vmax.f32 %v1712, 0.0
  %v1737 = vmax.f32 %v1713, 0.0
  %v1738 = vmax.f32 %v1714, 0.0
  %v1739 = vmax.f32 %v1715, 0.0
  %v1740 = vmax.f32 %v1716, 0.0
  %v1741 = vmax.f32 %v1717, 0.0
  %v1742 = vmax.f32 %v1718, 0.0
  %v1743 = vmax.f32 %v1719, 0.0
  %v1744 = vmax.f32 %v1720, 0.0
  %v1745 = vld [vmem:[%s5] sm:$0xff]
  %v1746 = vld [vmem:[%s5 + $0x8] sm:$0xff]
  %v1747 = vld [vmem:[%s5 + $0x10] sm:$0xff]
  %v1748 = vld [vmem:[%s5 + $0x18] sm:$0xff]
  %v1749 = vld [vmem:[%s5 + $0x20] sm:$0xff]
  %v1750 = vld [vmem:[%s5 + $0x28] sm:$0xff]
  %v1751 = vld [vmem:[%s5 + $0x30] sm:$0x3]
  %s1752 = scalar_lea.vmem %s5, 56
  %v1753 = vld [vmem:[%s1752] sm:$0xff]
  %v1754 = vld [vmem:[%s1752 + $0x8] sm:$0xff]
  %v1755 = vld [vmem:[%s1752 + $0x10] sm:$0xff]
  %v1756 = vld [vmem:[%s1752 + $0x18] sm:$0xff]
  %v1757 = vld [vmem:[%s1752 + $0x20] sm:$0xff]
  %v1758 = vld [vmem:[%s1752 + $0x28] sm:$0xff]
  %v1759 = vld [vmem:[%s1752 + $0x30] sm:$0x3]
  %vm1760 = vcmask 408576
  %v1762 = vsel %vm1760, %v1723, 0
  %v1765 = vsel %vm1760, %v1724, 0
  %vm1767 = vcmask 1041408
  %v1769 = vsel %vm1767, %v1759, 0
  %1771 = vmatprep.subr.mxu0 0.0
  %1772 = vmatpush1.msra.mxu0 0.0
  %1773 = vmatprep.subr.mxu0 0.0
  %1774 = vmatpush1.msra.mxu0 0.0
  %1775 = vmatprep.subr.mxu0 0.0
  %1776 = vmatpush1.msra.mxu0 0.0
  %1777 = vmatprep.subr.mxu0 0.0
  %1778 = vmatpush1.msra.mxu0 0.0
  %1779 = vmatprep.subr.mxu0 0.0
  %1780 = vmatpush1.msra.mxu0 0.0
  %1781 = vmatprep.subr.mxu0 0.0
  %1782 = vmatpush1.msra.mxu0 0.0
  %1783 = vmatprep.subr.mxu0 0.0
  %1784 = vmatpush1.msra.mxu0 0.0
  %1785 = vmatprep.subr.mxu0 0.0
  %1786 = vmatpush1.msra.mxu0 0.0
  %1787 = vmatprep.subr.mxu0 0.0
  %1788 = vmatpush1.msra.mxu0 0.0
  %1789 = vmatprep.subr.mxu0 0.0
  %1790 = vmatpush1.msra.mxu0 %v1769
  %1791 = vmatprep.subr.mxu0 0.0
  %1792 = vmatpush1.msra.mxu0 %v1758
  %1793 = vmatprep.subr.mxu0 0.0
  %1794 = vmatpush1.msra.mxu0 %v1757
  %1795 = vmatprep.subr.mxu0 0.0
  %1796 = vmatpush1.msra.mxu0 %v1756
  %1797 = vmatprep.subr.mxu0 0.0
  %1798 = vmatpush1.msra.mxu0 %v1755
  %1799 = vmatprep.subr.mxu0 0.0
  %1800 = vmatpush1.msra.mxu0 %v1754
  %1801 = vmatprep.subr.mxu0 0.0
  %1802 = vmatpush1.msra.mxu0 %v1753
  %1803 = vmatprep.subr.mxu0 0.0
  %1804 = vmatpush2.msra.mxu0 0.0
  %1805 = vmatprep.subr.mxu0 0.0
  %1806 = vmatpush2.msra.mxu0 0.0
  %1807 = vmatprep.subr.mxu0 0.0
  %1808 = vmatpush2.msra.mxu0 0.0
  %1809 = vmatprep.subr.mxu0 0.0
  %1810 = vmatpush2.msra.mxu0 0.0
  %1811 = vmatprep.subr.mxu0 0.0
  %1812 = vmatpush2.msra.mxu0 0.0
  %1813 = vmatprep.subr.mxu0 0.0
  %1814 = vmatpush2.msra.mxu0 0.0
  %1815 = vmatprep.subr.mxu0 0.0
  %1816 = vmatpush2.msra.mxu0 0.0
  %1817 = vmatprep.subr.mxu0 0.0
  %1818 = vmatpush2.msra.mxu0 0.0
  %1819 = vmatprep.subr.mxu0 0.0
  %1820 = vmatpush2.msra.mxu0 0.0
  %1821 = vmatprep.subr.mxu0 0.0
  %1822 = vmatpush2.msra.mxu0 0.0
  %1823 = vmatprep.subr.mxu0 0.0
  %1824 = vmatpush2.msra.mxu0 0.0
  %1825 = vmatprep.subr.mxu0 0.0
  %1826 = vmatpush2.msra.mxu0 0.0
  %1827 = vmatprep.subr.mxu0 0.0
  %1828 = vmatpush2.msra.mxu0 0.0
  %1829 = vmatprep.subr.mxu0 0.0
  %1830 = vmatpush2.msra.mxu0 0.0
  %1831 = vmatprep.subr.mxu0 0.0
  %1832 = vmatpush2.msra.mxu0 0.0
  %1833 = vmatprep.subr.mxu0 0.0
  %1834 = vmatpush2.msra.mxu0 0.0
  %1835 = vmatprep.mubr.f32.mxu0 0.0
  %1836 = vmatmul.mubr.f32.gmra.mxu0 %v1762
  %v1837 = vpop.f32.mrf.mxu0
  %v1838 = vadd.f32 0.0, %v1837
  %v1839 = vpop.f32.mrf.mxu0
  %1840 = vmatprep.mubr.f32.mxu0 0.0
  %1841 = vmatmul.mubr.f32.gmra.mxu0 %v1765
  %v1842 = vpop.f32.mrf.mxu0
  %v1843 = vadd.f32 0.0, %v1842
  %v1844 = vpop.f32.mrf.mxu0
  %1845 = vdwg.mxu0
  %v1847 = vsel %vm1760, %v1721, 0
  %v1850 = vsel %vm1760, %v1722, 0
  %v1853 = vsel %vm1767, %v1751, 0
  %1855 = vmatprep.subr.mxu0 0.0
  %1856 = vmatpush1.msra.mxu0 0.0
  %1857 = vmatprep.subr.mxu0 0.0
  %1858 = vmatpush1.msra.mxu0 0.0
  %1859 = vmatprep.subr.mxu0 0.0
  %1860 = vmatpush1.msra.mxu0 0.0
  %1861 = vmatprep.subr.mxu0 0.0
  %1862 = vmatpush1.msra.mxu0 0.0
  %1863 = vmatprep.subr.mxu0 0.0
  %1864 = vmatpush1.msra.mxu0 0.0
  %1865 = vmatprep.subr.mxu0 0.0
  %1866 = vmatpush1.msra.mxu0 0.0
  %1867 = vmatprep.subr.mxu0 0.0
  %1868 = vmatpush1.msra.mxu0 0.0
  %1869 = vmatprep.subr.mxu0 0.0
  %1870 = vmatpush1.msra.mxu0 0.0
  %1871 = vmatprep.subr.mxu0 0.0
  %1872 = vmatpush1.msra.mxu0 0.0
  %1873 = vmatprep.subr.mxu0 0.0
  %1874 = vmatpush1.msra.mxu0 %v1853
  %1875 = vmatprep.subr.mxu0 0.0
  %1876 = vmatpush1.msra.mxu0 %v1750
  %1877 = vmatprep.subr.mxu0 0.0
  %1878 = vmatpush1.msra.mxu0 %v1749
  %1879 = vmatprep.subr.mxu0 0.0
  %1880 = vmatpush1.msra.mxu0 %v1748
  %1881 = vmatprep.subr.mxu0 0.0
  %1882 = vmatpush1.msra.mxu0 %v1747
  %1883 = vmatprep.subr.mxu0 0.0
  %1884 = vmatpush1.msra.mxu0 %v1746
  %1885 = vmatprep.subr.mxu0 0.0
  %1886 = vmatpush1.msra.mxu0 %v1745
  %1887 = vmatprep.subr.mxu0 0.0
  %1888 = vmatpush2.msra.mxu0 0.0
  %1889 = vmatprep.subr.mxu0 0.0
  %1890 = vmatpush2.msra.mxu0 0.0
  %1891 = vmatprep.subr.mxu0 0.0
  %1892 = vmatpush2.msra.mxu0 0.0
  %1893 = vmatprep.subr.mxu0 0.0
  %1894 = vmatpush2.msra.mxu0 0.0
  %1895 = vmatprep.subr.mxu0 0.0
  %1896 = vmatpush2.msra.mxu0 0.0
  %1897 = vmatprep.subr.mxu0 0.0
  %1898 = vmatpush2.msra.mxu0 0.0
  %1899 = vmatprep.subr.mxu0 0.0
  %1900 = vmatpush2.msra.mxu0 0.0
  %1901 = vmatprep.subr.mxu0 0.0
  %1902 = vmatpush2.msra.mxu0 0.0
  %1903 = vmatprep.subr.mxu0 0.0
  %1904 = vmatpush2.msra.mxu0 0.0
  %1905 = vmatprep.subr.mxu0 0.0
  %1906 = vmatpush2.msra.mxu0 0.0
  %1907 = vmatprep.subr.mxu0 0.0
  %1908 = vmatpush2.msra.mxu0 0.0
  %1909 = vmatprep.subr.mxu0 0.0
  %1910 = vmatpush2.msra.mxu0 0.0
  %1911 = vmatprep.subr.mxu0 0.0
  %1912 = vmatpush2.msra.mxu0 0.0
  %1913 = vmatprep.subr.mxu0 0.0
  %1914 = vmatpush2.msra.mxu0 0.0
  %1915 = vmatprep.subr.mxu0 0.0
  %1916 = vmatpush2.msra.mxu0 0.0
  %1917 = vmatprep.subr.mxu0 0.0
  %1918 = vmatpush2.msra.mxu0 0.0
  %1919 = vmatprep.mubr.f32.mxu0 0.0
  %1920 = vmatmul.mubr.f32.gmra.mxu0 %v1847
  %v1921 = vpop.f32.mrf.mxu0
  %v1922 = vadd.f32 %v1838, %v1921
  %v1923 = vpop.f32.mrf.mxu0
  %1924 = vmatprep.mubr.f32.mxu0 0.0
  %1925 = vmatmul.mubr.f32.gmra.mxu0 %v1850
  %v1926 = vpop.f32.mrf.mxu0
  %v1927 = vadd.f32 %v1843, %v1926
  %v1928 = vpop.f32.mrf.mxu0
  %1929 = vdwg.mxu0
  %s1930 = scalar_lea.vmem %s5, 112
  %v1931 = vld [vmem:[%s1930] sm:$0xff]
  %v1932 = vld [vmem:[%s1930 + $0x8] sm:$0xff]
  %v1933 = vld [vmem:[%s1930 + $0x10] sm:$0xff]
  %v1934 = vld [vmem:[%s1930 + $0x18] sm:$0xff]
  %v1935 = vld [vmem:[%s1930 + $0x20] sm:$0xff]
  %v1936 = vld [vmem:[%s1930 + $0x28] sm:$0xff]
  %v1937 = vld [vmem:[%s1930 + $0x30] sm:$0x3]
  %v1939 = vsel %vm1760, %v1725, 0
  %v1942 = vsel %vm1760, %v1726, 0
  %v1945 = vsel %vm1767, %v1937, 0
  %1947 = vmatprep.subr.mxu0 0.0
  %1948 = vmatpush1.msra.mxu0 0.0
  %1949 = vmatprep.subr.mxu0 0.0
  %1950 = vmatpush1.msra.mxu0 0.0
  %1951 = vmatprep.subr.mxu0 0.0
  %1952 = vmatpush1.msra.mxu0 0.0
  %1953 = vmatprep.subr.mxu0 0.0
  %1954 = vmatpush1.msra.mxu0 0.0
  %1955 = vmatprep.subr.mxu0 0.0
  %1956 = vmatpush1.msra.mxu0 0.0
  %1957 = vmatprep.subr.mxu0 0.0
  %1958 = vmatpush1.msra.mxu0 0.0
  %1959 = vmatprep.subr.mxu0 0.0
  %1960 = vmatpush1.msra.mxu0 0.0
  %1961 = vmatprep.subr.mxu0 0.0
  %1962 = vmatpush1.msra.mxu0 0.0
  %1963 = vmatprep.subr.mxu0 0.0
  %1964 = vmatpush1.msra.mxu0 0.0
  %1965 = vmatprep.subr.mxu0 0.0
  %1966 = vmatpush1.msra.mxu0 %v1945
  %1967 = vmatprep.subr.mxu0 0.0
  %1968 = vmatpush1.msra.mxu0 %v1936
  %1969 = vmatprep.subr.mxu0 0.0
  %1970 = vmatpush1.msra.mxu0 %v1935
  %1971 = vmatprep.subr.mxu0 0.0
  %1972 = vmatpush1.msra.mxu0 %v1934
  %1973 = vmatprep.subr.mxu0 0.0
  %1974 = vmatpush1.msra.mxu0 %v1933
  %1975 = vmatprep.subr.mxu0 0.0
  %1976 = vmatpush1.msra.mxu0 %v1932
  %1977 = vmatprep.subr.mxu0 0.0
  %1978 = vmatpush1.msra.mxu0 %v1931
  %1979 = vmatprep.subr.mxu0 0.0
  %1980 = vmatpush2.msra.mxu0 0.0
  %1981 = vmatprep.subr.mxu0 0.0
  %1982 = vmatpush2.msra.mxu0 0.0
  %1983 = vmatprep.subr.mxu0 0.0
  %1984 = vmatpush2.msra.mxu0 0.0
  %1985 = vmatprep.subr.mxu0 0.0
  %1986 = vmatpush2.msra.mxu0 0.0
  %1987 = vmatprep.subr.mxu0 0.0
  %1988 = vmatpush2.msra.mxu0 0.0
  %1989 = vmatprep.subr.mxu0 0.0
  %1990 = vmatpush2.msra.mxu0 0.0
  %1991 = vmatprep.subr.mxu0 0.0
  %1992 = vmatpush2.msra.mxu0 0.0
  %1993 = vmatprep.subr.mxu0 0.0
  %1994 = vmatpush2.msra.mxu0 0.0
  %1995 = vmatprep.subr.mxu0 0.0
  %1996 = vmatpush2.msra.mxu0 0.0
  %1997 = vmatprep.subr.mxu0 0.0
  %1998 = vmatpush2.msra.mxu0 0.0
  %1999 = vmatprep.subr.mxu0 0.0
  %2000 = vmatpush2.msra.mxu0 0.0
  %2001 = vmatprep.subr.mxu0 0.0
  %2002 = vmatpush2.msra.mxu0 0.0
  %2003 = vmatprep.subr.mxu0 0.0
  %2004 = vmatpush2.msra.mxu0 0.0
  %2005 = vmatprep.subr.mxu0 0.0
  %2006 = vmatpush2.msra.mxu0 0.0
  %2007 = vmatprep.subr.mxu0 0.0
  %2008 = vmatpush2.msra.mxu0 0.0
  %2009 = vmatprep.subr.mxu0 0.0
  %2010 = vmatpush2.msra.mxu0 0.0
  %2011 = vmatprep.mubr.f32.mxu0 0.0
  %2012 = vmatmul.mubr.f32.gmra.mxu0 %v1939
  %v2013 = vpop.f32.mrf.mxu0
  %v2014 = vadd.f32 0.0, %v2013
  %v2015 = vpop.f32.mrf.mxu0
  %2016 = vmatprep.mubr.f32.mxu0 0.0
  %2017 = vmatmul.mubr.f32.gmra.mxu0 %v1942
  %v2018 = vpop.f32.mrf.mxu0
  %v2019 = vadd.f32 0.0, %v2018
  %v2020 = vpop.f32.mrf.mxu0
  %2021 = vdwg.mxu0
  %v2022 = vadd.f32 %v1922, %v2014
  %v2023 = vadd.f32 %v1927, %v2019
  %s2024 = scalar_lea.vmem %s5, 168
  %v2025 = vld [vmem:[%s2024] sm:$0xff]
  %v2026 = vld [vmem:[%s2024 + $0x8] sm:$0xff]
  %v2027 = vld [vmem:[%s2024 + $0x10] sm:$0xff]
  %v2028 = vld [vmem:[%s2024 + $0x18] sm:$0xff]
  %v2029 = vld [vmem:[%s2024 + $0x20] sm:$0xff]
  %v2030 = vld [vmem:[%s2024 + $0x28] sm:$0xff]
  %v2031 = vld [vmem:[%s2024 + $0x30] sm:$0x3]
  %v2033 = vsel %vm1760, %v1727, 0
  %v2036 = vsel %vm1760, %v1728, 0
  %v2039 = vsel %vm1767, %v2031, 0
  %2041 = vmatprep.subr.mxu0 0.0
  %2042 = vmatpush1.msra.mxu0 0.0
  %2043 = vmatprep.subr.mxu0 0.0
  %2044 = vmatpush1.msra.mxu0 0.0
  %2045 = vmatprep.subr.mxu0 0.0
  %2046 = vmatpush1.msra.mxu0 0.0
  %2047 = vmatprep.subr.mxu0 0.0
  %2048 = vmatpush1.msra.mxu0 0.0
  %2049 = vmatprep.subr.mxu0 0.0
  %2050 = vmatpush1.msra.mxu0 0.0
  %2051 = vmatprep.subr.mxu0 0.0
  %2052 = vmatpush1.msra.mxu0 0.0
  %2053 = vmatprep.subr.mxu0 0.0
  %2054 = vmatpush1.msra.mxu0 0.0
  %2055 = vmatprep.subr.mxu0 0.0
  %2056 = vmatpush1.msra.mxu0 0.0
  %2057 = vmatprep.subr.mxu0 0.0
  %2058 = vmatpush1.msra.mxu0 0.0
  %2059 = vmatprep.subr.mxu0 0.0
  %2060 = vmatpush1.msra.mxu0 %v2039
  %2061 = vmatprep.subr.mxu0 0.0
  %2062 = vmatpush1.msra.mxu0 %v2030
  %2063 = vmatprep.subr.mxu0 0.0
  %2064 = vmatpush1.msra.mxu0 %v2029
  %2065 = vmatprep.subr.mxu0 0.0
  %2066 = vmatpush1.msra.mxu0 %v2028
  %2067 = vmatprep.subr.mxu0 0.0
  %2068 = vmatpush1.msra.mxu0 %v2027
  %2069 = vmatprep.subr.mxu0 0.0
  %2070 = vmatpush1.msra.mxu0 %v2026
  %2071 = vmatprep.subr.mxu0 0.0
  %2072 = vmatpush1.msra.mxu0 %v2025
  %2073 = vmatprep.subr.mxu0 0.0
  %2074 = vmatpush2.msra.mxu0 0.0
  %2075 = vmatprep.subr.mxu0 0.0
  %2076 = vmatpush2.msra.mxu0 0.0
  %2077 = vmatprep.subr.mxu0 0.0
  %2078 = vmatpush2.msra.mxu0 0.0
  %2079 = vmatprep.subr.mxu0 0.0
  %2080 = vmatpush2.msra.mxu0 0.0
  %2081 = vmatprep.subr.mxu0 0.0
  %2082 = vmatpush2.msra.mxu0 0.0
  %2083 = vmatprep.subr.mxu0 0.0
  %2084 = vmatpush2.msra.mxu0 0.0
  %2085 = vmatprep.subr.mxu0 0.0
  %2086 = vmatpush2.msra.mxu0 0.0
  %2087 = vmatprep.subr.mxu0 0.0
  %2088 = vmatpush2.msra.mxu0 0.0
  %2089 = vmatprep.subr.mxu0 0.0
  %2090 = vmatpush2.msra.mxu0 0.0
  %2091 = vmatprep.subr.mxu0 0.0
  %2092 = vmatpush2.msra.mxu0 0.0
  %2093 = vmatprep.subr.mxu0 0.0
  %2094 = vmatpush2.msra.mxu0 0.0
  %2095 = vmatprep.subr.mxu0 0.0
  %2096 = vmatpush2.msra.mxu0 0.0
  %2097 = vmatprep.subr.mxu0 0.0
  %2098 = vmatpush2.msra.mxu0 0.0
  %2099 = vmatprep.subr.mxu0 0.0
  %2100 = vmatpush2.msra.mxu0 0.0
  %2101 = vmatprep.subr.mxu0 0.0
  %2102 = vmatpush2.msra.mxu0 0.0
  %2103 = vmatprep.subr.mxu0 0.0
  %2104 = vmatpush2.msra.mxu0 0.0
  %2105 = vmatprep.mubr.f32.mxu0 0.0
  %2106 = vmatmul.mubr.f32.gmra.mxu0 %v2033
  %v2107 = vpop.f32.mrf.mxu0
  %v2108 = vadd.f32 0.0, %v2107
  %v2109 = vpop.f32.mrf.mxu0
  %2110 = vmatprep.mubr.f32.mxu0 0.0
  %2111 = vmatmul.mubr.f32.gmra.mxu0 %v2036
  %v2112 = vpop.f32.mrf.mxu0
  %v2113 = vadd.f32 0.0, %v2112
  %v2114 = vpop.f32.mrf.mxu0
  %2115 = vdwg.mxu0
  %v2116 = vadd.f32 %v2022, %v2108
  %v2117 = vadd.f32 %v2023, %v2113
  %s2118 = scalar_lea.vmem %s5, 224
  %v2119 = vld [vmem:[%s2118] sm:$0xff]
  %v2120 = vld [vmem:[%s2118 + $0x8] sm:$0xff]
  %v2121 = vld [vmem:[%s2118 + $0x10] sm:$0xff]
  %v2122 = vld [vmem:[%s2118 + $0x18] sm:$0xff]
  %v2123 = vld [vmem:[%s2118 + $0x20] sm:$0xff]
  %v2124 = vld [vmem:[%s2118 + $0x28] sm:$0xff]
  %v2125 = vld [vmem:[%s2118 + $0x30] sm:$0x3]
  %v2127 = vsel %vm1760, %v1729, 0
  %v2130 = vsel %vm1760, %v1730, 0
  %v2133 = vsel %vm1767, %v2125, 0
  %2135 = vmatprep.subr.mxu0 0.0
  %2136 = vmatpush1.msra.mxu0 0.0
  %2137 = vmatprep.subr.mxu0 0.0
  %2138 = vmatpush1.msra.mxu0 0.0
  %2139 = vmatprep.subr.mxu0 0.0
  %2140 = vmatpush1.msra.mxu0 0.0
  %2141 = vmatprep.subr.mxu0 0.0
  %2142 = vmatpush1.msra.mxu0 0.0
  %2143 = vmatprep.subr.mxu0 0.0
  %2144 = vmatpush1.msra.mxu0 0.0
  %2145 = vmatprep.subr.mxu0 0.0
  %2146 = vmatpush1.msra.mxu0 0.0
  %2147 = vmatprep.subr.mxu0 0.0
  %2148 = vmatpush1.msra.mxu0 0.0
  %2149 = vmatprep.subr.mxu0 0.0
  %2150 = vmatpush1.msra.mxu0 0.0
  %2151 = vmatprep.subr.mxu0 0.0
  %2152 = vmatpush1.msra.mxu0 0.0
  %2153 = vmatprep.subr.mxu0 0.0
  %2154 = vmatpush1.msra.mxu0 %v2133
  %2155 = vmatprep.subr.mxu0 0.0
  %2156 = vmatpush1.msra.mxu0 %v2124
  %2157 = vmatprep.subr.mxu0 0.0
  %2158 = vmatpush1.msra.mxu0 %v2123
  %2159 = vmatprep.subr.mxu0 0.0
  %2160 = vmatpush1.msra.mxu0 %v2122
  %2161 = vmatprep.subr.mxu0 0.0
  %2162 = vmatpush1.msra.mxu0 %v2121
  %2163 = vmatprep.subr.mxu0 0.0
  %2164 = vmatpush1.msra.mxu0 %v2120
  %2165 = vmatprep.subr.mxu0 0.0
  %2166 = vmatpush1.msra.mxu0 %v2119
  %2167 = vmatprep.subr.mxu0 0.0
  %2168 = vmatpush2.msra.mxu0 0.0
  %2169 = vmatprep.subr.mxu0 0.0
  %2170 = vmatpush2.msra.mxu0 0.0
  %2171 = vmatprep.subr.mxu0 0.0
  %2172 = vmatpush2.msra.mxu0 0.0
  %2173 = vmatprep.subr.mxu0 0.0
  %2174 = vmatpush2.msra.mxu0 0.0
  %2175 = vmatprep.subr.mxu0 0.0
  %2176 = vmatpush2.msra.mxu0 0.0
  %2177 = vmatprep.subr.mxu0 0.0
  %2178 = vmatpush2.msra.mxu0 0.0
  %2179 = vmatprep.subr.mxu0 0.0
  %2180 = vmatpush2.msra.mxu0 0.0
  %2181 = vmatprep.subr.mxu0 0.0
  %2182 = vmatpush2.msra.mxu0 0.0
  %2183 = vmatprep.subr.mxu0 0.0
  %2184 = vmatpush2.msra.mxu0 0.0
  %2185 = vmatprep.subr.mxu0 0.0
  %2186 = vmatpush2.msra.mxu0 0.0
  %2187 = vmatprep.subr.mxu0 0.0
  %2188 = vmatpush2.msra.mxu0 0.0
  %2189 = vmatprep.subr.mxu0 0.0
  %2190 = vmatpush2.msra.mxu0 0.0
  %2191 = vmatprep.subr.mxu0 0.0
  %2192 = vmatpush2.msra.mxu0 0.0
  %2193 = vmatprep.subr.mxu0 0.0
  %2194 = vmatpush2.msra.mxu0 0.0
  %2195 = vmatprep.subr.mxu0 0.0
  %2196 = vmatpush2.msra.mxu0 0.0
  %2197 = vmatprep.subr.mxu0 0.0
  %2198 = vmatpush2.msra.mxu0 0.0
  %2199 = vmatprep.mubr.f32.mxu0 0.0
  %2200 = vmatmul.mubr.f32.gmra.mxu0 %v2127
  %v2201 = vpop.f32.mrf.mxu0
  %v2202 = vadd.f32 0.0, %v2201
  %v2203 = vpop.f32.mrf.mxu0
  %2204 = vmatprep.mubr.f32.mxu0 0.0
  %2205 = vmatmul.mubr.f32.gmra.mxu0 %v2130
  %v2206 = vpop.f32.mrf.mxu0
  %v2207 = vadd.f32 0.0, %v2206
  %v2208 = vpop.f32.mrf.mxu0
  %2209 = vdwg.mxu0
  %v2210 = vadd.f32 %v2116, %v2202
  %v2211 = vadd.f32 %v2117, %v2207
  %s2212 = scalar_lea.vmem %s5, 280
  %v2213 = vld [vmem:[%s2212] sm:$0xff]
  %v2214 = vld [vmem:[%s2212 + $0x8] sm:$0xff]
  %v2215 = vld [vmem:[%s2212 + $0x10] sm:$0xff]
  %v2216 = vld [vmem:[%s2212 + $0x18] sm:$0xff]
  %v2217 = vld [vmem:[%s2212 + $0x20] sm:$0xff]
  %v2218 = vld [vmem:[%s2212 + $0x28] sm:$0xff]
  %v2219 = vld [vmem:[%s2212 + $0x30] sm:$0x3]
  %v2221 = vsel %vm1760, %v1731, 0
  %v2224 = vsel %vm1760, %v1732, 0
  %v2227 = vsel %vm1767, %v2219, 0
  %2229 = vmatprep.subr.mxu0 0.0
  %2230 = vmatpush1.msra.mxu0 0.0
  %2231 = vmatprep.subr.mxu0 0.0
  %2232 = vmatpush1.msra.mxu0 0.0
  %2233 = vmatprep.subr.mxu0 0.0
  %2234 = vmatpush1.msra.mxu0 0.0
  %2235 = vmatprep.subr.mxu0 0.0
  %2236 = vmatpush1.msra.mxu0 0.0
  %2237 = vmatprep.subr.mxu0 0.0
  %2238 = vmatpush1.msra.mxu0 0.0
  %2239 = vmatprep.subr.mxu0 0.0
  %2240 = vmatpush1.msra.mxu0 0.0
  %2241 = vmatprep.subr.mxu0 0.0
  %2242 = vmatpush1.msra.mxu0 0.0
  %2243 = vmatprep.subr.mxu0 0.0
  %2244 = vmatpush1.msra.mxu0 0.0
  %2245 = vmatprep.subr.mxu0 0.0
  %2246 = vmatpush1.msra.mxu0 0.0
  %2247 = vmatprep.subr.mxu0 0.0
  %2248 = vmatpush1.msra.mxu0 %v2227
  %2249 = vmatprep.subr.mxu0 0.0
  %2250 = vmatpush1.msra.mxu0 %v2218
  %2251 = vmatprep.subr.mxu0 0.0
  %2252 = vmatpush1.msra.mxu0 %v2217
  %2253 = vmatprep.subr.mxu0 0.0
  %2254 = vmatpush1.msra.mxu0 %v2216
  %2255 = vmatprep.subr.mxu0 0.0
  %2256 = vmatpush1.msra.mxu0 %v2215
  %2257 = vmatprep.subr.mxu0 0.0
  %2258 = vmatpush1.msra.mxu0 %v2214
  %2259 = vmatprep.subr.mxu0 0.0
  %2260 = vmatpush1.msra.mxu0 %v2213
  %2261 = vmatprep.subr.mxu0 0.0
  %2262 = vmatpush2.msra.mxu0 0.0
  %2263 = vmatprep.subr.mxu0 0.0
  %2264 = vmatpush2.msra.mxu0 0.0
  %2265 = vmatprep.subr.mxu0 0.0
  %2266 = vmatpush2.msra.mxu0 0.0
  %2267 = vmatprep.subr.mxu0 0.0
  %2268 = vmatpush2.msra.mxu0 0.0
  %2269 = vmatprep.subr.mxu0 0.0
  %2270 = vmatpush2.msra.mxu0 0.0
  %2271 = vmatprep.subr.mxu0 0.0
  %2272 = vmatpush2.msra.mxu0 0.0
  %2273 = vmatprep.subr.mxu0 0.0
  %2274 = vmatpush2.msra.mxu0 0.0
  %2275 = vmatprep.subr.mxu0 0.0
  %2276 = vmatpush2.msra.mxu0 0.0
  %2277 = vmatprep.subr.mxu0 0.0
  %2278 = vmatpush2.msra.mxu0 0.0
  %2279 = vmatprep.subr.mxu0 0.0
  %2280 = vmatpush2.msra.mxu0 0.0
  %2281 = vmatprep.subr.mxu0 0.0
  %2282 = vmatpush2.msra.mxu0 0.0
  %2283 = vmatprep.subr.mxu0 0.0
  %2284 = vmatpush2.msra.mxu0 0.0
  %2285 = vmatprep.subr.mxu0 0.0
  %2286 = vmatpush2.msra.mxu0 0.0
  %2287 = vmatprep.subr.mxu0 0.0
  %2288 = vmatpush2.msra.mxu0 0.0
  %2289 = vmatprep.subr.mxu0 0.0
  %2290 = vmatpush2.msra.mxu0 0.0
  %2291 = vmatprep.subr.mxu0 0.0
  %2292 = vmatpush2.msra.mxu0 0.0
  %2293 = vmatprep.mubr.f32.mxu0 0.0
  %2294 = vmatmul.mubr.f32.gmra.mxu0 %v2221
  %v2295 = vpop.f32.mrf.mxu0
  %v2296 = vadd.f32 0.0, %v2295
  %v2297 = vpop.f32.mrf.mxu0
  %2298 = vmatprep.mubr.f32.mxu0 0.0
  %2299 = vmatmul.mubr.f32.gmra.mxu0 %v2224
  %v2300 = vpop.f32.mrf.mxu0
  %v2301 = vadd.f32 0.0, %v2300
  %v2302 = vpop.f32.mrf.mxu0
  %2303 = vdwg.mxu0
  %v2304 = vadd.f32 %v2210, %v2296
  %v2305 = vadd.f32 %v2211, %v2301
  %s2306 = scalar_lea.vmem %s5, 336
  %v2307 = vld [vmem:[%s2306] sm:$0xff]
  %v2308 = vld [vmem:[%s2306 + $0x8] sm:$0xff]
  %v2309 = vld [vmem:[%s2306 + $0x10] sm:$0xff]
  %v2310 = vld [vmem:[%s2306 + $0x18] sm:$0xff]
  %v2311 = vld [vmem:[%s2306 + $0x20] sm:$0xff]
  %v2312 = vld [vmem:[%s2306 + $0x28] sm:$0xff]
  %v2313 = vld [vmem:[%s2306 + $0x30] sm:$0x3]
  %v2315 = vsel %vm1760, %v1733, 0
  %v2318 = vsel %vm1760, %v1734, 0
  %v2321 = vsel %vm1767, %v2313, 0
  %2323 = vmatprep.subr.mxu0 0.0
  %2324 = vmatpush1.msra.mxu0 0.0
  %2325 = vmatprep.subr.mxu0 0.0
  %2326 = vmatpush1.msra.mxu0 0.0
  %2327 = vmatprep.subr.mxu0 0.0
  %2328 = vmatpush1.msra.mxu0 0.0
  %2329 = vmatprep.subr.mxu0 0.0
  %2330 = vmatpush1.msra.mxu0 0.0
  %2331 = vmatprep.subr.mxu0 0.0
  %2332 = vmatpush1.msra.mxu0 0.0
  %2333 = vmatprep.subr.mxu0 0.0
  %2334 = vmatpush1.msra.mxu0 0.0
  %2335 = vmatprep.subr.mxu0 0.0
  %2336 = vmatpush1.msra.mxu0 0.0
  %2337 = vmatprep.subr.mxu0 0.0
  %2338 = vmatpush1.msra.mxu0 0.0
  %2339 = vmatprep.subr.mxu0 0.0
  %2340 = vmatpush1.msra.mxu0 0.0
  %2341 = vmatprep.subr.mxu0 0.0
  %2342 = vmatpush1.msra.mxu0 %v2321
  %2343 = vmatprep.subr.mxu0 0.0
  %2344 = vmatpush1.msra.mxu0 %v2312
  %2345 = vmatprep.subr.mxu0 0.0
  %2346 = vmatpush1.msra.mxu0 %v2311
  %2347 = vmatprep.subr.mxu0 0.0
  %2348 = vmatpush1.msra.mxu0 %v2310
  %2349 = vmatprep.subr.mxu0 0.0
  %2350 = vmatpush1.msra.mxu0 %v2309
  %2351 = vmatprep.subr.mxu0 0.0
  %2352 = vmatpush1.msra.mxu0 %v2308
  %2353 = vmatprep.subr.mxu0 0.0
  %2354 = vmatpush1.msra.mxu0 %v2307
  %2355 = vmatprep.subr.mxu0 0.0
  %2356 = vmatpush2.msra.mxu0 0.0
  %2357 = vmatprep.subr.mxu0 0.0
  %2358 = vmatpush2.msra.mxu0 0.0
  %2359 = vmatprep.subr.mxu0 0.0
  %2360 = vmatpush2.msra.mxu0 0.0
  %2361 = vmatprep.subr.mxu0 0.0
  %2362 = vmatpush2.msra.mxu0 0.0
  %2363 = vmatprep.subr.mxu0 0.0
  %2364 = vmatpush2.msra.mxu0 0.0
  %2365 = vmatprep.subr.mxu0 0.0
  %2366 = vmatpush2.msra.mxu0 0.0
  %2367 = vmatprep.subr.mxu0 0.0
  %2368 = vmatpush2.msra.mxu0 0.0
  %2369 = vmatprep.subr.mxu0 0.0
  %2370 = vmatpush2.msra.mxu0 0.0
  %2371 = vmatprep.subr.mxu0 0.0
  %2372 = vmatpush2.msra.mxu0 0.0
  %2373 = vmatprep.subr.mxu0 0.0
  %2374 = vmatpush2.msra.mxu0 0.0
  %2375 = vmatprep.subr.mxu0 0.0
  %2376 = vmatpush2.msra.mxu0 0.0
  %2377 = vmatprep.subr.mxu0 0.0
  %2378 = vmatpush2.msra.mxu0 0.0
  %2379 = vmatprep.subr.mxu0 0.0
  %2380 = vmatpush2.msra.mxu0 0.0
  %2381 = vmatprep.subr.mxu0 0.0
  %2382 = vmatpush2.msra.mxu0 0.0
  %2383 = vmatprep.subr.mxu0 0.0
  %2384 = vmatpush2.msra.mxu0 0.0
  %2385 = vmatprep.subr.mxu0 0.0
  %2386 = vmatpush2.msra.mxu0 0.0
  %2387 = vmatprep.mubr.f32.mxu0 0.0
  %2388 = vmatmul.mubr.f32.gmra.mxu0 %v2315
  %v2389 = vpop.f32.mrf.mxu0
  %v2390 = vadd.f32 0.0, %v2389
  %v2391 = vpop.f32.mrf.mxu0
  %2392 = vmatprep.mubr.f32.mxu0 0.0
  %2393 = vmatmul.mubr.f32.gmra.mxu0 %v2318
  %v2394 = vpop.f32.mrf.mxu0
  %v2395 = vadd.f32 0.0, %v2394
  %v2396 = vpop.f32.mrf.mxu0
  %2397 = vdwg.mxu0
  %v2398 = vadd.f32 %v2304, %v2390
  %v2399 = vadd.f32 %v2305, %v2395
  %s2400 = scalar_lea.vmem %s5, 392
  %v2401 = vld [vmem:[%s2400] sm:$0xff]
  %v2402 = vld [vmem:[%s2400 + $0x8] sm:$0xff]
  %v2403 = vld [vmem:[%s2400 + $0x10] sm:$0xff]
  %v2404 = vld [vmem:[%s2400 + $0x18] sm:$0xff]
  %v2405 = vld [vmem:[%s2400 + $0x20] sm:$0xff]
  %v2406 = vld [vmem:[%s2400 + $0x28] sm:$0xff]
  %v2407 = vld [vmem:[%s2400 + $0x30] sm:$0x3]
  %v2409 = vsel %vm1760, %v1735, 0
  %v2412 = vsel %vm1760, %v1736, 0
  %v2415 = vsel %vm1767, %v2407, 0
  %2417 = vmatprep.subr.mxu0 0.0
  %2418 = vmatpush1.msra.mxu0 0.0
  %2419 = vmatprep.subr.mxu0 0.0
  %2420 = vmatpush1.msra.mxu0 0.0
  %2421 = vmatprep.subr.mxu0 0.0
  %2422 = vmatpush1.msra.mxu0 0.0
  %2423 = vmatprep.subr.mxu0 0.0
  %2424 = vmatpush1.msra.mxu0 0.0
  %2425 = vmatprep.subr.mxu0 0.0
  %2426 = vmatpush1.msra.mxu0 0.0
  %2427 = vmatprep.subr.mxu0 0.0
  %2428 = vmatpush1.msra.mxu0 0.0
  %2429 = vmatprep.subr.mxu0 0.0
  %2430 = vmatpush1.msra.mxu0 0.0
  %2431 = vmatprep.subr.mxu0 0.0
  %2432 = vmatpush1.msra.mxu0 0.0
  %2433 = vmatprep.subr.mxu0 0.0
  %2434 = vmatpush1.msra.mxu0 0.0
  %2435 = vmatprep.subr.mxu0 0.0
  %2436 = vmatpush1.msra.mxu0 %v2415
  %2437 = vmatprep.subr.mxu0 0.0
  %2438 = vmatpush1.msra.mxu0 %v2406
  %2439 = vmatprep.subr.mxu0 0.0
  %2440 = vmatpush1.msra.mxu0 %v2405
  %2441 = vmatprep.subr.mxu0 0.0
  %2442 = vmatpush1.msra.mxu0 %v2404
  %2443 = vmatprep.subr.mxu0 0.0
  %2444 = vmatpush1.msra.mxu0 %v2403
  %2445 = vmatprep.subr.mxu0 0.0
  %2446 = vmatpush1.msra.mxu0 %v2402
  %2447 = vmatprep.subr.mxu0 0.0
  %2448 = vmatpush1.msra.mxu0 %v2401
  %2449 = vmatprep.subr.mxu0 0.0
  %2450 = vmatpush2.msra.mxu0 0.0
  %2451 = vmatprep.subr.mxu0 0.0
  %2452 = vmatpush2.msra.mxu0 0.0
  %2453 = vmatprep.subr.mxu0 0.0
  %2454 = vmatpush2.msra.mxu0 0.0
  %2455 = vmatprep.subr.mxu0 0.0
  %2456 = vmatpush2.msra.mxu0 0.0
  %2457 = vmatprep.subr.mxu0 0.0
  %2458 = vmatpush2.msra.mxu0 0.0
  %2459 = vmatprep.subr.mxu0 0.0
  %2460 = vmatpush2.msra.mxu0 0.0
  %2461 = vmatprep.subr.mxu0 0.0
  %2462 = vmatpush2.msra.mxu0 0.0
  %2463 = vmatprep.subr.mxu0 0.0
  %2464 = vmatpush2.msra.mxu0 0.0
  %2465 = vmatprep.subr.mxu0 0.0
  %2466 = vmatpush2.msra.mxu0 0.0
  %2467 = vmatprep.subr.mxu0 0.0
  %2468 = vmatpush2.msra.mxu0 0.0
  %2469 = vmatprep.subr.mxu0 0.0
  %2470 = vmatpush2.msra.mxu0 0.0
  %2471 = vmatprep.subr.mxu0 0.0
  %2472 = vmatpush2.msra.mxu0 0.0
  %2473 = vmatprep.subr.mxu0 0.0
  %2474 = vmatpush2.msra.mxu0 0.0
  %2475 = vmatprep.subr.mxu0 0.0
  %2476 = vmatpush2.msra.mxu0 0.0
  %2477 = vmatprep.subr.mxu0 0.0
  %2478 = vmatpush2.msra.mxu0 0.0
  %2479 = vmatprep.subr.mxu0 0.0
  %2480 = vmatpush2.msra.mxu0 0.0
  %2481 = vmatprep.mubr.f32.mxu0 0.0
  %2482 = vmatmul.mubr.f32.gmra.mxu0 %v2409
  %v2483 = vpop.f32.mrf.mxu0
  %v2484 = vadd.f32 0.0, %v2483
  %v2485 = vpop.f32.mrf.mxu0
  %2486 = vmatprep.mubr.f32.mxu0 0.0
  %2487 = vmatmul.mubr.f32.gmra.mxu0 %v2412
  %v2488 = vpop.f32.mrf.mxu0
  %v2489 = vadd.f32 0.0, %v2488
  %v2490 = vpop.f32.mrf.mxu0
  %2491 = vdwg.mxu0
  %v2492 = vadd.f32 %v2398, %v2484
  %v2493 = vadd.f32 %v2399, %v2489
  %s2494 = scalar_lea.vmem %s5, 448
  %v2495 = vld [vmem:[%s2494] sm:$0xff]
  %v2496 = vld [vmem:[%s2494 + $0x8] sm:$0xff]
  %v2497 = vld [vmem:[%s2494 + $0x10] sm:$0xff]
  %v2498 = vld [vmem:[%s2494 + $0x18] sm:$0xff]
  %v2499 = vld [vmem:[%s2494 + $0x20] sm:$0xff]
  %v2500 = vld [vmem:[%s2494 + $0x28] sm:$0xff]
  %v2501 = vld [vmem:[%s2494 + $0x30] sm:$0x3]
  %v2503 = vsel %vm1760, %v1737, 0
  %v2506 = vsel %vm1760, %v1738, 0
  %v2509 = vsel %vm1767, %v2501, 0
  %2511 = vmatprep.subr.mxu0 0.0
  %2512 = vmatpush1.msra.mxu0 0.0
  %2513 = vmatprep.subr.mxu0 0.0
  %2514 = vmatpush1.msra.mxu0 0.0
  %2515 = vmatprep.subr.mxu0 0.0
  %2516 = vmatpush1.msra.mxu0 0.0
  %2517 = vmatprep.subr.mxu0 0.0
  %2518 = vmatpush1.msra.mxu0 0.0
  %2519 = vmatprep.subr.mxu0 0.0
  %2520 = vmatpush1.msra.mxu0 0.0
  %2521 = vmatprep.subr.mxu0 0.0
  %2522 = vmatpush1.msra.mxu0 0.0
  %2523 = vmatprep.subr.mxu0 0.0
  %2524 = vmatpush1.msra.mxu0 0.0
  %2525 = vmatprep.subr.mxu0 0.0
  %2526 = vmatpush1.msra.mxu0 0.0
  %2527 = vmatprep.subr.mxu0 0.0
  %2528 = vmatpush1.msra.mxu0 0.0
  %2529 = vmatprep.subr.mxu0 0.0
  %2530 = vmatpush1.msra.mxu0 %v2509
  %2531 = vmatprep.subr.mxu0 0.0
  %2532 = vmatpush1.msra.mxu0 %v2500
  %2533 = vmatprep.subr.mxu0 0.0
  %2534 = vmatpush1.msra.mxu0 %v2499
  %2535 = vmatprep.subr.mxu0 0.0
  %2536 = vmatpush1.msra.mxu0 %v2498
  %2537 = vmatprep.subr.mxu0 0.0
  %2538 = vmatpush1.msra.mxu0 %v2497
  %2539 = vmatprep.subr.mxu0 0.0
  %2540 = vmatpush1.msra.mxu0 %v2496
  %2541 = vmatprep.subr.mxu0 0.0
  %2542 = vmatpush1.msra.mxu0 %v2495
  %2543 = vmatprep.subr.mxu0 0.0
  %2544 = vmatpush2.msra.mxu0 0.0
  %2545 = vmatprep.subr.mxu0 0.0
  %2546 = vmatpush2.msra.mxu0 0.0
  %2547 = vmatprep.subr.mxu0 0.0
  %2548 = vmatpush2.msra.mxu0 0.0
  %2549 = vmatprep.subr.mxu0 0.0
  %2550 = vmatpush2.msra.mxu0 0.0
  %2551 = vmatprep.subr.mxu0 0.0
  %2552 = vmatpush2.msra.mxu0 0.0
  %2553 = vmatprep.subr.mxu0 0.0
  %2554 = vmatpush2.msra.mxu0 0.0
  %2555 = vmatprep.subr.mxu0 0.0
  %2556 = vmatpush2.msra.mxu0 0.0
  %2557 = vmatprep.subr.mxu0 0.0
  %2558 = vmatpush2.msra.mxu0 0.0
  %2559 = vmatprep.subr.mxu0 0.0
  %2560 = vmatpush2.msra.mxu0 0.0
  %2561 = vmatprep.subr.mxu0 0.0
  %2562 = vmatpush2.msra.mxu0 0.0
  %2563 = vmatprep.subr.mxu0 0.0
  %2564 = vmatpush2.msra.mxu0 0.0
  %2565 = vmatprep.subr.mxu0 0.0
  %2566 = vmatpush2.msra.mxu0 0.0
  %2567 = vmatprep.subr.mxu0 0.0
  %2568 = vmatpush2.msra.mxu0 0.0
  %2569 = vmatprep.subr.mxu0 0.0
  %2570 = vmatpush2.msra.mxu0 0.0
  %2571 = vmatprep.subr.mxu0 0.0
  %2572 = vmatpush2.msra.mxu0 0.0
  %2573 = vmatprep.subr.mxu0 0.0
  %2574 = vmatpush2.msra.mxu0 0.0
  %2575 = vmatprep.mubr.f32.mxu0 0.0
  %2576 = vmatmul.mubr.f32.gmra.mxu0 %v2503
  %v2577 = vpop.f32.mrf.mxu0
  %v2578 = vadd.f32 0.0, %v2577
  %v2579 = vpop.f32.mrf.mxu0
  %2580 = vmatprep.mubr.f32.mxu0 0.0
  %2581 = vmatmul.mubr.f32.gmra.mxu0 %v2506
  %v2582 = vpop.f32.mrf.mxu0
  %v2583 = vadd.f32 0.0, %v2582
  %v2584 = vpop.f32.mrf.mxu0
  %2585 = vdwg.mxu0
  %v2586 = vadd.f32 %v2492, %v2578
  %v2587 = vadd.f32 %v2493, %v2583
  %s2588 = scalar_lea.vmem %s5, 504
  %v2589 = vld [vmem:[%s2588] sm:$0xff]
  %v2590 = vld [vmem:[%s2588 + $0x8] sm:$0xff]
  %v2591 = vld [vmem:[%s2588 + $0x10] sm:$0xff]
  %v2592 = vld [vmem:[%s2588 + $0x18] sm:$0xff]
  %v2593 = vld [vmem:[%s2588 + $0x20] sm:$0xff]
  %v2594 = vld [vmem:[%s2588 + $0x28] sm:$0xff]
  %v2595 = vld [vmem:[%s2588 + $0x30] sm:$0x3]
  %v2597 = vsel %vm1760, %v1739, 0
  %v2600 = vsel %vm1760, %v1740, 0
  %v2603 = vsel %vm1767, %v2595, 0
  %2605 = vmatprep.subr.mxu0 0.0
  %2606 = vmatpush1.msra.mxu0 0.0
  %2607 = vmatprep.subr.mxu0 0.0
  %2608 = vmatpush1.msra.mxu0 0.0
  %2609 = vmatprep.subr.mxu0 0.0
  %2610 = vmatpush1.msra.mxu0 0.0
  %2611 = vmatprep.subr.mxu0 0.0
  %2612 = vmatpush1.msra.mxu0 0.0
  %2613 = vmatprep.subr.mxu0 0.0
  %2614 = vmatpush1.msra.mxu0 0.0
  %2615 = vmatprep.subr.mxu0 0.0
  %2616 = vmatpush1.msra.mxu0 0.0
  %2617 = vmatprep.subr.mxu0 0.0
  %2618 = vmatpush1.msra.mxu0 0.0
  %2619 = vmatprep.subr.mxu0 0.0
  %2620 = vmatpush1.msra.mxu0 0.0
  %2621 = vmatprep.subr.mxu0 0.0
  %2622 = vmatpush1.msra.mxu0 0.0
  %2623 = vmatprep.subr.mxu0 0.0
  %2624 = vmatpush1.msra.mxu0 %v2603
  %2625 = vmatprep.subr.mxu0 0.0
  %2626 = vmatpush1.msra.mxu0 %v2594
  %2627 = vmatprep.subr.mxu0 0.0
  %2628 = vmatpush1.msra.mxu0 %v2593
  %2629 = vmatprep.subr.mxu0 0.0
  %2630 = vmatpush1.msra.mxu0 %v2592
  %2631 = vmatprep.subr.mxu0 0.0
  %2632 = vmatpush1.msra.mxu0 %v2591
  %2633 = vmatprep.subr.mxu0 0.0
  %2634 = vmatpush1.msra.mxu0 %v2590
  %2635 = vmatprep.subr.mxu0 0.0
  %2636 = vmatpush1.msra.mxu0 %v2589
  %2637 = vmatprep.subr.mxu0 0.0
  %2638 = vmatpush2.msra.mxu0 0.0
  %2639 = vmatprep.subr.mxu0 0.0
  %2640 = vmatpush2.msra.mxu0 0.0
  %2641 = vmatprep.subr.mxu0 0.0
  %2642 = vmatpush2.msra.mxu0 0.0
  %2643 = vmatprep.subr.mxu0 0.0
  %2644 = vmatpush2.msra.mxu0 0.0
  %2645 = vmatprep.subr.mxu0 0.0
  %2646 = vmatpush2.msra.mxu0 0.0
  %2647 = vmatprep.subr.mxu0 0.0
  %2648 = vmatpush2.msra.mxu0 0.0
  %2649 = vmatprep.subr.mxu0 0.0
  %2650 = vmatpush2.msra.mxu0 0.0
  %2651 = vmatprep.subr.mxu0 0.0
  %2652 = vmatpush2.msra.mxu0 0.0
  %2653 = vmatprep.subr.mxu0 0.0
  %2654 = vmatpush2.msra.mxu0 0.0
  %2655 = vmatprep.subr.mxu0 0.0
  %2656 = vmatpush2.msra.mxu0 0.0
  %2657 = vmatprep.subr.mxu0 0.0
  %2658 = vmatpush2.msra.mxu0 0.0
  %2659 = vmatprep.subr.mxu0 0.0
  %2660 = vmatpush2.msra.mxu0 0.0
  %2661 = vmatprep.subr.mxu0 0.0
  %2662 = vmatpush2.msra.mxu0 0.0
  %2663 = vmatprep.subr.mxu0 0.0
  %2664 = vmatpush2.msra.mxu0 0.0
  %2665 = vmatprep.subr.mxu0 0.0
  %2666 = vmatpush2.msra.mxu0 0.0
  %2667 = vmatprep.subr.mxu0 0.0
  %2668 = vmatpush2.msra.mxu0 0.0
  %2669 = vmatprep.mubr.f32.mxu0 0.0
  %2670 = vmatmul.mubr.f32.gmra.mxu0 %v2597
  %v2671 = vpop.f32.mrf.mxu0
  %v2672 = vadd.f32 0.0, %v2671
  %v2673 = vpop.f32.mrf.mxu0
  %2674 = vmatprep.mubr.f32.mxu0 0.0
  %2675 = vmatmul.mubr.f32.gmra.mxu0 %v2600
  %v2676 = vpop.f32.mrf.mxu0
  %v2677 = vadd.f32 0.0, %v2676
  %v2678 = vpop.f32.mrf.mxu0
  %2679 = vdwg.mxu0
  %v2680 = vadd.f32 %v2586, %v2672
  %v2681 = vadd.f32 %v2587, %v2677
  %s2682 = scalar_lea.vmem %s5, 560
  %v2683 = vld [vmem:[%s2682] sm:$0xff]
  %v2684 = vld [vmem:[%s2682 + $0x8] sm:$0xff]
  %v2685 = vld [vmem:[%s2682 + $0x10] sm:$0xff]
  %v2686 = vld [vmem:[%s2682 + $0x18] sm:$0xff]
  %v2687 = vld [vmem:[%s2682 + $0x20] sm:$0xff]
  %v2688 = vld [vmem:[%s2682 + $0x28] sm:$0xff]
  %v2689 = vld [vmem:[%s2682 + $0x30] sm:$0x3]
  %v2691 = vsel %vm1760, %v1741, 0
  %v2694 = vsel %vm1760, %v1742, 0
  %v2697 = vsel %vm1767, %v2689, 0
  %2699 = vmatprep.subr.mxu0 0.0
  %2700 = vmatpush1.msra.mxu0 0.0
  %2701 = vmatprep.subr.mxu0 0.0
  %2702 = vmatpush1.msra.mxu0 0.0
  %2703 = vmatprep.subr.mxu0 0.0
  %2704 = vmatpush1.msra.mxu0 0.0
  %2705 = vmatprep.subr.mxu0 0.0
  %2706 = vmatpush1.msra.mxu0 0.0
  %2707 = vmatprep.subr.mxu0 0.0
  %2708 = vmatpush1.msra.mxu0 0.0
  %2709 = vmatprep.subr.mxu0 0.0
  %2710 = vmatpush1.msra.mxu0 0.0
  %2711 = vmatprep.subr.mxu0 0.0
  %2712 = vmatpush1.msra.mxu0 0.0
  %2713 = vmatprep.subr.mxu0 0.0
  %2714 = vmatpush1.msra.mxu0 0.0
  %2715 = vmatprep.subr.mxu0 0.0
  %2716 = vmatpush1.msra.mxu0 0.0
  %2717 = vmatprep.subr.mxu0 0.0
  %2718 = vmatpush1.msra.mxu0 %v2697
  %2719 = vmatprep.subr.mxu0 0.0
  %2720 = vmatpush1.msra.mxu0 %v2688
  %2721 = vmatprep.subr.mxu0 0.0
  %2722 = vmatpush1.msra.mxu0 %v2687
  %2723 = vmatprep.subr.mxu0 0.0
  %2724 = vmatpush1.msra.mxu0 %v2686
  %2725 = vmatprep.subr.mxu0 0.0
  %2726 = vmatpush1.msra.mxu0 %v2685
  %2727 = vmatprep.subr.mxu0 0.0
  %2728 = vmatpush1.msra.mxu0 %v2684
  %2729 = vmatprep.subr.mxu0 0.0
  %2730 = vmatpush1.msra.mxu0 %v2683
  %2731 = vmatprep.subr.mxu0 0.0
  %2732 = vmatpush2.msra.mxu0 0.0
  %2733 = vmatprep.subr.mxu0 0.0
  %2734 = vmatpush2.msra.mxu0 0.0
  %2735 = vmatprep.subr.mxu0 0.0
  %2736 = vmatpush2.msra.mxu0 0.0
  %2737 = vmatprep.subr.mxu0 0.0
  %2738 = vmatpush2.msra.mxu0 0.0
  %2739 = vmatprep.subr.mxu0 0.0
  %2740 = vmatpush2.msra.mxu0 0.0
  %2741 = vmatprep.subr.mxu0 0.0
  %2742 = vmatpush2.msra.mxu0 0.0
  %2743 = vmatprep.subr.mxu0 0.0
  %2744 = vmatpush2.msra.mxu0 0.0
  %2745 = vmatprep.subr.mxu0 0.0
  %2746 = vmatpush2.msra.mxu0 0.0
  %2747 = vmatprep.subr.mxu0 0.0
  %2748 = vmatpush2.msra.mxu0 0.0
  %2749 = vmatprep.subr.mxu0 0.0
  %2750 = vmatpush2.msra.mxu0 0.0
  %2751 = vmatprep.subr.mxu0 0.0
  %2752 = vmatpush2.msra.mxu0 0.0
  %2753 = vmatprep.subr.mxu0 0.0
  %2754 = vmatpush2.msra.mxu0 0.0
  %2755 = vmatprep.subr.mxu0 0.0
  %2756 = vmatpush2.msra.mxu0 0.0
  %2757 = vmatprep.subr.mxu0 0.0
  %2758 = vmatpush2.msra.mxu0 0.0
  %2759 = vmatprep.subr.mxu0 0.0
  %2760 = vmatpush2.msra.mxu0 0.0
  %2761 = vmatprep.subr.mxu0 0.0
  %2762 = vmatpush2.msra.mxu0 0.0
  %2763 = vmatprep.mubr.f32.mxu0 0.0
  %2764 = vmatmul.mubr.f32.gmra.mxu0 %v2691
  %v2765 = vpop.f32.mrf.mxu0
  %v2766 = vadd.f32 0.0, %v2765
  %v2767 = vpop.f32.mrf.mxu0
  %2768 = vmatprep.mubr.f32.mxu0 0.0
  %2769 = vmatmul.mubr.f32.gmra.mxu0 %v2694
  %v2770 = vpop.f32.mrf.mxu0
  %v2771 = vadd.f32 0.0, %v2770
  %v2772 = vpop.f32.mrf.mxu0
  %2773 = vdwg.mxu0
  %v2774 = vadd.f32 %v2680, %v2766
  %v2775 = vadd.f32 %v2681, %v2771
  %s2776 = scalar_lea.vmem %s5, 616
  %v2777 = vld [vmem:[%s2776] sm:$0xff]
  %v2778 = vld [vmem:[%s2776 + $0x8] sm:$0xff]
  %v2779 = vld [vmem:[%s2776 + $0x10] sm:$0xff]
  %v2780 = vld [vmem:[%s2776 + $0x18] sm:$0xff]
  %v2781 = vld [vmem:[%s2776 + $0x20] sm:$0xff]
  %v2782 = vld [vmem:[%s2776 + $0x28] sm:$0xff]
  %v2783 = vld [vmem:[%s2776 + $0x30] sm:$0x3]
  %v2785 = vsel %vm1760, %v1743, 0
  %v2788 = vsel %vm1760, %v1744, 0
  %v2791 = vsel %vm1767, %v2783, 0
  %2793 = vmatprep.subr.mxu0 0.0
  %2794 = vmatpush1.msra.mxu0 0.0
  %2795 = vmatprep.subr.mxu0 0.0
  %2796 = vmatpush1.msra.mxu0 0.0
  %2797 = vmatprep.subr.mxu0 0.0
  %2798 = vmatpush1.msra.mxu0 0.0
  %2799 = vmatprep.subr.mxu0 0.0
  %2800 = vmatpush1.msra.mxu0 0.0
  %2801 = vmatprep.subr.mxu0 0.0
  %2802 = vmatpush1.msra.mxu0 0.0
  %2803 = vmatprep.subr.mxu0 0.0
  %2804 = vmatpush1.msra.mxu0 0.0
  %2805 = vmatprep.subr.mxu0 0.0
  %2806 = vmatpush1.msra.mxu0 0.0
  %2807 = vmatprep.subr.mxu0 0.0
  %2808 = vmatpush1.msra.mxu0 0.0
  %2809 = vmatprep.subr.mxu0 0.0
  %2810 = vmatpush1.msra.mxu0 0.0
  %2811 = vmatprep.subr.mxu0 0.0
  %2812 = vmatpush1.msra.mxu0 %v2791
  %2813 = vmatprep.subr.mxu0 0.0
  %2814 = vmatpush1.msra.mxu0 %v2782
  %2815 = vmatprep.subr.mxu0 0.0
  %2816 = vmatpush1.msra.mxu0 %v2781
  %2817 = vmatprep.subr.mxu0 0.0
  %2818 = vmatpush1.msra.mxu0 %v2780
  %2819 = vmatprep.subr.mxu0 0.0
  %2820 = vmatpush1.msra.mxu0 %v2779
  %2821 = vmatprep.subr.mxu0 0.0
  %2822 = vmatpush1.msra.mxu0 %v2778
  %2823 = vmatprep.subr.mxu0 0.0
  %2824 = vmatpush1.msra.mxu0 %v2777
  %2825 = vmatprep.subr.mxu0 0.0
  %2826 = vmatpush2.msra.mxu0 0.0
  %2827 = vmatprep.subr.mxu0 0.0
  %2828 = vmatpush2.msra.mxu0 0.0
  %2829 = vmatprep.subr.mxu0 0.0
  %2830 = vmatpush2.msra.mxu0 0.0
  %2831 = vmatprep.subr.mxu0 0.0
  %2832 = vmatpush2.msra.mxu0 0.0
  %2833 = vmatprep.subr.mxu0 0.0
  %2834 = vmatpush2.msra.mxu0 0.0
  %2835 = vmatprep.subr.mxu0 0.0
  %2836 = vmatpush2.msra.mxu0 0.0
  %2837 = vmatprep.subr.mxu0 0.0
  %2838 = vmatpush2.msra.mxu0 0.0
  %2839 = vmatprep.subr.mxu0 0.0
  %2840 = vmatpush2.msra.mxu0 0.0
  %2841 = vmatprep.subr.mxu0 0.0
  %2842 = vmatpush2.msra.mxu0 0.0
  %2843 = vmatprep.subr.mxu0 0.0
  %2844 = vmatpush2.msra.mxu0 0.0
  %2845 = vmatprep.subr.mxu0 0.0
  %2846 = vmatpush2.msra.mxu0 0.0
  %2847 = vmatprep.subr.mxu0 0.0
  %2848 = vmatpush2.msra.mxu0 0.0
  %2849 = vmatprep.subr.mxu0 0.0
  %2850 = vmatpush2.msra.mxu0 0.0
  %2851 = vmatprep.subr.mxu0 0.0
  %2852 = vmatpush2.msra.mxu0 0.0
  %2853 = vmatprep.subr.mxu0 0.0
  %2854 = vmatpush2.msra.mxu0 0.0
  %2855 = vmatprep.subr.mxu0 0.0
  %2856 = vmatpush2.msra.mxu0 0.0
  %2857 = vmatprep.mubr.f32.mxu0 0.0
  %2858 = vmatmul.mubr.f32.gmra.mxu0 %v2785
  %v2859 = vpop.f32.mrf.mxu0
  %v2860 = vadd.f32 0.0, %v2859
  %v2861 = vpop.f32.mrf.mxu0
  %2862 = vmatprep.mubr.f32.mxu0 0.0
  %2863 = vmatmul.mubr.f32.gmra.mxu0 %v2788
  %v2864 = vpop.f32.mrf.mxu0
  %v2865 = vadd.f32 0.0, %v2864
  %v2866 = vpop.f32.mrf.mxu0
  %2867 = vdwg.mxu0
  %v2868 = vadd.f32 %v2774, %v2860
  %v2869 = vadd.f32 %v2775, %v2865
  %v2870 = vld [vmem:[%s6] sm:$0x1]
  %v2872 = vlaneseq
  %v2873 = vshrl.u32 %v2872, 7
  %v2874 = vsub.s32 0, %v2873
  %v2875 = vrot.slane %v2870, %v2874
  %v2877 = vadd.f32 %v2868, %v2875
  %v2878 = vadd.f32 %v2869, %v2875
  %v2879 = vmax.f32 %v2877, 0.0
  %v2880 = vmax.f32 %v2878, 0.0
  %v2881 = vld [vmem:[%s7] sm:$0xff]
  %v2882 = vld [vmem:[%s8] sm:$0xff]
  %v2883 = vld [vmem:[%s8 + $0x8] sm:$0xff]
  %v2884 = vld [vmem:[%s9] sm:$0x1]
  %v2886 = vlaneseq
  %v2887 = vshrl.u32 %v2886, 7
  %v2888 = vsub.s32 0, %v2887
  %v2889 = vrot.slane %v2884, %v2888
  %vm2891 = vcmask 130048
  %v2893 = vsel %vm2891, %v2881, 0
  %2895 = vmatprep.subr.mxu0 0.0
  %2896 = vmatpush1.msra.mxu0 0.0
  %2897 = vmatprep.subr.mxu0 0.0
  %2898 = vmatpush1.msra.mxu0 0.0
  %2899 = vmatprep.subr.mxu0 0.0
  %2900 = vmatpush1.msra.mxu0 0.0
  %2901 = vmatprep.subr.mxu0 0.0
  %2902 = vmatpush1.msra.mxu0 0.0
  %2903 = vmatprep.subr.mxu0 0.0
  %2904 = vmatpush1.msra.mxu0 0.0
  %2905 = vmatprep.subr.mxu0 0.0
  %2906 = vmatpush1.msra.mxu0 0.0
  %2907 = vmatprep.subr.mxu0 0.0
  %2908 = vmatpush1.msra.mxu0 0.0
  %2909 = vmatprep.subr.mxu0 0.0
  %2910 = vmatpush1.msra.mxu0 0.0
  %2911 = vmatprep.subr.mxu0 0.0
  %2912 = vmatpush1.msra.mxu0 0.0
  %2913 = vmatprep.subr.mxu0 0.0
  %2914 = vmatpush1.msra.mxu0 0.0
  %2915 = vmatprep.subr.mxu0 0.0
  %2916 = vmatpush1.msra.mxu0 0.0
  %2917 = vmatprep.subr.mxu0 0.0
  %2918 = vmatpush1.msra.mxu0 0.0
  %2919 = vmatprep.subr.mxu0 0.0
  %2920 = vmatpush1.msra.mxu0 0.0
  %2921 = vmatprep.subr.mxu0 0.0
  %2922 = vmatpush1.msra.mxu0 0.0
  %2923 = vmatprep.subr.mxu0 0.0
  %2924 = vmatpush1.msra.mxu0 %v2883
  %2925 = vmatprep.subr.mxu0 0.0
  %2926 = vmatpush1.msra.mxu0 %v2882
  %2927 = vmatprep.subr.mxu0 0.0
  %2928 = vmatpush2.msra.mxu0 0.0
  %2929 = vmatprep.subr.mxu0 0.0
  %2930 = vmatpush2.msra.mxu0 0.0
  %2931 = vmatprep.subr.mxu0 0.0
  %2932 = vmatpush2.msra.mxu0 0.0
  %2933 = vmatprep.subr.mxu0 0.0
  %2934 = vmatpush2.msra.mxu0 0.0
  %2935 = vmatprep.subr.mxu0 0.0
  %2936 = vmatpush2.msra.mxu0 0.0
  %2937 = vmatprep.subr.mxu0 0.0
  %2938 = vmatpush2.msra.mxu0 0.0
  %2939 = vmatprep.subr.mxu0 0.0
  %2940 = vmatpush2.msra.mxu0 0.0
  %2941 = vmatprep.subr.mxu0 0.0
  %2942 = vmatpush2.msra.mxu0 0.0
  %2943 = vmatprep.subr.mxu0 0.0
  %2944 = vmatpush2.msra.mxu0 0.0
  %2945 = vmatprep.subr.mxu0 0.0
  %2946 = vmatpush2.msra.mxu0 0.0
  %2947 = vmatprep.subr.mxu0 0.0
  %2948 = vmatpush2.msra.mxu0 0.0
  %2949 = vmatprep.subr.mxu0 0.0
  %2950 = vmatpush2.msra.mxu0 0.0
  %2951 = vmatprep.subr.mxu0 0.0
  %2952 = vmatpush2.msra.mxu0 0.0
  %2953 = vmatprep.subr.mxu0 0.0
  %2954 = vmatpush2.msra.mxu0 0.0
  %2955 = vmatprep.subr.mxu0 0.0
  %2956 = vmatpush2.msra.mxu0 0.0
  %2957 = vmatprep.subr.mxu0 0.0
  %2958 = vmatpush2.msra.mxu0 0.0
  %2959 = vmatprep.mubr.f32.mxu0 0.0
  %2960 = vmatmul.mubr.f32.gmra.mxu0 %v2893
  %v2961 = vpop.f32.mrf.mxu0
  %v2962 = vadd.f32 %v2889, %v2961
  %v2963 = vpop.f32.mrf.mxu0
  %2964 = vdwg.mxu0
  %v2965 = vmax.f32 %v2962, 0.0
  %v2966 = vld [vmem:[%s10] sm:$0xff]
  %v2967 = vld [vmem:[%s10 + $0x8] sm:$0xff]
  %v2968 = vld [vmem:[%s10 + $0x10] sm:$0xff]
  %v2969 = vld [vmem:[%s10 + $0x18] sm:$0xff]
  %v2970 = vld [vmem:[%s10 + $0x20] sm:$0xff]
  %v2971 = vld [vmem:[%s10 + $0x28] sm:$0xff]
  %v2972 = vld [vmem:[%s10 + $0x30] sm:$0xff]
  %v2973 = vld [vmem:[%s10 + $0x38] sm:$0xff]
  %v2974 = vld [vmem:[%s11] sm:$0x1]
  %v2976 = vlaneseq
  %v2977 = vshrl.u32 %v2976, 7
  %v2978 = vsub.s32 0, %v2977
  %v2979 = vrot.slane %v2974, %v2978
  %vm2981 = vcmask 523264
  %v2983 = vsel %vm2981, %v2965, 0
  %2985 = vmatprep.subr.mxu0 0.0
  %2986 = vmatpush1.msra.mxu0 0.0
  %2987 = vmatprep.subr.mxu0 0.0
  %2988 = vmatpush1.msra.mxu0 0.0
  %2989 = vmatprep.subr.mxu0 0.0
  %2990 = vmatpush1.msra.mxu0 0.0
  %2991 = vmatprep.subr.mxu0 0.0
  %2992 = vmatpush1.msra.mxu0 0.0
  %2993 = vmatprep.subr.mxu0 0.0
  %2994 = vmatpush1.msra.mxu0 0.0
  %2995 = vmatprep.subr.mxu0 0.0
  %2996 = vmatpush1.msra.mxu0 0.0
  %2997 = vmatprep.subr.mxu0 0.0
  %2998 = vmatpush1.msra.mxu0 0.0
  %2999 = vmatprep.subr.mxu0 0.0
  %3000 = vmatpush1.msra.mxu0 0.0
  %3001 = vmatprep.subr.mxu0 0.0
  %3002 = vmatpush1.msra.mxu0 %v2973
  %3003 = vmatprep.subr.mxu0 0.0
  %3004 = vmatpush1.msra.mxu0 %v2972
  %3005 = vmatprep.subr.mxu0 0.0
  %3006 = vmatpush1.msra.mxu0 %v2971
  %3007 = vmatprep.subr.mxu0 0.0
  %3008 = vmatpush1.msra.mxu0 %v2970
  %3009 = vmatprep.subr.mxu0 0.0
  %3010 = vmatpush1.msra.mxu0 %v2969
  %3011 = vmatprep.subr.mxu0 0.0
  %3012 = vmatpush1.msra.mxu0 %v2968
  %3013 = vmatprep.subr.mxu0 0.0
  %3014 = vmatpush1.msra.mxu0 %v2967
  %3015 = vmatprep.subr.mxu0 0.0
  %3016 = vmatpush1.msra.mxu0 %v2966
  %3017 = vmatprep.subr.mxu0 0.0
  %3018 = vmatpush2.msra.mxu0 0.0
  %3019 = vmatprep.subr.mxu0 0.0
  %3020 = vmatpush2.msra.mxu0 0.0
  %3021 = vmatprep.subr.mxu0 0.0
  %3022 = vmatpush2.msra.mxu0 0.0
  %3023 = vmatprep.subr.mxu0 0.0
  %3024 = vmatpush2.msra.mxu0 0.0
  %3025 = vmatprep.subr.mxu0 0.0
  %3026 = vmatpush2.msra.mxu0 0.0
  %3027 = vmatprep.subr.mxu0 0.0
  %3028 = vmatpush2.msra.mxu0 0.0
  %3029 = vmatprep.subr.mxu0 0.0
  %3030 = vmatpush2.msra.mxu0 0.0
  %3031 = vmatprep.subr.mxu0 0.0
  %3032 = vmatpush2.msra.mxu0 0.0
  %3033 = vmatprep.subr.mxu0 0.0
  %3034 = vmatpush2.msra.mxu0 0.0
  %3035 = vmatprep.subr.mxu0 0.0
  %3036 = vmatpush2.msra.mxu0 0.0
  %3037 = vmatprep.subr.mxu0 0.0
  %3038 = vmatpush2.msra.mxu0 0.0
  %3039 = vmatprep.subr.mxu0 0.0
  %3040 = vmatpush2.msra.mxu0 0.0
  %3041 = vmatprep.subr.mxu0 0.0
  %3042 = vmatpush2.msra.mxu0 0.0
  %3043 = vmatprep.subr.mxu0 0.0
  %3044 = vmatpush2.msra.mxu0 0.0
  %3045 = vmatprep.subr.mxu0 0.0
  %3046 = vmatpush2.msra.mxu0 0.0
  %3047 = vmatprep.subr.mxu0 0.0
  %3048 = vmatpush2.msra.mxu0 0.0
  %3049 = vmatprep.mubr.f32.mxu0 0.0
  %3050 = vmatmul.mubr.f32.gmra.mxu0 %v2983
  %v3051 = vpop.f32.mrf.mxu0
  %v3052 = vadd.f32 %v2979, %v3051
  %v3053 = vpop.f32.mrf.mxu0
  %3054 = vdwg.mxu0
  %v3055 = vmax.f32 %v3052, 0.0
  %v3057 = vsel %vm801, %v3055, 0
  %v3060 = vsel %vm801, %v2879, 0
  %v3063 = vsel %vm801, %v2880, 0
  %3065 = vmatprep.subr.mxu0 0.0
  %3066 = vmatpush1.xpose.msra.mxu0 0.0
  %3067 = vmatprep.subr.mxu0 0.0
  %3068 = vmatpush1.xpose.msra.mxu0 0.0
  %3069 = vmatprep.subr.mxu0 0.0
  %3070 = vmatpush1.xpose.msra.mxu0 0.0
  %3071 = vmatprep.subr.mxu0 0.0
  %3072 = vmatpush1.xpose.msra.mxu0 0.0
  %3073 = vmatprep.subr.mxu0 0.0
  %3074 = vmatpush1.xpose.msra.mxu0 0.0
  %3075 = vmatprep.subr.mxu0 0.0
  %3076 = vmatpush1.xpose.msra.mxu0 0.0
  %3077 = vmatprep.subr.mxu0 0.0
  %3078 = vmatpush1.xpose.msra.mxu0 0.0
  %3079 = vmatprep.subr.mxu0 0.0
  %3080 = vmatpush1.xpose.msra.mxu0 0.0
  %3081 = vmatprep.subr.mxu0 0.0
  %3082 = vmatpush1.xpose.msra.mxu0 0.0
  %3083 = vmatprep.subr.mxu0 0.0
  %3084 = vmatpush1.xpose.msra.mxu0 0.0
  %3085 = vmatprep.subr.mxu0 0.0
  %3086 = vmatpush1.xpose.msra.mxu0 0.0
  %3087 = vmatprep.subr.mxu0 0.0
  %3088 = vmatpush1.xpose.msra.mxu0 0.0
  %3089 = vmatprep.subr.mxu0 0.0
  %3090 = vmatpush1.xpose.msra.mxu0 0.0
  %3091 = vmatprep.subr.mxu0 0.0
  %3092 = vmatpush1.xpose.msra.mxu0 0.0
  %3093 = vmatprep.subr.mxu0 0.0
  %3094 = vmatpush1.xpose.msra.mxu0 %v3063
  %3095 = vmatprep.subr.mxu0 0.0
  %3096 = vmatpush1.xpose.msra.mxu0 %v3060
  %3097 = vmatprep.subr.mxu0 0.0
  %3098 = vmatpush2.xpose.msra.mxu0 0.0
  %3099 = vmatprep.subr.mxu0 0.0
  %3100 = vmatpush2.xpose.msra.mxu0 0.0
  %3101 = vmatprep.subr.mxu0 0.0
  %3102 = vmatpush2.xpose.msra.mxu0 0.0
  %3103 = vmatprep.subr.mxu0 0.0
  %3104 = vmatpush2.xpose.msra.mxu0 0.0
  %3105 = vmatprep.subr.mxu0 0.0
  %3106 = vmatpush2.xpose.msra.mxu0 0.0
  %3107 = vmatprep.subr.mxu0 0.0
  %3108 = vmatpush2.xpose.msra.mxu0 0.0
  %3109 = vmatprep.subr.mxu0 0.0
  %3110 = vmatpush2.xpose.msra.mxu0 0.0
  %3111 = vmatprep.subr.mxu0 0.0
  %3112 = vmatpush2.xpose.msra.mxu0 0.0
  %3113 = vmatprep.subr.mxu0 0.0
  %3114 = vmatpush2.xpose.msra.mxu0 0.0
  %3115 = vmatprep.subr.mxu0 0.0
  %3116 = vmatpush2.xpose.msra.mxu0 0.0
  %3117 = vmatprep.subr.mxu0 0.0
  %3118 = vmatpush2.xpose.msra.mxu0 0.0
  %3119 = vmatprep.subr.mxu0 0.0
  %3120 = vmatpush2.xpose.msra.mxu0 0.0
  %3121 = vmatprep.subr.mxu0 0.0
  %3122 = vmatpush2.xpose.msra.mxu0 0.0
  %3123 = vmatprep.subr.mxu0 0.0
  %3124 = vmatpush2.xpose.msra.mxu0 0.0
  %3125 = vmatprep.subr.mxu0 0.0
  %3126 = vmatpush2.xpose.msra.mxu0 0.0
  %3127 = vmatprep.subr.mxu0 0.0
  %3128 = vmatpush2.xpose.msra.mxu0 0.0
  %3129 = vmatprep.mubr.f32.mxu0 0.0
  %3130 = vmatmul.mubr.f32.gmra.mxu0 %v3057
  %v3131 = vpop.f32.mrf.mxu0
  %v3132 = vadd.f32 0.0, %v3131
  %v3133 = vpop.f32.mrf.mxu0
  %3134 = vdwg.mxu0
  %3135 = vst.msk [vmem:[%s13] sm:$0xff] %vm2891, %v3132
  %v3136 = vld [vmem:[%s12] sm:$0x1]
  %v3137 = vmul.f32 %v3136, 1.442695
  %v3138 = vpow.pop %v3137
  %vm3139 = vcmask 122880
  %3140 = vst.msk [vmem:[%s13 + $0x8] sm:$0x1] %vm3139, %v3138
  // Predicated region
  $region54: #{forward.1} parent=0 // pred_check
    _
  $region55: #{forward.1} parent=0 // pred_check_branch
    %3142 = sbr.rel (0) target = $region57
  $region56: #{forward.1} parent=0 // pred_region
    _
  $region57: #{forward.1} parent=0 // pred_fallthru
    _
  // Predicated region
  $region58: #{forward.1} parent=0 // pred_check
    _
  $region59: #{forward.1} parent=0 // pred_check_branch
    %3144 = sbr.rel (0) target = $region61
  $region60: #{forward.1} parent=0 // pred_region
    _
  $region61: #{forward.1} parent=0 // pred_fallthru
    _

</llo_original>
